<compile_context>
chip_gen: v5e
topology: v5e:2x2
jax: 0.10.0
libtpu: 0.0.40
codegen_flags: <defaults>
</compile_context>

<pallas_src>
import jax
import jax.numpy as jnp
from jax.experimental import pallas as pl
from jax.experimental.pallas import tpu as pltpu


# ----------------------------- kernel builder ---------------------------------

def _spatial_plan(n_layers, hw):
    """Static spatial-size bookkeeping matching the PyTorch layer stack."""
    conv_sizes, feat_sizes = [], []
    s = hw
    for i in range(n_layers):
        s = s - 1                       # Conv2d(kernel=2, stride=1)
        conv_sizes.append(s)
        if i == 0:
            s = s // 2                  # MaxPool2d(2, 2), floor mode
        feat_sizes.append(s)
    return conv_sizes, feat_sizes


def _make_fused_kernel(n_layers, output_sizes, hw):
    conv_sizes, feat_sizes = _spatial_plan(n_layers, hw)
    fs = feat_sizes[-1]                 # final spatial size (12 for 28x28, n=2)
    c_last = output_sizes[-1]
    feat = fs * fs * c_last             # BatchFlatten width (1152)

    def kernel(*refs):
        # refs = x, (w_i, b_i) per layer, se, so, se.T, so.T, wlT, bl | out | scratch
        x_ref = refs[0]
        pos = 1
        w_refs, b_refs = [], []
        for _ in range(n_layers):
            w_refs.append(refs[pos])
            b_refs.append(refs[pos + 1])
            pos += 2
        se_ref, so_ref, set_ref, sot_ref = refs[pos:pos + 4]
        pos += 4
        wlt_ref, bl_ref = refs[pos], refs[pos + 1]
        o_ref = refs[pos + 2]
        row_ref = refs[pos + 3]                          # VMEM scratch (1, fs*fs)

        se, so = se_ref[...], so_ref[...]
        se_t, so_t = set_ref[...], sot_ref[...]

        # Per-channel 2D feature maps; everything stays in VMEM / vregs.
        feats = [x_ref[0, 0]]                            # Cin = 1, (hw, hw)
        cin = 1
        size = hw
        for i in range(n_layers):
            cout = output_sizes[i]
            cs = size - 1                                # conv output spatial size
            new_feats = []
            for co in range(cout):
                acc = jnp.zeros((cs, cs), jnp.float32) + b_refs[i][co]
                for ci in range(cin):
                    for dh in range(2):
                        for dw in range(2):
                            w = w_refs[i][((co * cin + ci) * 2 + dh) * 2 + dw]
                            acc = acc + w * feats[ci][dh:dh + cs, dw:dw + cs]
                # ELU(alpha=1).  exp(x)-1 == expm1(x) up to f32 rounding; exp is
                # used because its Mosaic lowering is guaranteed on all versions.
                e = jnp.where(acc > 0.0, acc, jnp.exp(acc) - 1.0)
                if i == 0:
                    # Fused MaxPool2d(2,2): row-pair max, then col-pair max; the
                    # stride-2 downsample is an exact 0/1 selection matmul (MXU).
                    r = jnp.maximum(
                        jnp.dot(se, e, preferred_element_type=jnp.float32),
                        jnp.dot(so, e, preferred_element_type=jnp.float32))
                    e = jnp.maximum(
                        jnp.dot(r, se_t, preferred_element_type=jnp.float32),
                        jnp.dot(r, so_t, preferred_element_type=jnp.float32))
                new_feats.append(e)
            feats = new_feats
            cin = cout
            size = cs // 2 if i == 0 else cs

        # BatchFlatten (NCHW order) + Linear(feat -> 10), processed channel by
        # channel so each MXU slab is only (fs*fs, 10) and no value reshape is
        # needed: rows are packed lane-dense into a (1, fs*fs) scratch.
        out = bl_ref[...]                                # (1, 10)
        for c in range(c_last):
            for h in range(fs):
                row_ref[:, pl.ds(h * fs, fs)] = feats[c][h:h + 1, :]
            w_slab = wlt_ref[pl.ds(c * fs * fs, fs * fs), :]   # (fs*fs, 10)
            out = out + jnp.dot(row_ref[...], w_slab,
                                preferred_element_type=jnp.float32)
        o_ref[0] = out

    return kernel, conv_sizes, fs, feat


# ----------------------------- forward wrapper --------------------------------

def _forward_impl(x, conv_params, linear_params, drop_out_rate=0.0):
    # TODO(synk): nn.Dropout is identity at inference time; drop_out_rate is
    # accepted for API parity but unused.
    del drop_out_rate
    n_layers = len(conv_params)
    output_sizes = [int(w.shape[0]) for w, _ in conv_params]
    n, cin0, hw, hw2 = x.shape
    assert cin0 == 1 and hw == hw2, x.shape

    kernel, conv_sizes, fs, feat = _make_fused_kernel(n_layers, output_sizes, hw)
    wlt, bl = linear_params                      # wlt pre-transposed: (feat, 10)
    assert wlt.shape == (feat, 10), (wlt.shape, feat)

    # 0/1 selection matrices for the stride-2 downsample of the layer-0 pool.
    cs0 = conv_sizes[0]
    ps0 = cs0 // 2
    rows = jnp.arange(ps0, dtype=jnp.int32)[:, None]
    cols = jnp.arange(cs0, dtype=jnp.int32)[None, :]
    se = (cols == 2 * rows).astype(jnp.float32)          # even rows / cols
    so = (cols == 2 * rows + 1).astype(jnp.float32)      # odd rows / cols

    smem_spec = pl.BlockSpec(memory_space=pltpu.MemorySpace.SMEM)
    in_specs = [pl.BlockSpec((1, 1, hw, hw), lambda b: (b, 0, 0, 0))]
    args = [x.astype(jnp.float32)]
    for w, b in conv_params:                             # tiny weights -> SMEM scalars
        in_specs += [smem_spec, smem_spec]
        args += [w.astype(jnp.float32).reshape(-1), b.astype(jnp.float32)]
    in_specs += [
        pl.BlockSpec((ps0, cs0), lambda b: (0, 0)),      # se
        pl.BlockSpec((ps0, cs0), lambda b: (0, 0)),      # so
        pl.BlockSpec((cs0, ps0), lambda b: (0, 0)),      # se.T
        pl.BlockSpec((cs0, ps0), lambda b: (0, 0)),      # so.T
        pl.BlockSpec((feat, 10), lambda b: (0, 0)),      # linear weight (pre-T)
        pl.BlockSpec((1, 10), lambda b: (0, 0)),         # linear bias
    ]
    args += [se, so, se.T, so.T,
             wlt.astype(jnp.float32), bl.astype(jnp.float32).reshape(1, 10)]

    out = pl.pallas_call(
        kernel,
        out_shape=jax.ShapeDtypeStruct((n, 1, 10), jnp.float32),
        grid=(n,),
        in_specs=in_specs,
        out_specs=pl.BlockSpec((1, 1, 10), lambda b: (b, 0, 0)),
        scratch_shapes=[pltpu.VMEM((1, fs * fs), jnp.float32)],
        compiler_params=pltpu.CompilerParams(
            dimension_semantics=("parallel",)),          # v7x: one image per TC
    )(*args)
    return out.reshape(n, 10)


model_forward = jax.jit(_forward_impl)


# ----------------------------- deterministic params ---------------------------

def init_params(key, n_layers, output_sizes):
    conv_params = []
    in_c = 1
    for i in range(n_layers):
        key, k1, k2 = jax.random.split(key, 3)
        cout = output_sizes[i]
        w = 0.1 * jax.random.normal(k1, (cout, in_c, 2, 2), jnp.float32)
        b = 0.1 * jax.random.normal(k2, (cout,), jnp.float32)
        conv_params.append((w, b))
        in_c = cout
    feat = int(((28 - 2 * n_layers) / 2) ** 2 * output_sizes[-1])
    key, k1, k2 = jax.random.split(key, 3)
    # Linear weight stored pre-transposed (feat, 10): no per-call transpose.
    wlt = 0.05 * jax.random.normal(k1, (feat, 10), jnp.float32)
    bl = 0.05 * jax.random.normal(k2, (10,), jnp.float32)
    return conv_params, (wlt, bl)


if __name__ == "__main__":
    n_layers = 2
    output_sizes = [4, 8]
    drop_out_rate = 0.0

    key = jax.random.PRNGKey(0)
    key, xkey = jax.random.split(key)
    # MNIST-like input: spatial size 28 is required by the Linear() size formula.
    x = jax.random.normal(xkey, (2, 1, 28, 28), jnp.float32)

    conv_params, linear_params = init_params(key, n_layers, output_sizes)
    out = model_forward(x, conv_params, linear_params, drop_out_rate)
    jax.block_until_ready(out)
    assert out.shape == (2, 10), out.shape
    print("KERNEL_OK")
</pallas_src>

<mosaic_0001>
module attributes {stable_mosaic.version = 11 : i64} {
  func.func @kernel(%arg0: i32, %arg1: memref<1x1x28x28xf32, #tpu.memory_space<vmem>>, %arg2: memref<16xf32, #tpu.memory_space<smem>>, %arg3: memref<4xf32, #tpu.memory_space<smem>>, %arg4: memref<128xf32, #tpu.memory_space<smem>>, %arg5: memref<8xf32, #tpu.memory_space<smem>>, %arg6: memref<13x27xf32, #tpu.memory_space<vmem>>, %arg7: memref<13x27xf32, #tpu.memory_space<vmem>>, %arg8: memref<27x13xf32, #tpu.memory_space<vmem>>, %arg9: memref<27x13xf32, #tpu.memory_space<vmem>>, %arg10: memref<1152x10xf32, #tpu.memory_space<vmem>>, %arg11: memref<1x10xf32, #tpu.memory_space<vmem>>, %arg12: memref<1x1x10xf32, #tpu.memory_space<vmem>>, %arg13: memref<1x144xf32, #tpu.memory_space<vmem>>) attributes {dimension_semantics = [#tpu.dimension_semantics<parallel>], iteration_bounds = array<i64: 2>, scalar_prefetch = 0 : i64, scratch_operands = 1 : i64, tpu.core_type = #tpu.core_type<tc>, window_params = [{transform_indices = @transform_0, window_bounds = array<i64: 1, 1, 28, 28>}, {transform_indices = @transform_1, window_bounds = array<i64: 16>}, {transform_indices = @transform_2, window_bounds = array<i64: 4>}, {transform_indices = @transform_3, window_bounds = array<i64: 128>}, {transform_indices = @transform_4, window_bounds = array<i64: 8>}, {pipeline_mode = #tpu.pipeline_mode<synchronous>, transform_indices = @transform_5, window_bounds = array<i64: 13, 27>}, {pipeline_mode = #tpu.pipeline_mode<synchronous>, transform_indices = @transform_6, window_bounds = array<i64: 13, 27>}, {pipeline_mode = #tpu.pipeline_mode<synchronous>, transform_indices = @transform_7, window_bounds = array<i64: 27, 13>}, {pipeline_mode = #tpu.pipeline_mode<synchronous>, transform_indices = @transform_8, window_bounds = array<i64: 27, 13>}, {pipeline_mode = #tpu.pipeline_mode<synchronous>, transform_indices = @transform_9, window_bounds = array<i64: 1152, 10>}, {pipeline_mode = #tpu.pipeline_mode<synchronous>, transform_indices = @transform_10, window_bounds = array<i64: 1, 10>}, {transform_indices = @transform_11, window_bounds = array<i64: 1, 1, 10>}]} {
    %c0 = arith.constant 0 : index
    %c0_0 = arith.constant 0 : index
    %0 = vector.load %arg6[%c0, %c0_0] : memref<13x27xf32, #tpu.memory_space<vmem>>, vector<13x27xf32>
    %c0_1 = arith.constant 0 : index
    %c0_2 = arith.constant 0 : index
    %1 = vector.load %arg7[%c0_1, %c0_2] : memref<13x27xf32, #tpu.memory_space<vmem>>, vector<13x27xf32>
    %c0_3 = arith.constant 0 : index
    %c0_4 = arith.constant 0 : index
    %2 = vector.load %arg8[%c0_3, %c0_4] : memref<27x13xf32, #tpu.memory_space<vmem>>, vector<27x13xf32>
    %c0_5 = arith.constant 0 : index
    %c0_6 = arith.constant 0 : index
    %3 = vector.load %arg9[%c0_5, %c0_6] : memref<27x13xf32, #tpu.memory_space<vmem>>, vector<27x13xf32>
    %c0_7 = arith.constant 0 : index
    %c0_8 = arith.constant 0 : index
    %c0_9 = arith.constant 0 : index
    %c0_10 = arith.constant 0 : index
    %4 = vector.load %arg1[%c0_7, %c0_8, %c0_9, %c0_10] : memref<1x1x28x28xf32, #tpu.memory_space<vmem>>, vector<1x1x28x28xf32>
    %5 = vector.shape_cast %4 : vector<1x1x28x28xf32> to vector<28x28xf32>
    %cst = arith.constant 0.000000e+00 : f32
    %6 = vector.broadcast %cst : f32 to vector<27x27xf32>
    %c0_11 = arith.constant 0 : index
    %7 = memref.load %arg3[%c0_11] : memref<4xf32, #tpu.memory_space<smem>>
    %8 = vector.broadcast %7 : f32 to vector<27x27xf32>
    %9 = arith.addf %6, %8 : vector<27x27xf32>
    %c0_12 = arith.constant 0 : index
    %10 = memref.load %arg2[%c0_12] : memref<16xf32, #tpu.memory_space<smem>>
    %11 = vector.extract_strided_slice %5 {offsets = [0, 0], sizes = [27, 27], strides = [1, 1]} : vector<28x28xf32> to vector<27x27xf32>
    %12 = vector.broadcast %10 : f32 to vector<27x27xf32>
    %13 = arith.mulf %12, %11 : vector<27x27xf32>
    %14 = arith.addf %9, %13 : vector<27x27xf32>
    %c1 = arith.constant 1 : index
    %15 = memref.load %arg2[%c1] : memref<16xf32, #tpu.memory_space<smem>>
    %16 = vector.extract_strided_slice %5 {offsets = [0, 1], sizes = [27, 27], strides = [1, 1]} : vector<28x28xf32> to vector<27x27xf32>
    %17 = vector.broadcast %15 : f32 to vector<27x27xf32>
    %18 = arith.mulf %17, %16 : vector<27x27xf32>
    %19 = arith.addf %14, %18 : vector<27x27xf32>
    %c2 = arith.constant 2 : index
    %20 = memref.load %arg2[%c2] : memref<16xf32, #tpu.memory_space<smem>>
    %21 = vector.extract_strided_slice %5 {offsets = [1, 0], sizes = [27, 27], strides = [1, 1]} : vector<28x28xf32> to vector<27x27xf32>
    %22 = vector.broadcast %20 : f32 to vector<27x27xf32>
    %23 = arith.mulf %22, %21 : vector<27x27xf32>
    %24 = arith.addf %19, %23 : vector<27x27xf32>
    %c3 = arith.constant 3 : index
    %25 = memref.load %arg2[%c3] : memref<16xf32, #tpu.memory_space<smem>>
    %26 = vector.extract_strided_slice %5 {offsets = [1, 1], sizes = [27, 27], strides = [1, 1]} : vector<28x28xf32> to vector<27x27xf32>
    %27 = vector.broadcast %25 : f32 to vector<27x27xf32>
    %28 = arith.mulf %27, %26 : vector<27x27xf32>
    %29 = arith.addf %24, %28 : vector<27x27xf32>
    %cst_13 = arith.constant 0.000000e+00 : f32
    %30 = vector.broadcast %cst_13 : f32 to vector<27x27xf32>
    %31 = arith.cmpf ogt, %29, %30 : vector<27x27xf32>
    %32 = math.exp %29 : vector<27x27xf32>
    %cst_14 = arith.constant 1.000000e+00 : f32
    %33 = vector.broadcast %cst_14 : f32 to vector<27x27xf32>
    %34 = arith.subf %32, %33 : vector<27x27xf32>
    %35 = arith.select %31, %29, %34 : vector<27x27xi1>, vector<27x27xf32>
    %cst_15 = arith.constant dense<0.000000e+00> : vector<13x27xf32>
    %36 = tpu.matmul %0, %35, %cst_15 {dimension_numbers = #tpu.dot_dimension_numbers<[1], [0], [0], [1], [0, 0, 1, 1], [], []>} : vector<13x27xf32>, vector<27x27xf32>, vector<13x27xf32> -> vector<13x27xf32>
    %cst_16 = arith.constant dense<0.000000e+00> : vector<13x27xf32>
    %37 = tpu.matmul %1, %35, %cst_16 {dimension_numbers = #tpu.dot_dimension_numbers<[1], [0], [0], [1], [0, 0, 1, 1], [], []>} : vector<13x27xf32>, vector<27x27xf32>, vector<13x27xf32> -> vector<13x27xf32>
    %38 = arith.maximumf %36, %37 : vector<13x27xf32>
    %cst_17 = arith.constant dense<0.000000e+00> : vector<13x13xf32>
    %39 = tpu.matmul %38, %2, %cst_17 {dimension_numbers = #tpu.dot_dimension_numbers<[1], [0], [0], [1], [0, 0, 1, 1], [], []>} : vector<13x27xf32>, vector<27x13xf32>, vector<13x13xf32> -> vector<13x13xf32>
    %cst_18 = arith.constant dense<0.000000e+00> : vector<13x13xf32>
    %40 = tpu.matmul %38, %3, %cst_18 {dimension_numbers = #tpu.dot_dimension_numbers<[1], [0], [0], [1], [0, 0, 1, 1], [], []>} : vector<13x27xf32>, vector<27x13xf32>, vector<13x13xf32> -> vector<13x13xf32>
    %41 = arith.maximumf %39, %40 : vector<13x13xf32>
    %cst_19 = arith.constant 0.000000e+00 : f32
    %42 = vector.broadcast %cst_19 : f32 to vector<27x27xf32>
    %c1_20 = arith.constant 1 : index
    %43 = memref.load %arg3[%c1_20] : memref<4xf32, #tpu.memory_space<smem>>
    %44 = vector.broadcast %43 : f32 to vector<27x27xf32>
    %45 = arith.addf %42, %44 : vector<27x27xf32>
    %c4 = arith.constant 4 : index
    %46 = memref.load %arg2[%c4] : memref<16xf32, #tpu.memory_space<smem>>
    %47 = vector.extract_strided_slice %5 {offsets = [0, 0], sizes = [27, 27], strides = [1, 1]} : vector<28x28xf32> to vector<27x27xf32>
    %48 = vector.broadcast %46 : f32 to vector<27x27xf32>
    %49 = arith.mulf %48, %47 : vector<27x27xf32>
    %50 = arith.addf %45, %49 : vector<27x27xf32>
    %c5 = arith.constant 5 : index
    %51 = memref.load %arg2[%c5] : memref<16xf32, #tpu.memory_space<smem>>
    %52 = vector.extract_strided_slice %5 {offsets = [0, 1], sizes = [27, 27], strides = [1, 1]} : vector<28x28xf32> to vector<27x27xf32>
    %53 = vector.broadcast %51 : f32 to vector<27x27xf32>
    %54 = arith.mulf %53, %52 : vector<27x27xf32>
    %55 = arith.addf %50, %54 : vector<27x27xf32>
    %c6 = arith.constant 6 : index
    %56 = memref.load %arg2[%c6] : memref<16xf32, #tpu.memory_space<smem>>
    %57 = vector.extract_strided_slice %5 {offsets = [1, 0], sizes = [27, 27], strides = [1, 1]} : vector<28x28xf32> to vector<27x27xf32>
    %58 = vector.broadcast %56 : f32 to vector<27x27xf32>
    %59 = arith.mulf %58, %57 : vector<27x27xf32>
    %60 = arith.addf %55, %59 : vector<27x27xf32>
    %c7 = arith.constant 7 : index
    %61 = memref.load %arg2[%c7] : memref<16xf32, #tpu.memory_space<smem>>
    %62 = vector.extract_strided_slice %5 {offsets = [1, 1], sizes = [27, 27], strides = [1, 1]} : vector<28x28xf32> to vector<27x27xf32>
    %63 = vector.broadcast %61 : f32 to vector<27x27xf32>
    %64 = arith.mulf %63, %62 : vector<27x27xf32>
    %65 = arith.addf %60, %64 : vector<27x27xf32>
    %cst_21 = arith.constant 0.000000e+00 : f32
    %66 = vector.broadcast %cst_21 : f32 to vector<27x27xf32>
    %67 = arith.cmpf ogt, %65, %66 : vector<27x27xf32>
    %68 = math.exp %65 : vector<27x27xf32>
    %cst_22 = arith.constant 1.000000e+00 : f32
    %69 = vector.broadcast %cst_22 : f32 to vector<27x27xf32>
    %70 = arith.subf %68, %69 : vector<27x27xf32>
    %71 = arith.select %67, %65, %70 : vector<27x27xi1>, vector<27x27xf32>
    %cst_23 = arith.constant dense<0.000000e+00> : vector<13x27xf32>
    %72 = tpu.matmul %0, %71, %cst_23 {dimension_numbers = #tpu.dot_dimension_numbers<[1], [0], [0], [1], [0, 0, 1, 1], [], []>} : vector<13x27xf32>, vector<27x27xf32>, vector<13x27xf32> -> vector<13x27xf32>
    %cst_24 = arith.constant dense<0.000000e+00> : vector<13x27xf32>
    %73 = tpu.matmul %1, %71, %cst_24 {dimension_numbers = #tpu.dot_dimension_numbers<[1], [0], [0], [1], [0, 0, 1, 1], [], []>} : vector<13x27xf32>, vector<27x27xf32>, vector<13x27xf32> -> vector<13x27xf32>
    %74 = arith.maximumf %72, %73 : vector<13x27xf32>
    %cst_25 = arith.constant dense<0.000000e+00> : vector<13x13xf32>
    %75 = tpu.matmul %74, %2, %cst_25 {dimension_numbers = #tpu.dot_dimension_numbers<[1], [0], [0], [1], [0, 0, 1, 1], [], []>} : vector<13x27xf32>, vector<27x13xf32>, vector<13x13xf32> -> vector<13x13xf32>
    %cst_26 = arith.constant dense<0.000000e+00> : vector<13x13xf32>
    %76 = tpu.matmul %74, %3, %cst_26 {dimension_numbers = #tpu.dot_dimension_numbers<[1], [0], [0], [1], [0, 0, 1, 1], [], []>} : vector<13x27xf32>, vector<27x13xf32>, vector<13x13xf32> -> vector<13x13xf32>
    %77 = arith.maximumf %75, %76 : vector<13x13xf32>
    %cst_27 = arith.constant 0.000000e+00 : f32
    %78 = vector.broadcast %cst_27 : f32 to vector<27x27xf32>
    %c2_28 = arith.constant 2 : index
    %79 = memref.load %arg3[%c2_28] : memref<4xf32, #tpu.memory_space<smem>>
    %80 = vector.broadcast %79 : f32 to vector<27x27xf32>
    %81 = arith.addf %78, %80 : vector<27x27xf32>
    %c8 = arith.constant 8 : index
    %82 = memref.load %arg2[%c8] : memref<16xf32, #tpu.memory_space<smem>>
    %83 = vector.extract_strided_slice %5 {offsets = [0, 0], sizes = [27, 27], strides = [1, 1]} : vector<28x28xf32> to vector<27x27xf32>
    %84 = vector.broadcast %82 : f32 to vector<27x27xf32>
    %85 = arith.mulf %84, %83 : vector<27x27xf32>
    %86 = arith.addf %81, %85 : vector<27x27xf32>
    %c9 = arith.constant 9 : index
    %87 = memref.load %arg2[%c9] : memref<16xf32, #tpu.memory_space<smem>>
    %88 = vector.extract_strided_slice %5 {offsets = [0, 1], sizes = [27, 27], strides = [1, 1]} : vector<28x28xf32> to vector<27x27xf32>
    %89 = vector.broadcast %87 : f32 to vector<27x27xf32>
    %90 = arith.mulf %89, %88 : vector<27x27xf32>
    %91 = arith.addf %86, %90 : vector<27x27xf32>
    %c10 = arith.constant 10 : index
    %92 = memref.load %arg2[%c10] : memref<16xf32, #tpu.memory_space<smem>>
    %93 = vector.extract_strided_slice %5 {offsets = [1, 0], sizes = [27, 27], strides = [1, 1]} : vector<28x28xf32> to vector<27x27xf32>
    %94 = vector.broadcast %92 : f32 to vector<27x27xf32>
    %95 = arith.mulf %94, %93 : vector<27x27xf32>
    %96 = arith.addf %91, %95 : vector<27x27xf32>
    %c11 = arith.constant 11 : index
    %97 = memref.load %arg2[%c11] : memref<16xf32, #tpu.memory_space<smem>>
    %98 = vector.extract_strided_slice %5 {offsets = [1, 1], sizes = [27, 27], strides = [1, 1]} : vector<28x28xf32> to vector<27x27xf32>
    %99 = vector.broadcast %97 : f32 to vector<27x27xf32>
    %100 = arith.mulf %99, %98 : vector<27x27xf32>
    %101 = arith.addf %96, %100 : vector<27x27xf32>
    %cst_29 = arith.constant 0.000000e+00 : f32
    %102 = vector.broadcast %cst_29 : f32 to vector<27x27xf32>
    %103 = arith.cmpf ogt, %101, %102 : vector<27x27xf32>
    %104 = math.exp %101 : vector<27x27xf32>
    %cst_30 = arith.constant 1.000000e+00 : f32
    %105 = vector.broadcast %cst_30 : f32 to vector<27x27xf32>
    %106 = arith.subf %104, %105 : vector<27x27xf32>
    %107 = arith.select %103, %101, %106 : vector<27x27xi1>, vector<27x27xf32>
    %cst_31 = arith.constant dense<0.000000e+00> : vector<13x27xf32>
    %108 = tpu.matmul %0, %107, %cst_31 {dimension_numbers = #tpu.dot_dimension_numbers<[1], [0], [0], [1], [0, 0, 1, 1], [], []>} : vector<13x27xf32>, vector<27x27xf32>, vector<13x27xf32> -> vector<13x27xf32>
    %cst_32 = arith.constant dense<0.000000e+00> : vector<13x27xf32>
    %109 = tpu.matmul %1, %107, %cst_32 {dimension_numbers = #tpu.dot_dimension_numbers<[1], [0], [0], [1], [0, 0, 1, 1], [], []>} : vector<13x27xf32>, vector<27x27xf32>, vector<13x27xf32> -> vector<13x27xf32>
    %110 = arith.maximumf %108, %109 : vector<13x27xf32>
    %cst_33 = arith.constant dense<0.000000e+00> : vector<13x13xf32>
    %111 = tpu.matmul %110, %2, %cst_33 {dimension_numbers = #tpu.dot_dimension_numbers<[1], [0], [0], [1], [0, 0, 1, 1], [], []>} : vector<13x27xf32>, vector<27x13xf32>, vector<13x13xf32> -> vector<13x13xf32>
    %cst_34 = arith.constant dense<0.000000e+00> : vector<13x13xf32>
    %112 = tpu.matmul %110, %3, %cst_34 {dimension_numbers = #tpu.dot_dimension_numbers<[1], [0], [0], [1], [0, 0, 1, 1], [], []>} : vector<13x27xf32>, vector<27x13xf32>, vector<13x13xf32> -> vector<13x13xf32>
    %113 = arith.maximumf %111, %112 : vector<13x13xf32>
    %cst_35 = arith.constant 0.000000e+00 : f32
    %114 = vector.broadcast %cst_35 : f32 to vector<27x27xf32>
    %c3_36 = arith.constant 3 : index
    %115 = memref.load %arg3[%c3_36] : memref<4xf32, #tpu.memory_space<smem>>
    %116 = vector.broadcast %115 : f32 to vector<27x27xf32>
    %117 = arith.addf %114, %116 : vector<27x27xf32>
    %c12 = arith.constant 12 : index
    %118 = memref.load %arg2[%c12] : memref<16xf32, #tpu.memory_space<smem>>
    %119 = vector.extract_strided_slice %5 {offsets = [0, 0], sizes = [27, 27], strides = [1, 1]} : vector<28x28xf32> to vector<27x27xf32>
    %120 = vector.broadcast %118 : f32 to vector<27x27xf32>
    %121 = arith.mulf %120, %119 : vector<27x27xf32>
    %122 = arith.addf %117, %121 : vector<27x27xf32>
    %c13 = arith.constant 13 : index
    %123 = memref.load %arg2[%c13] : memref<16xf32, #tpu.memory_space<smem>>
    %124 = vector.extract_strided_slice %5 {offsets = [0, 1], sizes = [27, 27], strides = [1, 1]} : vector<28x28xf32> to vector<27x27xf32>
    %125 = vector.broadcast %123 : f32 to vector<27x27xf32>
    %126 = arith.mulf %125, %124 : vector<27x27xf32>
    %127 = arith.addf %122, %126 : vector<27x27xf32>
    %c14 = arith.constant 14 : index
    %128 = memref.load %arg2[%c14] : memref<16xf32, #tpu.memory_space<smem>>
    %129 = vector.extract_strided_slice %5 {offsets = [1, 0], sizes = [27, 27], strides = [1, 1]} : vector<28x28xf32> to vector<27x27xf32>
    %130 = vector.broadcast %128 : f32 to vector<27x27xf32>
    %131 = arith.mulf %130, %129 : vector<27x27xf32>
    %132 = arith.addf %127, %131 : vector<27x27xf32>
    %c15 = arith.constant 15 : index
    %133 = memref.load %arg2[%c15] : memref<16xf32, #tpu.memory_space<smem>>
    %134 = vector.extract_strided_slice %5 {offsets = [1, 1], sizes = [27, 27], strides = [1, 1]} : vector<28x28xf32> to vector<27x27xf32>
    %135 = vector.broadcast %133 : f32 to vector<27x27xf32>
    %136 = arith.mulf %135, %134 : vector<27x27xf32>
    %137 = arith.addf %132, %136 : vector<27x27xf32>
    %cst_37 = arith.constant 0.000000e+00 : f32
    %138 = vector.broadcast %cst_37 : f32 to vector<27x27xf32>
    %139 = arith.cmpf ogt, %137, %138 : vector<27x27xf32>
    %140 = math.exp %137 : vector<27x27xf32>
    %cst_38 = arith.constant 1.000000e+00 : f32
    %141 = vector.broadcast %cst_38 : f32 to vector<27x27xf32>
    %142 = arith.subf %140, %141 : vector<27x27xf32>
    %143 = arith.select %139, %137, %142 : vector<27x27xi1>, vector<27x27xf32>
    %cst_39 = arith.constant dense<0.000000e+00> : vector<13x27xf32>
    %144 = tpu.matmul %0, %143, %cst_39 {dimension_numbers = #tpu.dot_dimension_numbers<[1], [0], [0], [1], [0, 0, 1, 1], [], []>} : vector<13x27xf32>, vector<27x27xf32>, vector<13x27xf32> -> vector<13x27xf32>
    %cst_40 = arith.constant dense<0.000000e+00> : vector<13x27xf32>
    %145 = tpu.matmul %1, %143, %cst_40 {dimension_numbers = #tpu.dot_dimension_numbers<[1], [0], [0], [1], [0, 0, 1, 1], [], []>} : vector<13x27xf32>, vector<27x27xf32>, vector<13x27xf32> -> vector<13x27xf32>
    %146 = arith.maximumf %144, %145 : vector<13x27xf32>
    %cst_41 = arith.constant dense<0.000000e+00> : vector<13x13xf32>
    %147 = tpu.matmul %146, %2, %cst_41 {dimension_numbers = #tpu.dot_dimension_numbers<[1], [0], [0], [1], [0, 0, 1, 1], [], []>} : vector<13x27xf32>, vector<27x13xf32>, vector<13x13xf32> -> vector<13x13xf32>
    %cst_42 = arith.constant dense<0.000000e+00> : vector<13x13xf32>
    %148 = tpu.matmul %146, %3, %cst_42 {dimension_numbers = #tpu.dot_dimension_numbers<[1], [0], [0], [1], [0, 0, 1, 1], [], []>} : vector<13x27xf32>, vector<27x13xf32>, vector<13x13xf32> -> vector<13x13xf32>
    %149 = arith.maximumf %147, %148 : vector<13x13xf32>
    %cst_43 = arith.constant 0.000000e+00 : f32
    %150 = vector.broadcast %cst_43 : f32 to vector<12x12xf32>
    %c0_44 = arith.constant 0 : index
    %151 = memref.load %arg5[%c0_44] : memref<8xf32, #tpu.memory_space<smem>>
    %152 = vector.broadcast %151 : f32 to vector<12x12xf32>
    %153 = arith.addf %150, %152 : vector<12x12xf32>
    %c0_45 = arith.constant 0 : index
    %154 = memref.load %arg4[%c0_45] : memref<128xf32, #tpu.memory_space<smem>>
    %155 = vector.extract_strided_slice %41 {offsets = [0, 0], sizes = [12, 12], strides = [1, 1]} : vector<13x13xf32> to vector<12x12xf32>
    %156 = vector.broadcast %154 : f32 to vector<12x12xf32>
    %157 = arith.mulf %156, %155 : vector<12x12xf32>
    %158 = arith.addf %153, %157 : vector<12x12xf32>
    %c1_46 = arith.constant 1 : index
    %159 = memref.load %arg4[%c1_46] : memref<128xf32, #tpu.memory_space<smem>>
    %160 = vector.extract_strided_slice %41 {offsets = [0, 1], sizes = [12, 12], strides = [1, 1]} : vector<13x13xf32> to vector<12x12xf32>
    %161 = vector.broadcast %159 : f32 to vector<12x12xf32>
    %162 = arith.mulf %161, %160 : vector<12x12xf32>
    %163 = arith.addf %158, %162 : vector<12x12xf32>
    %c2_47 = arith.constant 2 : index
    %164 = memref.load %arg4[%c2_47] : memref<128xf32, #tpu.memory_space<smem>>
    %165 = vector.extract_strided_slice %41 {offsets = [1, 0], sizes = [12, 12], strides = [1, 1]} : vector<13x13xf32> to vector<12x12xf32>
    %166 = vector.broadcast %164 : f32 to vector<12x12xf32>
    %167 = arith.mulf %166, %165 : vector<12x12xf32>
    %168 = arith.addf %163, %167 : vector<12x12xf32>
    %c3_48 = arith.constant 3 : index
    %169 = memref.load %arg4[%c3_48] : memref<128xf32, #tpu.memory_space<smem>>
    %170 = vector.extract_strided_slice %41 {offsets = [1, 1], sizes = [12, 12], strides = [1, 1]} : vector<13x13xf32> to vector<12x12xf32>
    %171 = vector.broadcast %169 : f32 to vector<12x12xf32>
    %172 = arith.mulf %171, %170 : vector<12x12xf32>
    %173 = arith.addf %168, %172 : vector<12x12xf32>
    %c4_49 = arith.constant 4 : index
    %174 = memref.load %arg4[%c4_49] : memref<128xf32, #tpu.memory_space<smem>>
    %175 = vector.extract_strided_slice %77 {offsets = [0, 0], sizes = [12, 12], strides = [1, 1]} : vector<13x13xf32> to vector<12x12xf32>
    %176 = vector.broadcast %174 : f32 to vector<12x12xf32>
    %177 = arith.mulf %176, %175 : vector<12x12xf32>
    %178 = arith.addf %173, %177 : vector<12x12xf32>
    %c5_50 = arith.constant 5 : index
    %179 = memref.load %arg4[%c5_50] : memref<128xf32, #tpu.memory_space<smem>>
    %180 = vector.extract_strided_slice %77 {offsets = [0, 1], sizes = [12, 12], strides = [1, 1]} : vector<13x13xf32> to vector<12x12xf32>
    %181 = vector.broadcast %179 : f32 to vector<12x12xf32>
    %182 = arith.mulf %181, %180 : vector<12x12xf32>
    %183 = arith.addf %178, %182 : vector<12x12xf32>
    %c6_51 = arith.constant 6 : index
    %184 = memref.load %arg4[%c6_51] : memref<128xf32, #tpu.memory_space<smem>>
    %185 = vector.extract_strided_slice %77 {offsets = [1, 0], sizes = [12, 12], strides = [1, 1]} : vector<13x13xf32> to vector<12x12xf32>
    %186 = vector.broadcast %184 : f32 to vector<12x12xf32>
    %187 = arith.mulf %186, %185 : vector<12x12xf32>
    %188 = arith.addf %183, %187 : vector<12x12xf32>
    %c7_52 = arith.constant 7 : index
    %189 = memref.load %arg4[%c7_52] : memref<128xf32, #tpu.memory_space<smem>>
    %190 = vector.extract_strided_slice %77 {offsets = [1, 1], sizes = [12, 12], strides = [1, 1]} : vector<13x13xf32> to vector<12x12xf32>
    %191 = vector.broadcast %189 : f32 to vector<12x12xf32>
    %192 = arith.mulf %191, %190 : vector<12x12xf32>
    %193 = arith.addf %188, %192 : vector<12x12xf32>
    %c8_53 = arith.constant 8 : index
    %194 = memref.load %arg4[%c8_53] : memref<128xf32, #tpu.memory_space<smem>>
    %195 = vector.extract_strided_slice %113 {offsets = [0, 0], sizes = [12, 12], strides = [1, 1]} : vector<13x13xf32> to vector<12x12xf32>
    %196 = vector.broadcast %194 : f32 to vector<12x12xf32>
    %197 = arith.mulf %196, %195 : vector<12x12xf32>
    %198 = arith.addf %193, %197 : vector<12x12xf32>
    %c9_54 = arith.constant 9 : index
    %199 = memref.load %arg4[%c9_54] : memref<128xf32, #tpu.memory_space<smem>>
    %200 = vector.extract_strided_slice %113 {offsets = [0, 1], sizes = [12, 12], strides = [1, 1]} : vector<13x13xf32> to vector<12x12xf32>
    %201 = vector.broadcast %199 : f32 to vector<12x12xf32>
    %202 = arith.mulf %201, %200 : vector<12x12xf32>
    %203 = arith.addf %198, %202 : vector<12x12xf32>
    %c10_55 = arith.constant 10 : index
    %204 = memref.load %arg4[%c10_55] : memref<128xf32, #tpu.memory_space<smem>>
    %205 = vector.extract_strided_slice %113 {offsets = [1, 0], sizes = [12, 12], strides = [1, 1]} : vector<13x13xf32> to vector<12x12xf32>
    %206 = vector.broadcast %204 : f32 to vector<12x12xf32>
    %207 = arith.mulf %206, %205 : vector<12x12xf32>
    %208 = arith.addf %203, %207 : vector<12x12xf32>
    %c11_56 = arith.constant 11 : index
    %209 = memref.load %arg4[%c11_56] : memref<128xf32, #tpu.memory_space<smem>>
    %210 = vector.extract_strided_slice %113 {offsets = [1, 1], sizes = [12, 12], strides = [1, 1]} : vector<13x13xf32> to vector<12x12xf32>
    %211 = vector.broadcast %209 : f32 to vector<12x12xf32>
    %212 = arith.mulf %211, %210 : vector<12x12xf32>
    %213 = arith.addf %208, %212 : vector<12x12xf32>
    %c12_57 = arith.constant 12 : index
    %214 = memref.load %arg4[%c12_57] : memref<128xf32, #tpu.memory_space<smem>>
    %215 = vector.extract_strided_slice %149 {offsets = [0, 0], sizes = [12, 12], strides = [1, 1]} : vector<13x13xf32> to vector<12x12xf32>
    %216 = vector.broadcast %214 : f32 to vector<12x12xf32>
    %217 = arith.mulf %216, %215 : vector<12x12xf32>
    %218 = arith.addf %213, %217 : vector<12x12xf32>
    %c13_58 = arith.constant 13 : index
    %219 = memref.load %arg4[%c13_58] : memref<128xf32, #tpu.memory_space<smem>>
    %220 = vector.extract_strided_slice %149 {offsets = [0, 1], sizes = [12, 12], strides = [1, 1]} : vector<13x13xf32> to vector<12x12xf32>
    %221 = vector.broadcast %219 : f32 to vector<12x12xf32>
    %222 = arith.mulf %221, %220 : vector<12x12xf32>
    %223 = arith.addf %218, %222 : vector<12x12xf32>
    %c14_59 = arith.constant 14 : index
    %224 = memref.load %arg4[%c14_59] : memref<128xf32, #tpu.memory_space<smem>>
    %225 = vector.extract_strided_slice %149 {offsets = [1, 0], sizes = [12, 12], strides = [1, 1]} : vector<13x13xf32> to vector<12x12xf32>
    %226 = vector.broadcast %224 : f32 to vector<12x12xf32>
    %227 = arith.mulf %226, %225 : vector<12x12xf32>
    %228 = arith.addf %223, %227 : vector<12x12xf32>
    %c15_60 = arith.constant 15 : index
    %229 = memref.load %arg4[%c15_60] : memref<128xf32, #tpu.memory_space<smem>>
    %230 = vector.extract_strided_slice %149 {offsets = [1, 1], sizes = [12, 12], strides = [1, 1]} : vector<13x13xf32> to vector<12x12xf32>
    %231 = vector.broadcast %229 : f32 to vector<12x12xf32>
    %232 = arith.mulf %231, %230 : vector<12x12xf32>
    %233 = arith.addf %228, %232 : vector<12x12xf32>
    %cst_61 = arith.constant 0.000000e+00 : f32
    %234 = vector.broadcast %cst_61 : f32 to vector<12x12xf32>
    %235 = arith.cmpf ogt, %233, %234 : vector<12x12xf32>
    %236 = math.exp %233 : vector<12x12xf32>
    %cst_62 = arith.constant 1.000000e+00 : f32
    %237 = vector.broadcast %cst_62 : f32 to vector<12x12xf32>
    %238 = arith.subf %236, %237 : vector<12x12xf32>
    %239 = arith.select %235, %233, %238 : vector<12x12xi1>, vector<12x12xf32>
    %cst_63 = arith.constant 0.000000e+00 : f32
    %240 = vector.broadcast %cst_63 : f32 to vector<12x12xf32>
    %c1_64 = arith.constant 1 : index
    %241 = memref.load %arg5[%c1_64] : memref<8xf32, #tpu.memory_space<smem>>
    %242 = vector.broadcast %241 : f32 to vector<12x12xf32>
    %243 = arith.addf %240, %242 : vector<12x12xf32>
    %c16 = arith.constant 16 : index
    %244 = memref.load %arg4[%c16] : memref<128xf32, #tpu.memory_space<smem>>
    %245 = vector.extract_strided_slice %41 {offsets = [0, 0], sizes = [12, 12], strides = [1, 1]} : vector<13x13xf32> to vector<12x12xf32>
    %246 = vector.broadcast %244 : f32 to vector<12x12xf32>
    %247 = arith.mulf %246, %245 : vector<12x12xf32>
    %248 = arith.addf %243, %247 : vector<12x12xf32>
    %c17 = arith.constant 17 : index
    %249 = memref.load %arg4[%c17] : memref<128xf32, #tpu.memory_space<smem>>
    %250 = vector.extract_strided_slice %41 {offsets = [0, 1], sizes = [12, 12], strides = [1, 1]} : vector<13x13xf32> to vector<12x12xf32>
    %251 = vector.broadcast %249 : f32 to vector<12x12xf32>
    %252 = arith.mulf %251, %250 : vector<12x12xf32>
    %253 = arith.addf %248, %252 : vector<12x12xf32>
    %c18 = arith.constant 18 : index
    %254 = memref.load %arg4[%c18] : memref<128xf32, #tpu.memory_space<smem>>
    %255 = vector.extract_strided_slice %41 {offsets = [1, 0], sizes = [12, 12], strides = [1, 1]} : vector<13x13xf32> to vector<12x12xf32>
    %256 = vector.broadcast %254 : f32 to vector<12x12xf32>
    %257 = arith.mulf %256, %255 : vector<12x12xf32>
    %258 = arith.addf %253, %257 : vector<12x12xf32>
    %c19 = arith.constant 19 : index
    %259 = memref.load %arg4[%c19] : memref<128xf32, #tpu.memory_space<smem>>
    %260 = vector.extract_strided_slice %41 {offsets = [1, 1], sizes = [12, 12], strides = [1, 1]} : vector<13x13xf32> to vector<12x12xf32>
    %261 = vector.broadcast %259 : f32 to vector<12x12xf32>
    %262 = arith.mulf %261, %260 : vector<12x12xf32>
    %263 = arith.addf %258, %262 : vector<12x12xf32>
    %c20 = arith.constant 20 : index
    %264 = memref.load %arg4[%c20] : memref<128xf32, #tpu.memory_space<smem>>
    %265 = vector.extract_strided_slice %77 {offsets = [0, 0], sizes = [12, 12], strides = [1, 1]} : vector<13x13xf32> to vector<12x12xf32>
    %266 = vector.broadcast %264 : f32 to vector<12x12xf32>
    %267 = arith.mulf %266, %265 : vector<12x12xf32>
    %268 = arith.addf %263, %267 : vector<12x12xf32>
    %c21 = arith.constant 21 : index
    %269 = memref.load %arg4[%c21] : memref<128xf32, #tpu.memory_space<smem>>
    %270 = vector.extract_strided_slice %77 {offsets = [0, 1], sizes = [12, 12], strides = [1, 1]} : vector<13x13xf32> to vector<12x12xf32>
    %271 = vector.broadcast %269 : f32 to vector<12x12xf32>
    %272 = arith.mulf %271, %270 : vector<12x12xf32>
    %273 = arith.addf %268, %272 : vector<12x12xf32>
    %c22 = arith.constant 22 : index
    %274 = memref.load %arg4[%c22] : memref<128xf32, #tpu.memory_space<smem>>
    %275 = vector.extract_strided_slice %77 {offsets = [1, 0], sizes = [12, 12], strides = [1, 1]} : vector<13x13xf32> to vector<12x12xf32>
    %276 = vector.broadcast %274 : f32 to vector<12x12xf32>
    %277 = arith.mulf %276, %275 : vector<12x12xf32>
    %278 = arith.addf %273, %277 : vector<12x12xf32>
    %c23 = arith.constant 23 : index
    %279 = memref.load %arg4[%c23] : memref<128xf32, #tpu.memory_space<smem>>
    %280 = vector.extract_strided_slice %77 {offsets = [1, 1], sizes = [12, 12], strides = [1, 1]} : vector<13x13xf32> to vector<12x12xf32>
    %281 = vector.broadcast %279 : f32 to vector<12x12xf32>
    %282 = arith.mulf %281, %280 : vector<12x12xf32>
    %283 = arith.addf %278, %282 : vector<12x12xf32>
    %c24 = arith.constant 24 : index
    %284 = memref.load %arg4[%c24] : memref<128xf32, #tpu.memory_space<smem>>
    %285 = vector.extract_strided_slice %113 {offsets = [0, 0], sizes = [12, 12], strides = [1, 1]} : vector<13x13xf32> to vector<12x12xf32>
    %286 = vector.broadcast %284 : f32 to vector<12x12xf32>
    %287 = arith.mulf %286, %285 : vector<12x12xf32>
    %288 = arith.addf %283, %287 : vector<12x12xf32>
    %c25 = arith.constant 25 : index
    %289 = memref.load %arg4[%c25] : memref<128xf32, #tpu.memory_space<smem>>
    %290 = vector.extract_strided_slice %113 {offsets = [0, 1], sizes = [12, 12], strides = [1, 1]} : vector<13x13xf32> to vector<12x12xf32>
    %291 = vector.broadcast %289 : f32 to vector<12x12xf32>
    %292 = arith.mulf %291, %290 : vector<12x12xf32>
    %293 = arith.addf %288, %292 : vector<12x12xf32>
    %c26 = arith.constant 26 : index
    %294 = memref.load %arg4[%c26] : memref<128xf32, #tpu.memory_space<smem>>
    %295 = vector.extract_strided_slice %113 {offsets = [1, 0], sizes = [12, 12], strides = [1, 1]} : vector<13x13xf32> to vector<12x12xf32>
    %296 = vector.broadcast %294 : f32 to vector<12x12xf32>
    %297 = arith.mulf %296, %295 : vector<12x12xf32>
    %298 = arith.addf %293, %297 : vector<12x12xf32>
    %c27 = arith.constant 27 : index
    %299 = memref.load %arg4[%c27] : memref<128xf32, #tpu.memory_space<smem>>
    %300 = vector.extract_strided_slice %113 {offsets = [1, 1], sizes = [12, 12], strides = [1, 1]} : vector<13x13xf32> to vector<12x12xf32>
    %301 = vector.broadcast %299 : f32 to vector<12x12xf32>
    %302 = arith.mulf %301, %300 : vector<12x12xf32>
    %303 = arith.addf %298, %302 : vector<12x12xf32>
    %c28 = arith.constant 28 : index
    %304 = memref.load %arg4[%c28] : memref<128xf32, #tpu.memory_space<smem>>
    %305 = vector.extract_strided_slice %149 {offsets = [0, 0], sizes = [12, 12], strides = [1, 1]} : vector<13x13xf32> to vector<12x12xf32>
    %306 = vector.broadcast %304 : f32 to vector<12x12xf32>
    %307 = arith.mulf %306, %305 : vector<12x12xf32>
    %308 = arith.addf %303, %307 : vector<12x12xf32>
    %c29 = arith.constant 29 : index
    %309 = memref.load %arg4[%c29] : memref<128xf32, #tpu.memory_space<smem>>
    %310 = vector.extract_strided_slice %149 {offsets = [0, 1], sizes = [12, 12], strides = [1, 1]} : vector<13x13xf32> to vector<12x12xf32>
    %311 = vector.broadcast %309 : f32 to vector<12x12xf32>
    %312 = arith.mulf %311, %310 : vector<12x12xf32>
    %313 = arith.addf %308, %312 : vector<12x12xf32>
    %c30 = arith.constant 30 : index
    %314 = memref.load %arg4[%c30] : memref<128xf32, #tpu.memory_space<smem>>
    %315 = vector.extract_strided_slice %149 {offsets = [1, 0], sizes = [12, 12], strides = [1, 1]} : vector<13x13xf32> to vector<12x12xf32>
    %316 = vector.broadcast %314 : f32 to vector<12x12xf32>
    %317 = arith.mulf %316, %315 : vector<12x12xf32>
    %318 = arith.addf %313, %317 : vector<12x12xf32>
    %c31 = arith.constant 31 : index
    %319 = memref.load %arg4[%c31] : memref<128xf32, #tpu.memory_space<smem>>
    %320 = vector.extract_strided_slice %149 {offsets = [1, 1], sizes = [12, 12], strides = [1, 1]} : vector<13x13xf32> to vector<12x12xf32>
    %321 = vector.broadcast %319 : f32 to vector<12x12xf32>
    %322 = arith.mulf %321, %320 : vector<12x12xf32>
    %323 = arith.addf %318, %322 : vector<12x12xf32>
    %cst_65 = arith.constant 0.000000e+00 : f32
    %324 = vector.broadcast %cst_65 : f32 to vector<12x12xf32>
    %325 = arith.cmpf ogt, %323, %324 : vector<12x12xf32>
    %326 = math.exp %323 : vector<12x12xf32>
    %cst_66 = arith.constant 1.000000e+00 : f32
    %327 = vector.broadcast %cst_66 : f32 to vector<12x12xf32>
    %328 = arith.subf %326, %327 : vector<12x12xf32>
    %329 = arith.select %325, %323, %328 : vector<12x12xi1>, vector<12x12xf32>
    %cst_67 = arith.constant 0.000000e+00 : f32
    %330 = vector.broadcast %cst_67 : f32 to vector<12x12xf32>
    %c2_68 = arith.constant 2 : index
    %331 = memref.load %arg5[%c2_68] : memref<8xf32, #tpu.memory_space<smem>>
    %332 = vector.broadcast %331 : f32 to vector<12x12xf32>
    %333 = arith.addf %330, %332 : vector<12x12xf32>
    %c32 = arith.constant 32 : index
    %334 = memref.load %arg4[%c32] : memref<128xf32, #tpu.memory_space<smem>>
    %335 = vector.extract_strided_slice %41 {offsets = [0, 0], sizes = [12, 12], strides = [1, 1]} : vector<13x13xf32> to vector<12x12xf32>
    %336 = vector.broadcast %334 : f32 to vector<12x12xf32>
    %337 = arith.mulf %336, %335 : vector<12x12xf32>
    %338 = arith.addf %333, %337 : vector<12x12xf32>
    %c33 = arith.constant 33 : index
    %339 = memref.load %arg4[%c33] : memref<128xf32, #tpu.memory_space<smem>>
    %340 = vector.extract_strided_slice %41 {offsets = [0, 1], sizes = [12, 12], strides = [1, 1]} : vector<13x13xf32> to vector<12x12xf32>
    %341 = vector.broadcast %339 : f32 to vector<12x12xf32>
    %342 = arith.mulf %341, %340 : vector<12x12xf32>
    %343 = arith.addf %338, %342 : vector<12x12xf32>
    %c34 = arith.constant 34 : index
    %344 = memref.load %arg4[%c34] : memref<128xf32, #tpu.memory_space<smem>>
    %345 = vector.extract_strided_slice %41 {offsets = [1, 0], sizes = [12, 12], strides = [1, 1]} : vector<13x13xf32> to vector<12x12xf32>
    %346 = vector.broadcast %344 : f32 to vector<12x12xf32>
    %347 = arith.mulf %346, %345 : vector<12x12xf32>
    %348 = arith.addf %343, %347 : vector<12x12xf32>
    %c35 = arith.constant 35 : index
    %349 = memref.load %arg4[%c35] : memref<128xf32, #tpu.memory_space<smem>>
    %350 = vector.extract_strided_slice %41 {offsets = [1, 1], sizes = [12, 12], strides = [1, 1]} : vector<13x13xf32> to vector<12x12xf32>
    %351 = vector.broadcast %349 : f32 to vector<12x12xf32>
    %352 = arith.mulf %351, %350 : vector<12x12xf32>
    %353 = arith.addf %348, %352 : vector<12x12xf32>
    %c36 = arith.constant 36 : index
    %354 = memref.load %arg4[%c36] : memref<128xf32, #tpu.memory_space<smem>>
    %355 = vector.extract_strided_slice %77 {offsets = [0, 0], sizes = [12, 12], strides = [1, 1]} : vector<13x13xf32> to vector<12x12xf32>
    %356 = vector.broadcast %354 : f32 to vector<12x12xf32>
    %357 = arith.mulf %356, %355 : vector<12x12xf32>
    %358 = arith.addf %353, %357 : vector<12x12xf32>
    %c37 = arith.constant 37 : index
    %359 = memref.load %arg4[%c37] : memref<128xf32, #tpu.memory_space<smem>>
    %360 = vector.extract_strided_slice %77 {offsets = [0, 1], sizes = [12, 12], strides = [1, 1]} : vector<13x13xf32> to vector<12x12xf32>
    %361 = vector.broadcast %359 : f32 to vector<12x12xf32>
    %362 = arith.mulf %361, %360 : vector<12x12xf32>
    %363 = arith.addf %358, %362 : vector<12x12xf32>
    %c38 = arith.constant 38 : index
    %364 = memref.load %arg4[%c38] : memref<128xf32, #tpu.memory_space<smem>>
    %365 = vector.extract_strided_slice %77 {offsets = [1, 0], sizes = [12, 12], strides = [1, 1]} : vector<13x13xf32> to vector<12x12xf32>
    %366 = vector.broadcast %364 : f32 to vector<12x12xf32>
    %367 = arith.mulf %366, %365 : vector<12x12xf32>
    %368 = arith.addf %363, %367 : vector<12x12xf32>
    %c39 = arith.constant 39 : index
    %369 = memref.load %arg4[%c39] : memref<128xf32, #tpu.memory_space<smem>>
    %370 = vector.extract_strided_slice %77 {offsets = [1, 1], sizes = [12, 12], strides = [1, 1]} : vector<13x13xf32> to vector<12x12xf32>
    %371 = vector.broadcast %369 : f32 to vector<12x12xf32>
    %372 = arith.mulf %371, %370 : vector<12x12xf32>
    %373 = arith.addf %368, %372 : vector<12x12xf32>
    %c40 = arith.constant 40 : index
    %374 = memref.load %arg4[%c40] : memref<128xf32, #tpu.memory_space<smem>>
    %375 = vector.extract_strided_slice %113 {offsets = [0, 0], sizes = [12, 12], strides = [1, 1]} : vector<13x13xf32> to vector<12x12xf32>
    %376 = vector.broadcast %374 : f32 to vector<12x12xf32>
    %377 = arith.mulf %376, %375 : vector<12x12xf32>
    %378 = arith.addf %373, %377 : vector<12x12xf32>
    %c41 = arith.constant 41 : index
    %379 = memref.load %arg4[%c41] : memref<128xf32, #tpu.memory_space<smem>>
    %380 = vector.extract_strided_slice %113 {offsets = [0, 1], sizes = [12, 12], strides = [1, 1]} : vector<13x13xf32> to vector<12x12xf32>
    %381 = vector.broadcast %379 : f32 to vector<12x12xf32>
    %382 = arith.mulf %381, %380 : vector<12x12xf32>
    %383 = arith.addf %378, %382 : vector<12x12xf32>
    %c42 = arith.constant 42 : index
    %384 = memref.load %arg4[%c42] : memref<128xf32, #tpu.memory_space<smem>>
    %385 = vector.extract_strided_slice %113 {offsets = [1, 0], sizes = [12, 12], strides = [1, 1]} : vector<13x13xf32> to vector<12x12xf32>
    %386 = vector.broadcast %384 : f32 to vector<12x12xf32>
    %387 = arith.mulf %386, %385 : vector<12x12xf32>
    %388 = arith.addf %383, %387 : vector<12x12xf32>
    %c43 = arith.constant 43 : index
    %389 = memref.load %arg4[%c43] : memref<128xf32, #tpu.memory_space<smem>>
    %390 = vector.extract_strided_slice %113 {offsets = [1, 1], sizes = [12, 12], strides = [1, 1]} : vector<13x13xf32> to vector<12x12xf32>
    %391 = vector.broadcast %389 : f32 to vector<12x12xf32>
    %392 = arith.mulf %391, %390 : vector<12x12xf32>
    %393 = arith.addf %388, %392 : vector<12x12xf32>
    %c44 = arith.constant 44 : index
    %394 = memref.load %arg4[%c44] : memref<128xf32, #tpu.memory_space<smem>>
    %395 = vector.extract_strided_slice %149 {offsets = [0, 0], sizes = [12, 12], strides = [1, 1]} : vector<13x13xf32> to vector<12x12xf32>
    %396 = vector.broadcast %394 : f32 to vector<12x12xf32>
    %397 = arith.mulf %396, %395 : vector<12x12xf32>
    %398 = arith.addf %393, %397 : vector<12x12xf32>
    %c45 = arith.constant 45 : index
    %399 = memref.load %arg4[%c45] : memref<128xf32, #tpu.memory_space<smem>>
    %400 = vector.extract_strided_slice %149 {offsets = [0, 1], sizes = [12, 12], strides = [1, 1]} : vector<13x13xf32> to vector<12x12xf32>
    %401 = vector.broadcast %399 : f32 to vector<12x12xf32>
    %402 = arith.mulf %401, %400 : vector<12x12xf32>
    %403 = arith.addf %398, %402 : vector<12x12xf32>
    %c46 = arith.constant 46 : index
    %404 = memref.load %arg4[%c46] : memref<128xf32, #tpu.memory_space<smem>>
    %405 = vector.extract_strided_slice %149 {offsets = [1, 0], sizes = [12, 12], strides = [1, 1]} : vector<13x13xf32> to vector<12x12xf32>
    %406 = vector.broadcast %404 : f32 to vector<12x12xf32>
    %407 = arith.mulf %406, %405 : vector<12x12xf32>
    %408 = arith.addf %403, %407 : vector<12x12xf32>
    %c47 = arith.constant 47 : index
    %409 = memref.load %arg4[%c47] : memref<128xf32, #tpu.memory_space<smem>>
    %410 = vector.extract_strided_slice %149 {offsets = [1, 1], sizes = [12, 12], strides = [1, 1]} : vector<13x13xf32> to vector<12x12xf32>
    %411 = vector.broadcast %409 : f32 to vector<12x12xf32>
    %412 = arith.mulf %411, %410 : vector<12x12xf32>
    %413 = arith.addf %408, %412 : vector<12x12xf32>
    %cst_69 = arith.constant 0.000000e+00 : f32
    %414 = vector.broadcast %cst_69 : f32 to vector<12x12xf32>
    %415 = arith.cmpf ogt, %413, %414 : vector<12x12xf32>
    %416 = math.exp %413 : vector<12x12xf32>
    %cst_70 = arith.constant 1.000000e+00 : f32
    %417 = vector.broadcast %cst_70 : f32 to vector<12x12xf32>
    %418 = arith.subf %416, %417 : vector<12x12xf32>
    %419 = arith.select %415, %413, %418 : vector<12x12xi1>, vector<12x12xf32>
    %cst_71 = arith.constant 0.000000e+00 : f32
    %420 = vector.broadcast %cst_71 : f32 to vector<12x12xf32>
    %c3_72 = arith.constant 3 : index
    %421 = memref.load %arg5[%c3_72] : memref<8xf32, #tpu.memory_space<smem>>
    %422 = vector.broadcast %421 : f32 to vector<12x12xf32>
    %423 = arith.addf %420, %422 : vector<12x12xf32>
    %c48 = arith.constant 48 : index
    %424 = memref.load %arg4[%c48] : memref<128xf32, #tpu.memory_space<smem>>
    %425 = vector.extract_strided_slice %41 {offsets = [0, 0], sizes = [12, 12], strides = [1, 1]} : vector<13x13xf32> to vector<12x12xf32>
    %426 = vector.broadcast %424 : f32 to vector<12x12xf32>
    %427 = arith.mulf %426, %425 : vector<12x12xf32>
    %428 = arith.addf %423, %427 : vector<12x12xf32>
    %c49 = arith.constant 49 : index
    %429 = memref.load %arg4[%c49] : memref<128xf32, #tpu.memory_space<smem>>
    %430 = vector.extract_strided_slice %41 {offsets = [0, 1], sizes = [12, 12], strides = [1, 1]} : vector<13x13xf32> to vector<12x12xf32>
    %431 = vector.broadcast %429 : f32 to vector<12x12xf32>
    %432 = arith.mulf %431, %430 : vector<12x12xf32>
    %433 = arith.addf %428, %432 : vector<12x12xf32>
    %c50 = arith.constant 50 : index
    %434 = memref.load %arg4[%c50] : memref<128xf32, #tpu.memory_space<smem>>
    %435 = vector.extract_strided_slice %41 {offsets = [1, 0], sizes = [12, 12], strides = [1, 1]} : vector<13x13xf32> to vector<12x12xf32>
    %436 = vector.broadcast %434 : f32 to vector<12x12xf32>
    %437 = arith.mulf %436, %435 : vector<12x12xf32>
    %438 = arith.addf %433, %437 : vector<12x12xf32>
    %c51 = arith.constant 51 : index
    %439 = memref.load %arg4[%c51] : memref<128xf32, #tpu.memory_space<smem>>
    %440 = vector.extract_strided_slice %41 {offsets = [1, 1], sizes = [12, 12], strides = [1, 1]} : vector<13x13xf32> to vector<12x12xf32>
    %441 = vector.broadcast %439 : f32 to vector<12x12xf32>
    %442 = arith.mulf %441, %440 : vector<12x12xf32>
    %443 = arith.addf %438, %442 : vector<12x12xf32>
    %c52 = arith.constant 52 : index
    %444 = memref.load %arg4[%c52] : memref<128xf32, #tpu.memory_space<smem>>
    %445 = vector.extract_strided_slice %77 {offsets = [0, 0], sizes = [12, 12], strides = [1, 1]} : vector<13x13xf32> to vector<12x12xf32>
    %446 = vector.broadcast %444 : f32 to vector<12x12xf32>
    %447 = arith.mulf %446, %445 : vector<12x12xf32>
    %448 = arith.addf %443, %447 : vector<12x12xf32>
    %c53 = arith.constant 53 : index
    %449 = memref.load %arg4[%c53] : memref<128xf32, #tpu.memory_space<smem>>
    %450 = vector.extract_strided_slice %77 {offsets = [0, 1], sizes = [12, 12], strides = [1, 1]} : vector<13x13xf32> to vector<12x12xf32>
    %451 = vector.broadcast %449 : f32 to vector<12x12xf32>
    %452 = arith.mulf %451, %450 : vector<12x12xf32>
    %453 = arith.addf %448, %452 : vector<12x12xf32>
    %c54 = arith.constant 54 : index
    %454 = memref.load %arg4[%c54] : memref<128xf32, #tpu.memory_space<smem>>
    %455 = vector.extract_strided_slice %77 {offsets = [1, 0], sizes = [12, 12], strides = [1, 1]} : vector<13x13xf32> to vector<12x12xf32>
    %456 = vector.broadcast %454 : f32 to vector<12x12xf32>
    %457 = arith.mulf %456, %455 : vector<12x12xf32>
    %458 = arith.addf %453, %457 : vector<12x12xf32>
    %c55 = arith.constant 55 : index
    %459 = memref.load %arg4[%c55] : memref<128xf32, #tpu.memory_space<smem>>
    %460 = vector.extract_strided_slice %77 {offsets = [1, 1], sizes = [12, 12], strides = [1, 1]} : vector<13x13xf32> to vector<12x12xf32>
    %461 = vector.broadcast %459 : f32 to vector<12x12xf32>
    %462 = arith.mulf %461, %460 : vector<12x12xf32>
    %463 = arith.addf %458, %462 : vector<12x12xf32>
    %c56 = arith.constant 56 : index
    %464 = memref.load %arg4[%c56] : memref<128xf32, #tpu.memory_space<smem>>
    %465 = vector.extract_strided_slice %113 {offsets = [0, 0], sizes = [12, 12], strides = [1, 1]} : vector<13x13xf32> to vector<12x12xf32>
    %466 = vector.broadcast %464 : f32 to vector<12x12xf32>
    %467 = arith.mulf %466, %465 : vector<12x12xf32>
    %468 = arith.addf %463, %467 : vector<12x12xf32>
    %c57 = arith.constant 57 : index
    %469 = memref.load %arg4[%c57] : memref<128xf32, #tpu.memory_space<smem>>
    %470 = vector.extract_strided_slice %113 {offsets = [0, 1], sizes = [12, 12], strides = [1, 1]} : vector<13x13xf32> to vector<12x12xf32>
    %471 = vector.broadcast %469 : f32 to vector<12x12xf32>
    %472 = arith.mulf %471, %470 : vector<12x12xf32>
    %473 = arith.addf %468, %472 : vector<12x12xf32>
    %c58 = arith.constant 58 : index
    %474 = memref.load %arg4[%c58] : memref<128xf32, #tpu.memory_space<smem>>
    %475 = vector.extract_strided_slice %113 {offsets = [1, 0], sizes = [12, 12], strides = [1, 1]} : vector<13x13xf32> to vector<12x12xf32>
    %476 = vector.broadcast %474 : f32 to vector<12x12xf32>
    %477 = arith.mulf %476, %475 : vector<12x12xf32>
    %478 = arith.addf %473, %477 : vector<12x12xf32>
    %c59 = arith.constant 59 : index
    %479 = memref.load %arg4[%c59] : memref<128xf32, #tpu.memory_space<smem>>
    %480 = vector.extract_strided_slice %113 {offsets = [1, 1], sizes = [12, 12], strides = [1, 1]} : vector<13x13xf32> to vector<12x12xf32>
    %481 = vector.broadcast %479 : f32 to vector<12x12xf32>
    %482 = arith.mulf %481, %480 : vector<12x12xf32>
    %483 = arith.addf %478, %482 : vector<12x12xf32>
    %c60 = arith.constant 60 : index
    %484 = memref.load %arg4[%c60] : memref<128xf32, #tpu.memory_space<smem>>
    %485 = vector.extract_strided_slice %149 {offsets = [0, 0], sizes = [12, 12], strides = [1, 1]} : vector<13x13xf32> to vector<12x12xf32>
    %486 = vector.broadcast %484 : f32 to vector<12x12xf32>
    %487 = arith.mulf %486, %485 : vector<12x12xf32>
    %488 = arith.addf %483, %487 : vector<12x12xf32>
    %c61 = arith.constant 61 : index
    %489 = memref.load %arg4[%c61] : memref<128xf32, #tpu.memory_space<smem>>
    %490 = vector.extract_strided_slice %149 {offsets = [0, 1], sizes = [12, 12], strides = [1, 1]} : vector<13x13xf32> to vector<12x12xf32>
    %491 = vector.broadcast %489 : f32 to vector<12x12xf32>
    %492 = arith.mulf %491, %490 : vector<12x12xf32>
    %493 = arith.addf %488, %492 : vector<12x12xf32>
    %c62 = arith.constant 62 : index
    %494 = memref.load %arg4[%c62] : memref<128xf32, #tpu.memory_space<smem>>
    %495 = vector.extract_strided_slice %149 {offsets = [1, 0], sizes = [12, 12], strides = [1, 1]} : vector<13x13xf32> to vector<12x12xf32>
    %496 = vector.broadcast %494 : f32 to vector<12x12xf32>
    %497 = arith.mulf %496, %495 : vector<12x12xf32>
    %498 = arith.addf %493, %497 : vector<12x12xf32>
    %c63 = arith.constant 63 : index
    %499 = memref.load %arg4[%c63] : memref<128xf32, #tpu.memory_space<smem>>
    %500 = vector.extract_strided_slice %149 {offsets = [1, 1], sizes = [12, 12], strides = [1, 1]} : vector<13x13xf32> to vector<12x12xf32>
    %501 = vector.broadcast %499 : f32 to vector<12x12xf32>
    %502 = arith.mulf %501, %500 : vector<12x12xf32>
    %503 = arith.addf %498, %502 : vector<12x12xf32>
    %cst_73 = arith.constant 0.000000e+00 : f32
    %504 = vector.broadcast %cst_73 : f32 to vector<12x12xf32>
    %505 = arith.cmpf ogt, %503, %504 : vector<12x12xf32>
    %506 = math.exp %503 : vector<12x12xf32>
    %cst_74 = arith.constant 1.000000e+00 : f32
    %507 = vector.broadcast %cst_74 : f32 to vector<12x12xf32>
    %508 = arith.subf %506, %507 : vector<12x12xf32>
    %509 = arith.select %505, %503, %508 : vector<12x12xi1>, vector<12x12xf32>
    %cst_75 = arith.constant 0.000000e+00 : f32
    %510 = vector.broadcast %cst_75 : f32 to vector<12x12xf32>
    %c4_76 = arith.constant 4 : index
    %511 = memref.load %arg5[%c4_76] : memref<8xf32, #tpu.memory_space<smem>>
    %512 = vector.broadcast %511 : f32 to vector<12x12xf32>
    %513 = arith.addf %510, %512 : vector<12x12xf32>
    %c64 = arith.constant 64 : index
    %514 = memref.load %arg4[%c64] : memref<128xf32, #tpu.memory_space<smem>>
    %515 = vector.extract_strided_slice %41 {offsets = [0, 0], sizes = [12, 12], strides = [1, 1]} : vector<13x13xf32> to vector<12x12xf32>
    %516 = vector.broadcast %514 : f32 to vector<12x12xf32>
    %517 = arith.mulf %516, %515 : vector<12x12xf32>
    %518 = arith.addf %513, %517 : vector<12x12xf32>
    %c65 = arith.constant 65 : index
    %519 = memref.load %arg4[%c65] : memref<128xf32, #tpu.memory_space<smem>>
    %520 = vector.extract_strided_slice %41 {offsets = [0, 1], sizes = [12, 12], strides = [1, 1]} : vector<13x13xf32> to vector<12x12xf32>
    %521 = vector.broadcast %519 : f32 to vector<12x12xf32>
    %522 = arith.mulf %521, %520 : vector<12x12xf32>
    %523 = arith.addf %518, %522 : vector<12x12xf32>
    %c66 = arith.constant 66 : index
    %524 = memref.load %arg4[%c66] : memref<128xf32, #tpu.memory_space<smem>>
    %525 = vector.extract_strided_slice %41 {offsets = [1, 0], sizes = [12, 12], strides = [1, 1]} : vector<13x13xf32> to vector<12x12xf32>
    %526 = vector.broadcast %524 : f32 to vector<12x12xf32>
    %527 = arith.mulf %526, %525 : vector<12x12xf32>
    %528 = arith.addf %523, %527 : vector<12x12xf32>
    %c67 = arith.constant 67 : index
    %529 = memref.load %arg4[%c67] : memref<128xf32, #tpu.memory_space<smem>>
    %530 = vector.extract_strided_slice %41 {offsets = [1, 1], sizes = [12, 12], strides = [1, 1]} : vector<13x13xf32> to vector<12x12xf32>
    %531 = vector.broadcast %529 : f32 to vector<12x12xf32>
    %532 = arith.mulf %531, %530 : vector<12x12xf32>
    %533 = arith.addf %528, %532 : vector<12x12xf32>
    %c68 = arith.constant 68 : index
    %534 = memref.load %arg4[%c68] : memref<128xf32, #tpu.memory_space<smem>>
    %535 = vector.extract_strided_slice %77 {offsets = [0, 0], sizes = [12, 12], strides = [1, 1]} : vector<13x13xf32> to vector<12x12xf32>
    %536 = vector.broadcast %534 : f32 to vector<12x12xf32>
    %537 = arith.mulf %536, %535 : vector<12x12xf32>
    %538 = arith.addf %533, %537 : vector<12x12xf32>
    %c69 = arith.constant 69 : index
    %539 = memref.load %arg4[%c69] : memref<128xf32, #tpu.memory_space<smem>>
    %540 = vector.extract_strided_slice %77 {offsets = [0, 1], sizes = [12, 12], strides = [1, 1]} : vector<13x13xf32> to vector<12x12xf32>
    %541 = vector.broadcast %539 : f32 to vector<12x12xf32>
    %542 = arith.mulf %541, %540 : vector<12x12xf32>
    %543 = arith.addf %538, %542 : vector<12x12xf32>
    %c70 = arith.constant 70 : index
    %544 = memref.load %arg4[%c70] : memref<128xf32, #tpu.memory_space<smem>>
    %545 = vector.extract_strided_slice %77 {offsets = [1, 0], sizes = [12, 12], strides = [1, 1]} : vector<13x13xf32> to vector<12x12xf32>
    %546 = vector.broadcast %544 : f32 to vector<12x12xf32>
    %547 = arith.mulf %546, %545 : vector<12x12xf32>
    %548 = arith.addf %543, %547 : vector<12x12xf32>
    %c71 = arith.constant 71 : index
    %549 = memref.load %arg4[%c71] : memref<128xf32, #tpu.memory_space<smem>>
    %550 = vector.extract_strided_slice %77 {offsets = [1, 1], sizes = [12, 12], strides = [1, 1]} : vector<13x13xf32> to vector<12x12xf32>
    %551 = vector.broadcast %549 : f32 to vector<12x12xf32>
    %552 = arith.mulf %551, %550 : vector<12x12xf32>
    %553 = arith.addf %548, %552 : vector<12x12xf32>
    %c72 = arith.constant 72 : index
    %554 = memref.load %arg4[%c72] : memref<128xf32, #tpu.memory_space<smem>>
    %555 = vector.extract_strided_slice %113 {offsets = [0, 0], sizes = [12, 12], strides = [1, 1]} : vector<13x13xf32> to vector<12x12xf32>
    %556 = vector.broadcast %554 : f32 to vector<12x12xf32>
    %557 = arith.mulf %556, %555 : vector<12x12xf32>
    %558 = arith.addf %553, %557 : vector<12x12xf32>
    %c73 = arith.constant 73 : index
    %559 = memref.load %arg4[%c73] : memref<128xf32, #tpu.memory_space<smem>>
    %560 = vector.extract_strided_slice %113 {offsets = [0, 1], sizes = [12, 12], strides = [1, 1]} : vector<13x13xf32> to vector<12x12xf32>
    %561 = vector.broadcast %559 : f32 to vector<12x12xf32>
    %562 = arith.mulf %561, %560 : vector<12x12xf32>
    %563 = arith.addf %558, %562 : vector<12x12xf32>
    %c74 = arith.constant 74 : index
    %564 = memref.load %arg4[%c74] : memref<128xf32, #tpu.memory_space<smem>>
    %565 = vector.extract_strided_slice %113 {offsets = [1, 0], sizes = [12, 12], strides = [1, 1]} : vector<13x13xf32> to vector<12x12xf32>
    %566 = vector.broadcast %564 : f32 to vector<12x12xf32>
    %567 = arith.mulf %566, %565 : vector<12x12xf32>
    %568 = arith.addf %563, %567 : vector<12x12xf32>
    %c75 = arith.constant 75 : index
    %569 = memref.load %arg4[%c75] : memref<128xf32, #tpu.memory_space<smem>>
    %570 = vector.extract_strided_slice %113 {offsets = [1, 1], sizes = [12, 12], strides = [1, 1]} : vector<13x13xf32> to vector<12x12xf32>
    %571 = vector.broadcast %569 : f32 to vector<12x12xf32>
    %572 = arith.mulf %571, %570 : vector<12x12xf32>
    %573 = arith.addf %568, %572 : vector<12x12xf32>
    %c76 = arith.constant 76 : index
    %574 = memref.load %arg4[%c76] : memref<128xf32, #tpu.memory_space<smem>>
    %575 = vector.extract_strided_slice %149 {offsets = [0, 0], sizes = [12, 12], strides = [1, 1]} : vector<13x13xf32> to vector<12x12xf32>
    %576 = vector.broadcast %574 : f32 to vector<12x12xf32>
    %577 = arith.mulf %576, %575 : vector<12x12xf32>
    %578 = arith.addf %573, %577 : vector<12x12xf32>
    %c77 = arith.constant 77 : index
    %579 = memref.load %arg4[%c77] : memref<128xf32, #tpu.memory_space<smem>>
    %580 = vector.extract_strided_slice %149 {offsets = [0, 1], sizes = [12, 12], strides = [1, 1]} : vector<13x13xf32> to vector<12x12xf32>
    %581 = vector.broadcast %579 : f32 to vector<12x12xf32>
    %582 = arith.mulf %581, %580 : vector<12x12xf32>
    %583 = arith.addf %578, %582 : vector<12x12xf32>
    %c78 = arith.constant 78 : index
    %584 = memref.load %arg4[%c78] : memref<128xf32, #tpu.memory_space<smem>>
    %585 = vector.extract_strided_slice %149 {offsets = [1, 0], sizes = [12, 12], strides = [1, 1]} : vector<13x13xf32> to vector<12x12xf32>
    %586 = vector.broadcast %584 : f32 to vector<12x12xf32>
    %587 = arith.mulf %586, %585 : vector<12x12xf32>
    %588 = arith.addf %583, %587 : vector<12x12xf32>
    %c79 = arith.constant 79 : index
    %589 = memref.load %arg4[%c79] : memref<128xf32, #tpu.memory_space<smem>>
    %590 = vector.extract_strided_slice %149 {offsets = [1, 1], sizes = [12, 12], strides = [1, 1]} : vector<13x13xf32> to vector<12x12xf32>
    %591 = vector.broadcast %589 : f32 to vector<12x12xf32>
    %592 = arith.mulf %591, %590 : vector<12x12xf32>
    %593 = arith.addf %588, %592 : vector<12x12xf32>
    %cst_77 = arith.constant 0.000000e+00 : f32
    %594 = vector.broadcast %cst_77 : f32 to vector<12x12xf32>
    %595 = arith.cmpf ogt, %593, %594 : vector<12x12xf32>
    %596 = math.exp %593 : vector<12x12xf32>
    %cst_78 = arith.constant 1.000000e+00 : f32
    %597 = vector.broadcast %cst_78 : f32 to vector<12x12xf32>
    %598 = arith.subf %596, %597 : vector<12x12xf32>
    %599 = arith.select %595, %593, %598 : vector<12x12xi1>, vector<12x12xf32>
    %cst_79 = arith.constant 0.000000e+00 : f32
    %600 = vector.broadcast %cst_79 : f32 to vector<12x12xf32>
    %c5_80 = arith.constant 5 : index
    %601 = memref.load %arg5[%c5_80] : memref<8xf32, #tpu.memory_space<smem>>
    %602 = vector.broadcast %601 : f32 to vector<12x12xf32>
    %603 = arith.addf %600, %602 : vector<12x12xf32>
    %c80 = arith.constant 80 : index
    %604 = memref.load %arg4[%c80] : memref<128xf32, #tpu.memory_space<smem>>
    %605 = vector.extract_strided_slice %41 {offsets = [0, 0], sizes = [12, 12], strides = [1, 1]} : vector<13x13xf32> to vector<12x12xf32>
    %606 = vector.broadcast %604 : f32 to vector<12x12xf32>
    %607 = arith.mulf %606, %605 : vector<12x12xf32>
    %608 = arith.addf %603, %607 : vector<12x12xf32>
    %c81 = arith.constant 81 : index
    %609 = memref.load %arg4[%c81] : memref<128xf32, #tpu.memory_space<smem>>
    %610 = vector.extract_strided_slice %41 {offsets = [0, 1], sizes = [12, 12], strides = [1, 1]} : vector<13x13xf32> to vector<12x12xf32>
    %611 = vector.broadcast %609 : f32 to vector<12x12xf32>
    %612 = arith.mulf %611, %610 : vector<12x12xf32>
    %613 = arith.addf %608, %612 : vector<12x12xf32>
    %c82 = arith.constant 82 : index
    %614 = memref.load %arg4[%c82] : memref<128xf32, #tpu.memory_space<smem>>
    %615 = vector.extract_strided_slice %41 {offsets = [1, 0], sizes = [12, 12], strides = [1, 1]} : vector<13x13xf32> to vector<12x12xf32>
    %616 = vector.broadcast %614 : f32 to vector<12x12xf32>
    %617 = arith.mulf %616, %615 : vector<12x12xf32>
    %618 = arith.addf %613, %617 : vector<12x12xf32>
    %c83 = arith.constant 83 : index
    %619 = memref.load %arg4[%c83] : memref<128xf32, #tpu.memory_space<smem>>
    %620 = vector.extract_strided_slice %41 {offsets = [1, 1], sizes = [12, 12], strides = [1, 1]} : vector<13x13xf32> to vector<12x12xf32>
    %621 = vector.broadcast %619 : f32 to vector<12x12xf32>
    %622 = arith.mulf %621, %620 : vector<12x12xf32>
    %623 = arith.addf %618, %622 : vector<12x12xf32>
    %c84 = arith.constant 84 : index
    %624 = memref.load %arg4[%c84] : memref<128xf32, #tpu.memory_space<smem>>
    %625 = vector.extract_strided_slice %77 {offsets = [0, 0], sizes = [12, 12], strides = [1, 1]} : vector<13x13xf32> to vector<12x12xf32>
    %626 = vector.broadcast %624 : f32 to vector<12x12xf32>
    %627 = arith.mulf %626, %625 : vector<12x12xf32>
    %628 = arith.addf %623, %627 : vector<12x12xf32>
    %c85 = arith.constant 85 : index
    %629 = memref.load %arg4[%c85] : memref<128xf32, #tpu.memory_space<smem>>
    %630 = vector.extract_strided_slice %77 {offsets = [0, 1], sizes = [12, 12], strides = [1, 1]} : vector<13x13xf32> to vector<12x12xf32>
    %631 = vector.broadcast %629 : f32 to vector<12x12xf32>
    %632 = arith.mulf %631, %630 : vector<12x12xf32>
    %633 = arith.addf %628, %632 : vector<12x12xf32>
    %c86 = arith.constant 86 : index
    %634 = memref.load %arg4[%c86] : memref<128xf32, #tpu.memory_space<smem>>
    %635 = vector.extract_strided_slice %77 {offsets = [1, 0], sizes = [12, 12], strides = [1, 1]} : vector<13x13xf32> to vector<12x12xf32>
    %636 = vector.broadcast %634 : f32 to vector<12x12xf32>
    %637 = arith.mulf %636, %635 : vector<12x12xf32>
    %638 = arith.addf %633, %637 : vector<12x12xf32>
    %c87 = arith.constant 87 : index
    %639 = memref.load %arg4[%c87] : memref<128xf32, #tpu.memory_space<smem>>
    %640 = vector.extract_strided_slice %77 {offsets = [1, 1], sizes = [12, 12], strides = [1, 1]} : vector<13x13xf32> to vector<12x12xf32>
    %641 = vector.broadcast %639 : f32 to vector<12x12xf32>
    %642 = arith.mulf %641, %640 : vector<12x12xf32>
    %643 = arith.addf %638, %642 : vector<12x12xf32>
    %c88 = arith.constant 88 : index
    %644 = memref.load %arg4[%c88] : memref<128xf32, #tpu.memory_space<smem>>
    %645 = vector.extract_strided_slice %113 {offsets = [0, 0], sizes = [12, 12], strides = [1, 1]} : vector<13x13xf32> to vector<12x12xf32>
    %646 = vector.broadcast %644 : f32 to vector<12x12xf32>
    %647 = arith.mulf %646, %645 : vector<12x12xf32>
    %648 = arith.addf %643, %647 : vector<12x12xf32>
    %c89 = arith.constant 89 : index
    %649 = memref.load %arg4[%c89] : memref<128xf32, #tpu.memory_space<smem>>
    %650 = vector.extract_strided_slice %113 {offsets = [0, 1], sizes = [12, 12], strides = [1, 1]} : vector<13x13xf32> to vector<12x12xf32>
    %651 = vector.broadcast %649 : f32 to vector<12x12xf32>
    %652 = arith.mulf %651, %650 : vector<12x12xf32>
    %653 = arith.addf %648, %652 : vector<12x12xf32>
    %c90 = arith.constant 90 : index
    %654 = memref.load %arg4[%c90] : memref<128xf32, #tpu.memory_space<smem>>
    %655 = vector.extract_strided_slice %113 {offsets = [1, 0], sizes = [12, 12], strides = [1, 1]} : vector<13x13xf32> to vector<12x12xf32>
    %656 = vector.broadcast %654 : f32 to vector<12x12xf32>
    %657 = arith.mulf %656, %655 : vector<12x12xf32>
    %658 = arith.addf %653, %657 : vector<12x12xf32>
    %c91 = arith.constant 91 : index
    %659 = memref.load %arg4[%c91] : memref<128xf32, #tpu.memory_space<smem>>
    %660 = vector.extract_strided_slice %113 {offsets = [1, 1], sizes = [12, 12], strides = [1, 1]} : vector<13x13xf32> to vector<12x12xf32>
    %661 = vector.broadcast %659 : f32 to vector<12x12xf32>
    %662 = arith.mulf %661, %660 : vector<12x12xf32>
    %663 = arith.addf %658, %662 : vector<12x12xf32>
    %c92 = arith.constant 92 : index
    %664 = memref.load %arg4[%c92] : memref<128xf32, #tpu.memory_space<smem>>
    %665 = vector.extract_strided_slice %149 {offsets = [0, 0], sizes = [12, 12], strides = [1, 1]} : vector<13x13xf32> to vector<12x12xf32>
    %666 = vector.broadcast %664 : f32 to vector<12x12xf32>
    %667 = arith.mulf %666, %665 : vector<12x12xf32>
    %668 = arith.addf %663, %667 : vector<12x12xf32>
    %c93 = arith.constant 93 : index
    %669 = memref.load %arg4[%c93] : memref<128xf32, #tpu.memory_space<smem>>
    %670 = vector.extract_strided_slice %149 {offsets = [0, 1], sizes = [12, 12], strides = [1, 1]} : vector<13x13xf32> to vector<12x12xf32>
    %671 = vector.broadcast %669 : f32 to vector<12x12xf32>
    %672 = arith.mulf %671, %670 : vector<12x12xf32>
    %673 = arith.addf %668, %672 : vector<12x12xf32>
    %c94 = arith.constant 94 : index
    %674 = memref.load %arg4[%c94] : memref<128xf32, #tpu.memory_space<smem>>
    %675 = vector.extract_strided_slice %149 {offsets = [1, 0], sizes = [12, 12], strides = [1, 1]} : vector<13x13xf32> to vector<12x12xf32>
    %676 = vector.broadcast %674 : f32 to vector<12x12xf32>
    %677 = arith.mulf %676, %675 : vector<12x12xf32>
    %678 = arith.addf %673, %677 : vector<12x12xf32>
    %c95 = arith.constant 95 : index
    %679 = memref.load %arg4[%c95] : memref<128xf32, #tpu.memory_space<smem>>
    %680 = vector.extract_strided_slice %149 {offsets = [1, 1], sizes = [12, 12], strides = [1, 1]} : vector<13x13xf32> to vector<12x12xf32>
    %681 = vector.broadcast %679 : f32 to vector<12x12xf32>
    %682 = arith.mulf %681, %680 : vector<12x12xf32>
    %683 = arith.addf %678, %682 : vector<12x12xf32>
    %cst_81 = arith.constant 0.000000e+00 : f32
    %684 = vector.broadcast %cst_81 : f32 to vector<12x12xf32>
    %685 = arith.cmpf ogt, %683, %684 : vector<12x12xf32>
    %686 = math.exp %683 : vector<12x12xf32>
    %cst_82 = arith.constant 1.000000e+00 : f32
    %687 = vector.broadcast %cst_82 : f32 to vector<12x12xf32>
    %688 = arith.subf %686, %687 : vector<12x12xf32>
    %689 = arith.select %685, %683, %688 : vector<12x12xi1>, vector<12x12xf32>
    %cst_83 = arith.constant 0.000000e+00 : f32
    %690 = vector.broadcast %cst_83 : f32 to vector<12x12xf32>
    %c6_84 = arith.constant 6 : index
    %691 = memref.load %arg5[%c6_84] : memref<8xf32, #tpu.memory_space<smem>>
    %692 = vector.broadcast %691 : f32 to vector<12x12xf32>
    %693 = arith.addf %690, %692 : vector<12x12xf32>
    %c96 = arith.constant 96 : index
    %694 = memref.load %arg4[%c96] : memref<128xf32, #tpu.memory_space<smem>>
    %695 = vector.extract_strided_slice %41 {offsets = [0, 0], sizes = [12, 12], strides = [1, 1]} : vector<13x13xf32> to vector<12x12xf32>
    %696 = vector.broadcast %694 : f32 to vector<12x12xf32>
    %697 = arith.mulf %696, %695 : vector<12x12xf32>
    %698 = arith.addf %693, %697 : vector<12x12xf32>
    %c97 = arith.constant 97 : index
    %699 = memref.load %arg4[%c97] : memref<128xf32, #tpu.memory_space<smem>>
    %700 = vector.extract_strided_slice %41 {offsets = [0, 1], sizes = [12, 12], strides = [1, 1]} : vector<13x13xf32> to vector<12x12xf32>
    %701 = vector.broadcast %699 : f32 to vector<12x12xf32>
    %702 = arith.mulf %701, %700 : vector<12x12xf32>
    %703 = arith.addf %698, %702 : vector<12x12xf32>
    %c98 = arith.constant 98 : index
    %704 = memref.load %arg4[%c98] : memref<128xf32, #tpu.memory_space<smem>>
    %705 = vector.extract_strided_slice %41 {offsets = [1, 0], sizes = [12, 12], strides = [1, 1]} : vector<13x13xf32> to vector<12x12xf32>
    %706 = vector.broadcast %704 : f32 to vector<12x12xf32>
    %707 = arith.mulf %706, %705 : vector<12x12xf32>
    %708 = arith.addf %703, %707 : vector<12x12xf32>
    %c99 = arith.constant 99 : index
    %709 = memref.load %arg4[%c99] : memref<128xf32, #tpu.memory_space<smem>>
    %710 = vector.extract_strided_slice %41 {offsets = [1, 1], sizes = [12, 12], strides = [1, 1]} : vector<13x13xf32> to vector<12x12xf32>
    %711 = vector.broadcast %709 : f32 to vector<12x12xf32>
    %712 = arith.mulf %711, %710 : vector<12x12xf32>
    %713 = arith.addf %708, %712 : vector<12x12xf32>
    %c100 = arith.constant 100 : index
    %714 = memref.load %arg4[%c100] : memref<128xf32, #tpu.memory_space<smem>>
    %715 = vector.extract_strided_slice %77 {offsets = [0, 0], sizes = [12, 12], strides = [1, 1]} : vector<13x13xf32> to vector<12x12xf32>
    %716 = vector.broadcast %714 : f32 to vector<12x12xf32>
    %717 = arith.mulf %716, %715 : vector<12x12xf32>
    %718 = arith.addf %713, %717 : vector<12x12xf32>
    %c101 = arith.constant 101 : index
    %719 = memref.load %arg4[%c101] : memref<128xf32, #tpu.memory_space<smem>>
    %720 = vector.extract_strided_slice %77 {offsets = [0, 1], sizes = [12, 12], strides = [1, 1]} : vector<13x13xf32> to vector<12x12xf32>
    %721 = vector.broadcast %719 : f32 to vector<12x12xf32>
    %722 = arith.mulf %721, %720 : vector<12x12xf32>
    %723 = arith.addf %718, %722 : vector<12x12xf32>
    %c102 = arith.constant 102 : index
    %724 = memref.load %arg4[%c102] : memref<128xf32, #tpu.memory_space<smem>>
    %725 = vector.extract_strided_slice %77 {offsets = [1, 0], sizes = [12, 12], strides = [1, 1]} : vector<13x13xf32> to vector<12x12xf32>
    %726 = vector.broadcast %724 : f32 to vector<12x12xf32>
    %727 = arith.mulf %726, %725 : vector<12x12xf32>
    %728 = arith.addf %723, %727 : vector<12x12xf32>
    %c103 = arith.constant 103 : index
    %729 = memref.load %arg4[%c103] : memref<128xf32, #tpu.memory_space<smem>>
    %730 = vector.extract_strided_slice %77 {offsets = [1, 1], sizes = [12, 12], strides = [1, 1]} : vector<13x13xf32> to vector<12x12xf32>
    %731 = vector.broadcast %729 : f32 to vector<12x12xf32>
    %732 = arith.mulf %731, %730 : vector<12x12xf32>
    %733 = arith.addf %728, %732 : vector<12x12xf32>
    %c104 = arith.constant 104 : index
    %734 = memref.load %arg4[%c104] : memref<128xf32, #tpu.memory_space<smem>>
    %735 = vector.extract_strided_slice %113 {offsets = [0, 0], sizes = [12, 12], strides = [1, 1]} : vector<13x13xf32> to vector<12x12xf32>
    %736 = vector.broadcast %734 : f32 to vector<12x12xf32>
    %737 = arith.mulf %736, %735 : vector<12x12xf32>
    %738 = arith.addf %733, %737 : vector<12x12xf32>
    %c105 = arith.constant 105 : index
    %739 = memref.load %arg4[%c105] : memref<128xf32, #tpu.memory_space<smem>>
    %740 = vector.extract_strided_slice %113 {offsets = [0, 1], sizes = [12, 12], strides = [1, 1]} : vector<13x13xf32> to vector<12x12xf32>
    %741 = vector.broadcast %739 : f32 to vector<12x12xf32>
    %742 = arith.mulf %741, %740 : vector<12x12xf32>
    %743 = arith.addf %738, %742 : vector<12x12xf32>
    %c106 = arith.constant 106 : index
    %744 = memref.load %arg4[%c106] : memref<128xf32, #tpu.memory_space<smem>>
    %745 = vector.extract_strided_slice %113 {offsets = [1, 0], sizes = [12, 12], strides = [1, 1]} : vector<13x13xf32> to vector<12x12xf32>
    %746 = vector.broadcast %744 : f32 to vector<12x12xf32>
    %747 = arith.mulf %746, %745 : vector<12x12xf32>
    %748 = arith.addf %743, %747 : vector<12x12xf32>
    %c107 = arith.constant 107 : index
    %749 = memref.load %arg4[%c107] : memref<128xf32, #tpu.memory_space<smem>>
    %750 = vector.extract_strided_slice %113 {offsets = [1, 1], sizes = [12, 12], strides = [1, 1]} : vector<13x13xf32> to vector<12x12xf32>
    %751 = vector.broadcast %749 : f32 to vector<12x12xf32>
    %752 = arith.mulf %751, %750 : vector<12x12xf32>
    %753 = arith.addf %748, %752 : vector<12x12xf32>
    %c108 = arith.constant 108 : index
    %754 = memref.load %arg4[%c108] : memref<128xf32, #tpu.memory_space<smem>>
    %755 = vector.extract_strided_slice %149 {offsets = [0, 0], sizes = [12, 12], strides = [1, 1]} : vector<13x13xf32> to vector<12x12xf32>
    %756 = vector.broadcast %754 : f32 to vector<12x12xf32>
    %757 = arith.mulf %756, %755 : vector<12x12xf32>
    %758 = arith.addf %753, %757 : vector<12x12xf32>
    %c109 = arith.constant 109 : index
    %759 = memref.load %arg4[%c109] : memref<128xf32, #tpu.memory_space<smem>>
    %760 = vector.extract_strided_slice %149 {offsets = [0, 1], sizes = [12, 12], strides = [1, 1]} : vector<13x13xf32> to vector<12x12xf32>
    %761 = vector.broadcast %759 : f32 to vector<12x12xf32>
    %762 = arith.mulf %761, %760 : vector<12x12xf32>
    %763 = arith.addf %758, %762 : vector<12x12xf32>
    %c110 = arith.constant 110 : index
    %764 = memref.load %arg4[%c110] : memref<128xf32, #tpu.memory_space<smem>>
    %765 = vector.extract_strided_slice %149 {offsets = [1, 0], sizes = [12, 12], strides = [1, 1]} : vector<13x13xf32> to vector<12x12xf32>
    %766 = vector.broadcast %764 : f32 to vector<12x12xf32>
    %767 = arith.mulf %766, %765 : vector<12x12xf32>
    %768 = arith.addf %763, %767 : vector<12x12xf32>
    %c111 = arith.constant 111 : index
    %769 = memref.load %arg4[%c111] : memref<128xf32, #tpu.memory_space<smem>>
    %770 = vector.extract_strided_slice %149 {offsets = [1, 1], sizes = [12, 12], strides = [1, 1]} : vector<13x13xf32> to vector<12x12xf32>
    %771 = vector.broadcast %769 : f32 to vector<12x12xf32>
    %772 = arith.mulf %771, %770 : vector<12x12xf32>
    %773 = arith.addf %768, %772 : vector<12x12xf32>
    %cst_85 = arith.constant 0.000000e+00 : f32
    %774 = vector.broadcast %cst_85 : f32 to vector<12x12xf32>
    %775 = arith.cmpf ogt, %773, %774 : vector<12x12xf32>
    %776 = math.exp %773 : vector<12x12xf32>
    %cst_86 = arith.constant 1.000000e+00 : f32
    %777 = vector.broadcast %cst_86 : f32 to vector<12x12xf32>
    %778 = arith.subf %776, %777 : vector<12x12xf32>
    %779 = arith.select %775, %773, %778 : vector<12x12xi1>, vector<12x12xf32>
    %cst_87 = arith.constant 0.000000e+00 : f32
    %780 = vector.broadcast %cst_87 : f32 to vector<12x12xf32>
    %c7_88 = arith.constant 7 : index
    %781 = memref.load %arg5[%c7_88] : memref<8xf32, #tpu.memory_space<smem>>
    %782 = vector.broadcast %781 : f32 to vector<12x12xf32>
    %783 = arith.addf %780, %782 : vector<12x12xf32>
    %c112 = arith.constant 112 : index
    %784 = memref.load %arg4[%c112] : memref<128xf32, #tpu.memory_space<smem>>
    %785 = vector.extract_strided_slice %41 {offsets = [0, 0], sizes = [12, 12], strides = [1, 1]} : vector<13x13xf32> to vector<12x12xf32>
    %786 = vector.broadcast %784 : f32 to vector<12x12xf32>
    %787 = arith.mulf %786, %785 : vector<12x12xf32>
    %788 = arith.addf %783, %787 : vector<12x12xf32>
    %c113 = arith.constant 113 : index
    %789 = memref.load %arg4[%c113] : memref<128xf32, #tpu.memory_space<smem>>
    %790 = vector.extract_strided_slice %41 {offsets = [0, 1], sizes = [12, 12], strides = [1, 1]} : vector<13x13xf32> to vector<12x12xf32>
    %791 = vector.broadcast %789 : f32 to vector<12x12xf32>
    %792 = arith.mulf %791, %790 : vector<12x12xf32>
    %793 = arith.addf %788, %792 : vector<12x12xf32>
    %c114 = arith.constant 114 : index
    %794 = memref.load %arg4[%c114] : memref<128xf32, #tpu.memory_space<smem>>
    %795 = vector.extract_strided_slice %41 {offsets = [1, 0], sizes = [12, 12], strides = [1, 1]} : vector<13x13xf32> to vector<12x12xf32>
    %796 = vector.broadcast %794 : f32 to vector<12x12xf32>
    %797 = arith.mulf %796, %795 : vector<12x12xf32>
    %798 = arith.addf %793, %797 : vector<12x12xf32>
    %c115 = arith.constant 115 : index
    %799 = memref.load %arg4[%c115] : memref<128xf32, #tpu.memory_space<smem>>
    %800 = vector.extract_strided_slice %41 {offsets = [1, 1], sizes = [12, 12], strides = [1, 1]} : vector<13x13xf32> to vector<12x12xf32>
    %801 = vector.broadcast %799 : f32 to vector<12x12xf32>
    %802 = arith.mulf %801, %800 : vector<12x12xf32>
    %803 = arith.addf %798, %802 : vector<12x12xf32>
    %c116 = arith.constant 116 : index
    %804 = memref.load %arg4[%c116] : memref<128xf32, #tpu.memory_space<smem>>
    %805 = vector.extract_strided_slice %77 {offsets = [0, 0], sizes = [12, 12], strides = [1, 1]} : vector<13x13xf32> to vector<12x12xf32>
    %806 = vector.broadcast %804 : f32 to vector<12x12xf32>
    %807 = arith.mulf %806, %805 : vector<12x12xf32>
    %808 = arith.addf %803, %807 : vector<12x12xf32>
    %c117 = arith.constant 117 : index
    %809 = memref.load %arg4[%c117] : memref<128xf32, #tpu.memory_space<smem>>
    %810 = vector.extract_strided_slice %77 {offsets = [0, 1], sizes = [12, 12], strides = [1, 1]} : vector<13x13xf32> to vector<12x12xf32>
    %811 = vector.broadcast %809 : f32 to vector<12x12xf32>
    %812 = arith.mulf %811, %810 : vector<12x12xf32>
    %813 = arith.addf %808, %812 : vector<12x12xf32>
    %c118 = arith.constant 118 : index
    %814 = memref.load %arg4[%c118] : memref<128xf32, #tpu.memory_space<smem>>
    %815 = vector.extract_strided_slice %77 {offsets = [1, 0], sizes = [12, 12], strides = [1, 1]} : vector<13x13xf32> to vector<12x12xf32>
    %816 = vector.broadcast %814 : f32 to vector<12x12xf32>
    %817 = arith.mulf %816, %815 : vector<12x12xf32>
    %818 = arith.addf %813, %817 : vector<12x12xf32>
    %c119 = arith.constant 119 : index
    %819 = memref.load %arg4[%c119] : memref<128xf32, #tpu.memory_space<smem>>
    %820 = vector.extract_strided_slice %77 {offsets = [1, 1], sizes = [12, 12], strides = [1, 1]} : vector<13x13xf32> to vector<12x12xf32>
    %821 = vector.broadcast %819 : f32 to vector<12x12xf32>
    %822 = arith.mulf %821, %820 : vector<12x12xf32>
    %823 = arith.addf %818, %822 : vector<12x12xf32>
    %c120 = arith.constant 120 : index
    %824 = memref.load %arg4[%c120] : memref<128xf32, #tpu.memory_space<smem>>
    %825 = vector.extract_strided_slice %113 {offsets = [0, 0], sizes = [12, 12], strides = [1, 1]} : vector<13x13xf32> to vector<12x12xf32>
    %826 = vector.broadcast %824 : f32 to vector<12x12xf32>
    %827 = arith.mulf %826, %825 : vector<12x12xf32>
    %828 = arith.addf %823, %827 : vector<12x12xf32>
    %c121 = arith.constant 121 : index
    %829 = memref.load %arg4[%c121] : memref<128xf32, #tpu.memory_space<smem>>
    %830 = vector.extract_strided_slice %113 {offsets = [0, 1], sizes = [12, 12], strides = [1, 1]} : vector<13x13xf32> to vector<12x12xf32>
    %831 = vector.broadcast %829 : f32 to vector<12x12xf32>
    %832 = arith.mulf %831, %830 : vector<12x12xf32>
    %833 = arith.addf %828, %832 : vector<12x12xf32>
    %c122 = arith.constant 122 : index
    %834 = memref.load %arg4[%c122] : memref<128xf32, #tpu.memory_space<smem>>
    %835 = vector.extract_strided_slice %113 {offsets = [1, 0], sizes = [12, 12], strides = [1, 1]} : vector<13x13xf32> to vector<12x12xf32>
    %836 = vector.broadcast %834 : f32 to vector<12x12xf32>
    %837 = arith.mulf %836, %835 : vector<12x12xf32>
    %838 = arith.addf %833, %837 : vector<12x12xf32>
    %c123 = arith.constant 123 : index
    %839 = memref.load %arg4[%c123] : memref<128xf32, #tpu.memory_space<smem>>
    %840 = vector.extract_strided_slice %113 {offsets = [1, 1], sizes = [12, 12], strides = [1, 1]} : vector<13x13xf32> to vector<12x12xf32>
    %841 = vector.broadcast %839 : f32 to vector<12x12xf32>
    %842 = arith.mulf %841, %840 : vector<12x12xf32>
    %843 = arith.addf %838, %842 : vector<12x12xf32>
    %c124 = arith.constant 124 : index
    %844 = memref.load %arg4[%c124] : memref<128xf32, #tpu.memory_space<smem>>
    %845 = vector.extract_strided_slice %149 {offsets = [0, 0], sizes = [12, 12], strides = [1, 1]} : vector<13x13xf32> to vector<12x12xf32>
    %846 = vector.broadcast %844 : f32 to vector<12x12xf32>
    %847 = arith.mulf %846, %845 : vector<12x12xf32>
    %848 = arith.addf %843, %847 : vector<12x12xf32>
    %c125 = arith.constant 125 : index
    %849 = memref.load %arg4[%c125] : memref<128xf32, #tpu.memory_space<smem>>
    %850 = vector.extract_strided_slice %149 {offsets = [0, 1], sizes = [12, 12], strides = [1, 1]} : vector<13x13xf32> to vector<12x12xf32>
    %851 = vector.broadcast %849 : f32 to vector<12x12xf32>
    %852 = arith.mulf %851, %850 : vector<12x12xf32>
    %853 = arith.addf %848, %852 : vector<12x12xf32>
    %c126 = arith.constant 126 : index
    %854 = memref.load %arg4[%c126] : memref<128xf32, #tpu.memory_space<smem>>
    %855 = vector.extract_strided_slice %149 {offsets = [1, 0], sizes = [12, 12], strides = [1, 1]} : vector<13x13xf32> to vector<12x12xf32>
    %856 = vector.broadcast %854 : f32 to vector<12x12xf32>
    %857 = arith.mulf %856, %855 : vector<12x12xf32>
    %858 = arith.addf %853, %857 : vector<12x12xf32>
    %c127 = arith.constant 127 : index
    %859 = memref.load %arg4[%c127] : memref<128xf32, #tpu.memory_space<smem>>
    %860 = vector.extract_strided_slice %149 {offsets = [1, 1], sizes = [12, 12], strides = [1, 1]} : vector<13x13xf32> to vector<12x12xf32>
    %861 = vector.broadcast %859 : f32 to vector<12x12xf32>
    %862 = arith.mulf %861, %860 : vector<12x12xf32>
    %863 = arith.addf %858, %862 : vector<12x12xf32>
    %cst_89 = arith.constant 0.000000e+00 : f32
    %864 = vector.broadcast %cst_89 : f32 to vector<12x12xf32>
    %865 = arith.cmpf ogt, %863, %864 : vector<12x12xf32>
    %866 = math.exp %863 : vector<12x12xf32>
    %cst_90 = arith.constant 1.000000e+00 : f32
    %867 = vector.broadcast %cst_90 : f32 to vector<12x12xf32>
    %868 = arith.subf %866, %867 : vector<12x12xf32>
    %869 = arith.select %865, %863, %868 : vector<12x12xi1>, vector<12x12xf32>
    %c0_91 = arith.constant 0 : index
    %c0_92 = arith.constant 0 : index
    %870 = vector.load %arg11[%c0_91, %c0_92] : memref<1x10xf32, #tpu.memory_space<vmem>>, vector<1x10xf32>
    %871 = vector.extract_strided_slice %239 {offsets = [0, 0], sizes = [1, 12], strides = [1, 1]} : vector<12x12xf32> to vector<1x12xf32>
    %c0_93 = arith.constant 0 : index
    %c0_94 = arith.constant 0 : index
    %872 = vector.load %arg13[%c0_93, %c0_94] : memref<1x144xf32, #tpu.memory_space<vmem>>, vector<1x12xf32>
    tpu.vector_store %arg13[%c0_93, %c0_94], %871 {strides = array<i32>} : memref<1x144xf32, #tpu.memory_space<vmem>>, vector<1x12xf32>,
    %873 = vector.extract_strided_slice %239 {offsets = [1, 0], sizes = [1, 12], strides = [1, 1]} : vector<12x12xf32> to vector<1x12xf32>
    %c0_95 = arith.constant 0 : index
    %c12_96 = arith.constant 12 : index
    %874 = vector.load %arg13[%c0_95, %c12_96] : memref<1x144xf32, #tpu.memory_space<vmem>>, vector<1x12xf32>
    tpu.vector_store %arg13[%c0_95, %c12_96], %873 {strides = array<i32>} : memref<1x144xf32, #tpu.memory_space<vmem>>, vector<1x12xf32>,
    %875 = vector.extract_strided_slice %239 {offsets = [2, 0], sizes = [1, 12], strides = [1, 1]} : vector<12x12xf32> to vector<1x12xf32>
    %c0_97 = arith.constant 0 : index
    %c24_98 = arith.constant 24 : index
    %876 = vector.load %arg13[%c0_97, %c24_98] : memref<1x144xf32, #tpu.memory_space<vmem>>, vector<1x12xf32>
    tpu.vector_store %arg13[%c0_97, %c24_98], %875 {strides = array<i32>} : memref<1x144xf32, #tpu.memory_space<vmem>>, vector<1x12xf32>,
    %877 = vector.extract_strided_slice %239 {offsets = [3, 0], sizes = [1, 12], strides = [1, 1]} : vector<12x12xf32> to vector<1x12xf32>
    %c0_99 = arith.constant 0 : index
    %c36_100 = arith.constant 36 : index
    %878 = vector.load %arg13[%c0_99, %c36_100] : memref<1x144xf32, #tpu.memory_space<vmem>>, vector<1x12xf32>
    tpu.vector_store %arg13[%c0_99, %c36_100], %877 {strides = array<i32>} : memref<1x144xf32, #tpu.memory_space<vmem>>, vector<1x12xf32>,
    %879 = vector.extract_strided_slice %239 {offsets = [4, 0], sizes = [1, 12], strides = [1, 1]} : vector<12x12xf32> to vector<1x12xf32>
    %c0_101 = arith.constant 0 : index
    %c48_102 = arith.constant 48 : index
    %880 = vector.load %arg13[%c0_101, %c48_102] : memref<1x144xf32, #tpu.memory_space<vmem>>, vector<1x12xf32>
    tpu.vector_store %arg13[%c0_101, %c48_102], %879 {strides = array<i32>} : memref<1x144xf32, #tpu.memory_space<vmem>>, vector<1x12xf32>,
    %881 = vector.extract_strided_slice %239 {offsets = [5, 0], sizes = [1, 12], strides = [1, 1]} : vector<12x12xf32> to vector<1x12xf32>
    %c0_103 = arith.constant 0 : index
    %c60_104 = arith.constant 60 : index
    %882 = vector.load %arg13[%c0_103, %c60_104] : memref<1x144xf32, #tpu.memory_space<vmem>>, vector<1x12xf32>
    tpu.vector_store %arg13[%c0_103, %c60_104], %881 {strides = array<i32>} : memref<1x144xf32, #tpu.memory_space<vmem>>, vector<1x12xf32>,
    %883 = vector.extract_strided_slice %239 {offsets = [6, 0], sizes = [1, 12], strides = [1, 1]} : vector<12x12xf32> to vector<1x12xf32>
    %c0_105 = arith.constant 0 : index
    %c72_106 = arith.constant 72 : index
    %884 = vector.load %arg13[%c0_105, %c72_106] : memref<1x144xf32, #tpu.memory_space<vmem>>, vector<1x12xf32>
    tpu.vector_store %arg13[%c0_105, %c72_106], %883 {strides = array<i32>} : memref<1x144xf32, #tpu.memory_space<vmem>>, vector<1x12xf32>,
    %885 = vector.extract_strided_slice %239 {offsets = [7, 0], sizes = [1, 12], strides = [1, 1]} : vector<12x12xf32> to vector<1x12xf32>
    %c0_107 = arith.constant 0 : index
    %c84_108 = arith.constant 84 : index
    %886 = vector.load %arg13[%c0_107, %c84_108] : memref<1x144xf32, #tpu.memory_space<vmem>>, vector<1x12xf32>
    tpu.vector_store %arg13[%c0_107, %c84_108], %885 {strides = array<i32>} : memref<1x144xf32, #tpu.memory_space<vmem>>, vector<1x12xf32>,
    %887 = vector.extract_strided_slice %239 {offsets = [8, 0], sizes = [1, 12], strides = [1, 1]} : vector<12x12xf32> to vector<1x12xf32>
    %c0_109 = arith.constant 0 : index
    %c96_110 = arith.constant 96 : index
    %888 = vector.load %arg13[%c0_109, %c96_110] : memref<1x144xf32, #tpu.memory_space<vmem>>, vector<1x12xf32>
    tpu.vector_store %arg13[%c0_109, %c96_110], %887 {strides = array<i32>} : memref<1x144xf32, #tpu.memory_space<vmem>>, vector<1x12xf32>,
    %889 = vector.extract_strided_slice %239 {offsets = [9, 0], sizes = [1, 12], strides = [1, 1]} : vector<12x12xf32> to vector<1x12xf32>
    %c0_111 = arith.constant 0 : index
    %c108_112 = arith.constant 108 : index
    %890 = vector.load %arg13[%c0_111, %c108_112] : memref<1x144xf32, #tpu.memory_space<vmem>>, vector<1x12xf32>
    tpu.vector_store %arg13[%c0_111, %c108_112], %889 {strides = array<i32>} : memref<1x144xf32, #tpu.memory_space<vmem>>, vector<1x12xf32>,
    %891 = vector.extract_strided_slice %239 {offsets = [10, 0], sizes = [1, 12], strides = [1, 1]} : vector<12x12xf32> to vector<1x12xf32>
    %c0_113 = arith.constant 0 : index
    %c120_114 = arith.constant 120 : index
    %892 = vector.load %arg13[%c0_113, %c120_114] : memref<1x144xf32, #tpu.memory_space<vmem>>, vector<1x12xf32>
    tpu.vector_store %arg13[%c0_113, %c120_114], %891 {strides = array<i32>} : memref<1x144xf32, #tpu.memory_space<vmem>>, vector<1x12xf32>,
    %893 = vector.extract_strided_slice %239 {offsets = [11, 0], sizes = [1, 12], strides = [1, 1]} : vector<12x12xf32> to vector<1x12xf32>
    %c0_115 = arith.constant 0 : index
    %c132 = arith.constant 132 : index
    %894 = vector.load %arg13[%c0_115, %c132] : memref<1x144xf32, #tpu.memory_space<vmem>>, vector<1x12xf32>
    tpu.vector_store %arg13[%c0_115, %c132], %893 {strides = array<i32>} : memref<1x144xf32, #tpu.memory_space<vmem>>, vector<1x12xf32>,
    %c0_116 = arith.constant 0 : index
    %c0_117 = arith.constant 0 : index
    %895 = vector.load %arg10[%c0_116, %c0_117] : memref<1152x10xf32, #tpu.memory_space<vmem>>, vector<144x10xf32>
    %c0_118 = arith.constant 0 : index
    %c0_119 = arith.constant 0 : index
    %896 = vector.load %arg13[%c0_118, %c0_119] : memref<1x144xf32, #tpu.memory_space<vmem>>, vector<1x144xf32>
    %cst_120 = arith.constant dense<0.000000e+00> : vector<1x10xf32>
    %897 = tpu.matmul %896, %895, %cst_120 {dimension_numbers = #tpu.dot_dimension_numbers<[1], [0], [0], [1], [0, 0, 1, 1], [], []>} : vector<1x144xf32>, vector<144x10xf32>, vector<1x10xf32> -> vector<1x10xf32>
    %898 = arith.addf %870, %897 : vector<1x10xf32>
    %899 = vector.extract_strided_slice %329 {offsets = [0, 0], sizes = [1, 12], strides = [1, 1]} : vector<12x12xf32> to vector<1x12xf32>
    %c0_121 = arith.constant 0 : index
    %c0_122 = arith.constant 0 : index
    %900 = vector.load %arg13[%c0_121, %c0_122] : memref<1x144xf32, #tpu.memory_space<vmem>>, vector<1x12xf32>
    tpu.vector_store %arg13[%c0_121, %c0_122], %899 {strides = array<i32>} : memref<1x144xf32, #tpu.memory_space<vmem>>, vector<1x12xf32>,
    %901 = vector.extract_strided_slice %329 {offsets = [1, 0], sizes = [1, 12], strides = [1, 1]} : vector<12x12xf32> to vector<1x12xf32>
    %c0_123 = arith.constant 0 : index
    %c12_124 = arith.constant 12 : index
    %902 = vector.load %arg13[%c0_123, %c12_124] : memref<1x144xf32, #tpu.memory_space<vmem>>, vector<1x12xf32>
    tpu.vector_store %arg13[%c0_123, %c12_124], %901 {strides = array<i32>} : memref<1x144xf32, #tpu.memory_space<vmem>>, vector<1x12xf32>,
    %903 = vector.extract_strided_slice %329 {offsets = [2, 0], sizes = [1, 12], strides = [1, 1]} : vector<12x12xf32> to vector<1x12xf32>
    %c0_125 = arith.constant 0 : index
    %c24_126 = arith.constant 24 : index
    %904 = vector.load %arg13[%c0_125, %c24_126] : memref<1x144xf32, #tpu.memory_space<vmem>>, vector<1x12xf32>
    tpu.vector_store %arg13[%c0_125, %c24_126], %903 {strides = array<i32>} : memref<1x144xf32, #tpu.memory_space<vmem>>, vector<1x12xf32>,
    %905 = vector.extract_strided_slice %329 {offsets = [3, 0], sizes = [1, 12], strides = [1, 1]} : vector<12x12xf32> to vector<1x12xf32>
    %c0_127 = arith.constant 0 : index
    %c36_128 = arith.constant 36 : index
    %906 = vector.load %arg13[%c0_127, %c36_128] : memref<1x144xf32, #tpu.memory_space<vmem>>, vector<1x12xf32>
    tpu.vector_store %arg13[%c0_127, %c36_128], %905 {strides = array<i32>} : memref<1x144xf32, #tpu.memory_space<vmem>>, vector<1x12xf32>,
    %907 = vector.extract_strided_slice %329 {offsets = [4, 0], sizes = [1, 12], strides = [1, 1]} : vector<12x12xf32> to vector<1x12xf32>
    %c0_129 = arith.constant 0 : index
    %c48_130 = arith.constant 48 : index
    %908 = vector.load %arg13[%c0_129, %c48_130] : memref<1x144xf32, #tpu.memory_space<vmem>>, vector<1x12xf32>
    tpu.vector_store %arg13[%c0_129, %c48_130], %907 {strides = array<i32>} : memref<1x144xf32, #tpu.memory_space<vmem>>, vector<1x12xf32>,
    %909 = vector.extract_strided_slice %329 {offsets = [5, 0], sizes = [1, 12], strides = [1, 1]} : vector<12x12xf32> to vector<1x12xf32>
    %c0_131 = arith.constant 0 : index
    %c60_132 = arith.constant 60 : index
    %910 = vector.load %arg13[%c0_131, %c60_132] : memref<1x144xf32, #tpu.memory_space<vmem>>, vector<1x12xf32>
    tpu.vector_store %arg13[%c0_131, %c60_132], %909 {strides = array<i32>} : memref<1x144xf32, #tpu.memory_space<vmem>>, vector<1x12xf32>,
    %911 = vector.extract_strided_slice %329 {offsets = [6, 0], sizes = [1, 12], strides = [1, 1]} : vector<12x12xf32> to vector<1x12xf32>
    %c0_133 = arith.constant 0 : index
    %c72_134 = arith.constant 72 : index
    %912 = vector.load %arg13[%c0_133, %c72_134] : memref<1x144xf32, #tpu.memory_space<vmem>>, vector<1x12xf32>
    tpu.vector_store %arg13[%c0_133, %c72_134], %911 {strides = array<i32>} : memref<1x144xf32, #tpu.memory_space<vmem>>, vector<1x12xf32>,
    %913 = vector.extract_strided_slice %329 {offsets = [7, 0], sizes = [1, 12], strides = [1, 1]} : vector<12x12xf32> to vector<1x12xf32>
    %c0_135 = arith.constant 0 : index
    %c84_136 = arith.constant 84 : index
    %914 = vector.load %arg13[%c0_135, %c84_136] : memref<1x144xf32, #tpu.memory_space<vmem>>, vector<1x12xf32>
    tpu.vector_store %arg13[%c0_135, %c84_136], %913 {strides = array<i32>} : memref<1x144xf32, #tpu.memory_space<vmem>>, vector<1x12xf32>,
    %915 = vector.extract_strided_slice %329 {offsets = [8, 0], sizes = [1, 12], strides = [1, 1]} : vector<12x12xf32> to vector<1x12xf32>
    %c0_137 = arith.constant 0 : index
    %c96_138 = arith.constant 96 : index
    %916 = vector.load %arg13[%c0_137, %c96_138] : memref<1x144xf32, #tpu.memory_space<vmem>>, vector<1x12xf32>
    tpu.vector_store %arg13[%c0_137, %c96_138], %915 {strides = array<i32>} : memref<1x144xf32, #tpu.memory_space<vmem>>, vector<1x12xf32>,
    %917 = vector.extract_strided_slice %329 {offsets = [9, 0], sizes = [1, 12], strides = [1, 1]} : vector<12x12xf32> to vector<1x12xf32>
    %c0_139 = arith.constant 0 : index
    %c108_140 = arith.constant 108 : index
    %918 = vector.load %arg13[%c0_139, %c108_140] : memref<1x144xf32, #tpu.memory_space<vmem>>, vector<1x12xf32>
    tpu.vector_store %arg13[%c0_139, %c108_140], %917 {strides = array<i32>} : memref<1x144xf32, #tpu.memory_space<vmem>>, vector<1x12xf32>,
    %919 = vector.extract_strided_slice %329 {offsets = [10, 0], sizes = [1, 12], strides = [1, 1]} : vector<12x12xf32> to vector<1x12xf32>
    %c0_141 = arith.constant 0 : index
    %c120_142 = arith.constant 120 : index
    %920 = vector.load %arg13[%c0_141, %c120_142] : memref<1x144xf32, #tpu.memory_space<vmem>>, vector<1x12xf32>
    tpu.vector_store %arg13[%c0_141, %c120_142], %919 {strides = array<i32>} : memref<1x144xf32, #tpu.memory_space<vmem>>, vector<1x12xf32>,
    %921 = vector.extract_strided_slice %329 {offsets = [11, 0], sizes = [1, 12], strides = [1, 1]} : vector<12x12xf32> to vector<1x12xf32>
    %c0_143 = arith.constant 0 : index
    %c132_144 = arith.constant 132 : index
    %922 = vector.load %arg13[%c0_143, %c132_144] : memref<1x144xf32, #tpu.memory_space<vmem>>, vector<1x12xf32>
    tpu.vector_store %arg13[%c0_143, %c132_144], %921 {strides = array<i32>} : memref<1x144xf32, #tpu.memory_space<vmem>>, vector<1x12xf32>,
    %c144 = arith.constant 144 : index
    %c0_145 = arith.constant 0 : index
    %923 = vector.load %arg10[%c144, %c0_145] : memref<1152x10xf32, #tpu.memory_space<vmem>>, vector<144x10xf32>
    %c0_146 = arith.constant 0 : index
    %c0_147 = arith.constant 0 : index
    %924 = vector.load %arg13[%c0_146, %c0_147] : memref<1x144xf32, #tpu.memory_space<vmem>>, vector<1x144xf32>
    %cst_148 = arith.constant dense<0.000000e+00> : vector<1x10xf32>
    %925 = tpu.matmul %924, %923, %cst_148 {dimension_numbers = #tpu.dot_dimension_numbers<[1], [0], [0], [1], [0, 0, 1, 1], [], []>} : vector<1x144xf32>, vector<144x10xf32>, vector<1x10xf32> -> vector<1x10xf32>
    %926 = arith.addf %898, %925 : vector<1x10xf32>
    %927 = vector.extract_strided_slice %419 {offsets = [0, 0], sizes = [1, 12], strides = [1, 1]} : vector<12x12xf32> to vector<1x12xf32>
    %c0_149 = arith.constant 0 : index
    %c0_150 = arith.constant 0 : index
    %928 = vector.load %arg13[%c0_149, %c0_150] : memref<1x144xf32, #tpu.memory_space<vmem>>, vector<1x12xf32>
    tpu.vector_store %arg13[%c0_149, %c0_150], %927 {strides = array<i32>} : memref<1x144xf32, #tpu.memory_space<vmem>>, vector<1x12xf32>,
    %929 = vector.extract_strided_slice %419 {offsets = [1, 0], sizes = [1, 12], strides = [1, 1]} : vector<12x12xf32> to vector<1x12xf32>
    %c0_151 = arith.constant 0 : index
    %c12_152 = arith.constant 12 : index
    %930 = vector.load %arg13[%c0_151, %c12_152] : memref<1x144xf32, #tpu.memory_space<vmem>>, vector<1x12xf32>
    tpu.vector_store %arg13[%c0_151, %c12_152], %929 {strides = array<i32>} : memref<1x144xf32, #tpu.memory_space<vmem>>, vector<1x12xf32>,
    %931 = vector.extract_strided_slice %419 {offsets = [2, 0], sizes = [1, 12], strides = [1, 1]} : vector<12x12xf32> to vector<1x12xf32>
    %c0_153 = arith.constant 0 : index
    %c24_154 = arith.constant 24 : index
    %932 = vector.load %arg13[%c0_153, %c24_154] : memref<1x144xf32, #tpu.memory_space<vmem>>, vector<1x12xf32>
    tpu.vector_store %arg13[%c0_153, %c24_154], %931 {strides = array<i32>} : memref<1x144xf32, #tpu.memory_space<vmem>>, vector<1x12xf32>,
    %933 = vector.extract_strided_slice %419 {offsets = [3, 0], sizes = [1, 12], strides = [1, 1]} : vector<12x12xf32> to vector<1x12xf32>
    %c0_155 = arith.constant 0 : index
    %c36_156 = arith.constant 36 : index
    %934 = vector.load %arg13[%c0_155, %c36_156] : memref<1x144xf32, #tpu.memory_space<vmem>>, vector<1x12xf32>
    tpu.vector_store %arg13[%c0_155, %c36_156], %933 {strides = array<i32>} : memref<1x144xf32, #tpu.memory_space<vmem>>, vector<1x12xf32>,
    %935 = vector.extract_strided_slice %419 {offsets = [4, 0], sizes = [1, 12], strides = [1, 1]} : vector<12x12xf32> to vector<1x12xf32>
    %c0_157 = arith.constant 0 : index
    %c48_158 = arith.constant 48 : index
    %936 = vector.load %arg13[%c0_157, %c48_158] : memref<1x144xf32, #tpu.memory_space<vmem>>, vector<1x12xf32>
    tpu.vector_store %arg13[%c0_157, %c48_158], %935 {strides = array<i32>} : memref<1x144xf32, #tpu.memory_space<vmem>>, vector<1x12xf32>,
    %937 = vector.extract_strided_slice %419 {offsets = [5, 0], sizes = [1, 12], strides = [1, 1]} : vector<12x12xf32> to vector<1x12xf32>
    %c0_159 = arith.constant 0 : index
    %c60_160 = arith.constant 60 : index
    %938 = vector.load %arg13[%c0_159, %c60_160] : memref<1x144xf32, #tpu.memory_space<vmem>>, vector<1x12xf32>
    tpu.vector_store %arg13[%c0_159, %c60_160], %937 {strides = array<i32>} : memref<1x144xf32, #tpu.memory_space<vmem>>, vector<1x12xf32>,
    %939 = vector.extract_strided_slice %419 {offsets = [6, 0], sizes = [1, 12], strides = [1, 1]} : vector<12x12xf32> to vector<1x12xf32>
    %c0_161 = arith.constant 0 : index
    %c72_162 = arith.constant 72 : index
    %940 = vector.load %arg13[%c0_161, %c72_162] : memref<1x144xf32, #tpu.memory_space<vmem>>, vector<1x12xf32>
    tpu.vector_store %arg13[%c0_161, %c72_162], %939 {strides = array<i32>} : memref<1x144xf32, #tpu.memory_space<vmem>>, vector<1x12xf32>,
    %941 = vector.extract_strided_slice %419 {offsets = [7, 0], sizes = [1, 12], strides = [1, 1]} : vector<12x12xf32> to vector<1x12xf32>
    %c0_163 = arith.constant 0 : index
    %c84_164 = arith.constant 84 : index
    %942 = vector.load %arg13[%c0_163, %c84_164] : memref<1x144xf32, #tpu.memory_space<vmem>>, vector<1x12xf32>
    tpu.vector_store %arg13[%c0_163, %c84_164], %941 {strides = array<i32>} : memref<1x144xf32, #tpu.memory_space<vmem>>, vector<1x12xf32>,
    %943 = vector.extract_strided_slice %419 {offsets = [8, 0], sizes = [1, 12], strides = [1, 1]} : vector<12x12xf32> to vector<1x12xf32>
    %c0_165 = arith.constant 0 : index
    %c96_166 = arith.constant 96 : index
    %944 = vector.load %arg13[%c0_165, %c96_166] : memref<1x144xf32, #tpu.memory_space<vmem>>, vector<1x12xf32>
    tpu.vector_store %arg13[%c0_165, %c96_166], %943 {strides = array<i32>} : memref<1x144xf32, #tpu.memory_space<vmem>>, vector<1x12xf32>,
    %945 = vector.extract_strided_slice %419 {offsets = [9, 0], sizes = [1, 12], strides = [1, 1]} : vector<12x12xf32> to vector<1x12xf32>
    %c0_167 = arith.constant 0 : index
    %c108_168 = arith.constant 108 : index
    %946 = vector.load %arg13[%c0_167, %c108_168] : memref<1x144xf32, #tpu.memory_space<vmem>>, vector<1x12xf32>
    tpu.vector_store %arg13[%c0_167, %c108_168], %945 {strides = array<i32>} : memref<1x144xf32, #tpu.memory_space<vmem>>, vector<1x12xf32>,
    %947 = vector.extract_strided_slice %419 {offsets = [10, 0], sizes = [1, 12], strides = [1, 1]} : vector<12x12xf32> to vector<1x12xf32>
    %c0_169 = arith.constant 0 : index
    %c120_170 = arith.constant 120 : index
    %948 = vector.load %arg13[%c0_169, %c120_170] : memref<1x144xf32, #tpu.memory_space<vmem>>, vector<1x12xf32>
    tpu.vector_store %arg13[%c0_169, %c120_170], %947 {strides = array<i32>} : memref<1x144xf32, #tpu.memory_space<vmem>>, vector<1x12xf32>,
    %949 = vector.extract_strided_slice %419 {offsets = [11, 0], sizes = [1, 12], strides = [1, 1]} : vector<12x12xf32> to vector<1x12xf32>
    %c0_171 = arith.constant 0 : index
    %c132_172 = arith.constant 132 : index
    %950 = vector.load %arg13[%c0_171, %c132_172] : memref<1x144xf32, #tpu.memory_space<vmem>>, vector<1x12xf32>
    tpu.vector_store %arg13[%c0_171, %c132_172], %949 {strides = array<i32>} : memref<1x144xf32, #tpu.memory_space<vmem>>, vector<1x12xf32>,
    %c288 = arith.constant 288 : index
    %c0_173 = arith.constant 0 : index
    %951 = vector.load %arg10[%c288, %c0_173] : memref<1152x10xf32, #tpu.memory_space<vmem>>, vector<144x10xf32>
    %c0_174 = arith.constant 0 : index
    %c0_175 = arith.constant 0 : index
    %952 = vector.load %arg13[%c0_174, %c0_175] : memref<1x144xf32, #tpu.memory_space<vmem>>, vector<1x144xf32>
    %cst_176 = arith.constant dense<0.000000e+00> : vector<1x10xf32>
    %953 = tpu.matmul %952, %951, %cst_176 {dimension_numbers = #tpu.dot_dimension_numbers<[1], [0], [0], [1], [0, 0, 1, 1], [], []>} : vector<1x144xf32>, vector<144x10xf32>, vector<1x10xf32> -> vector<1x10xf32>
    %954 = arith.addf %926, %953 : vector<1x10xf32>
    %955 = vector.extract_strided_slice %509 {offsets = [0, 0], sizes = [1, 12], strides = [1, 1]} : vector<12x12xf32> to vector<1x12xf32>
    %c0_177 = arith.constant 0 : index
    %c0_178 = arith.constant 0 : index
    %956 = vector.load %arg13[%c0_177, %c0_178] : memref<1x144xf32, #tpu.memory_space<vmem>>, vector<1x12xf32>
    tpu.vector_store %arg13[%c0_177, %c0_178], %955 {strides = array<i32>} : memref<1x144xf32, #tpu.memory_space<vmem>>, vector<1x12xf32>,
    %957 = vector.extract_strided_slice %509 {offsets = [1, 0], sizes = [1, 12], strides = [1, 1]} : vector<12x12xf32> to vector<1x12xf32>
    %c0_179 = arith.constant 0 : index
    %c12_180 = arith.constant 12 : index
    %958 = vector.load %arg13[%c0_179, %c12_180] : memref<1x144xf32, #tpu.memory_space<vmem>>, vector<1x12xf32>
    tpu.vector_store %arg13[%c0_179, %c12_180], %957 {strides = array<i32>} : memref<1x144xf32, #tpu.memory_space<vmem>>, vector<1x12xf32>,
    %959 = vector.extract_strided_slice %509 {offsets = [2, 0], sizes = [1, 12], strides = [1, 1]} : vector<12x12xf32> to vector<1x12xf32>
    %c0_181 = arith.constant 0 : index
    %c24_182 = arith.constant 24 : index
    %960 = vector.load %arg13[%c0_181, %c24_182] : memref<1x144xf32, #tpu.memory_space<vmem>>, vector<1x12xf32>
    tpu.vector_store %arg13[%c0_181, %c24_182], %959 {strides = array<i32>} : memref<1x144xf32, #tpu.memory_space<vmem>>, vector<1x12xf32>,
    %961 = vector.extract_strided_slice %509 {offsets = [3, 0], sizes = [1, 12], strides = [1, 1]} : vector<12x12xf32> to vector<1x12xf32>
    %c0_183 = arith.constant 0 : index
    %c36_184 = arith.constant 36 : index
    %962 = vector.load %arg13[%c0_183, %c36_184] : memref<1x144xf32, #tpu.memory_space<vmem>>, vector<1x12xf32>
    tpu.vector_store %arg13[%c0_183, %c36_184], %961 {strides = array<i32>} : memref<1x144xf32, #tpu.memory_space<vmem>>, vector<1x12xf32>,
    %963 = vector.extract_strided_slice %509 {offsets = [4, 0], sizes = [1, 12], strides = [1, 1]} : vector<12x12xf32> to vector<1x12xf32>
    %c0_185 = arith.constant 0 : index
    %c48_186 = arith.constant 48 : index
    %964 = vector.load %arg13[%c0_185, %c48_186] : memref<1x144xf32, #tpu.memory_space<vmem>>, vector<1x12xf32>
    tpu.vector_store %arg13[%c0_185, %c48_186], %963 {strides = array<i32>} : memref<1x144xf32, #tpu.memory_space<vmem>>, vector<1x12xf32>,
    %965 = vector.extract_strided_slice %509 {offsets = [5, 0], sizes = [1, 12], strides = [1, 1]} : vector<12x12xf32> to vector<1x12xf32>
    %c0_187 = arith.constant 0 : index
    %c60_188 = arith.constant 60 : index
    %966 = vector.load %arg13[%c0_187, %c60_188] : memref<1x144xf32, #tpu.memory_space<vmem>>, vector<1x12xf32>
    tpu.vector_store %arg13[%c0_187, %c60_188], %965 {strides = array<i32>} : memref<1x144xf32, #tpu.memory_space<vmem>>, vector<1x12xf32>,
    %967 = vector.extract_strided_slice %509 {offsets = [6, 0], sizes = [1, 12], strides = [1, 1]} : vector<12x12xf32> to vector<1x12xf32>
    %c0_189 = arith.constant 0 : index
    %c72_190 = arith.constant 72 : index
    %968 = vector.load %arg13[%c0_189, %c72_190] : memref<1x144xf32, #tpu.memory_space<vmem>>, vector<1x12xf32>
    tpu.vector_store %arg13[%c0_189, %c72_190], %967 {strides = array<i32>} : memref<1x144xf32, #tpu.memory_space<vmem>>, vector<1x12xf32>,
    %969 = vector.extract_strided_slice %509 {offsets = [7, 0], sizes = [1, 12], strides = [1, 1]} : vector<12x12xf32> to vector<1x12xf32>
    %c0_191 = arith.constant 0 : index
    %c84_192 = arith.constant 84 : index
    %970 = vector.load %arg13[%c0_191, %c84_192] : memref<1x144xf32, #tpu.memory_space<vmem>>, vector<1x12xf32>
    tpu.vector_store %arg13[%c0_191, %c84_192], %969 {strides = array<i32>} : memref<1x144xf32, #tpu.memory_space<vmem>>, vector<1x12xf32>,
    %971 = vector.extract_strided_slice %509 {offsets = [8, 0], sizes = [1, 12], strides = [1, 1]} : vector<12x12xf32> to vector<1x12xf32>
    %c0_193 = arith.constant 0 : index
    %c96_194 = arith.constant 96 : index
    %972 = vector.load %arg13[%c0_193, %c96_194] : memref<1x144xf32, #tpu.memory_space<vmem>>, vector<1x12xf32>
    tpu.vector_store %arg13[%c0_193, %c96_194], %971 {strides = array<i32>} : memref<1x144xf32, #tpu.memory_space<vmem>>, vector<1x12xf32>,
    %973 = vector.extract_strided_slice %509 {offsets = [9, 0], sizes = [1, 12], strides = [1, 1]} : vector<12x12xf32> to vector<1x12xf32>
    %c0_195 = arith.constant 0 : index
    %c108_196 = arith.constant 108 : index
    %974 = vector.load %arg13[%c0_195, %c108_196] : memref<1x144xf32, #tpu.memory_space<vmem>>, vector<1x12xf32>
    tpu.vector_store %arg13[%c0_195, %c108_196], %973 {strides = array<i32>} : memref<1x144xf32, #tpu.memory_space<vmem>>, vector<1x12xf32>,
    %975 = vector.extract_strided_slice %509 {offsets = [10, 0], sizes = [1, 12], strides = [1, 1]} : vector<12x12xf32> to vector<1x12xf32>
    %c0_197 = arith.constant 0 : index
    %c120_198 = arith.constant 120 : index
    %976 = vector.load %arg13[%c0_197, %c120_198] : memref<1x144xf32, #tpu.memory_space<vmem>>, vector<1x12xf32>
    tpu.vector_store %arg13[%c0_197, %c120_198], %975 {strides = array<i32>} : memref<1x144xf32, #tpu.memory_space<vmem>>, vector<1x12xf32>,
    %977 = vector.extract_strided_slice %509 {offsets = [11, 0], sizes = [1, 12], strides = [1, 1]} : vector<12x12xf32> to vector<1x12xf32>
    %c0_199 = arith.constant 0 : index
    %c132_200 = arith.constant 132 : index
    %978 = vector.load %arg13[%c0_199, %c132_200] : memref<1x144xf32, #tpu.memory_space<vmem>>, vector<1x12xf32>
    tpu.vector_store %arg13[%c0_199, %c132_200], %977 {strides = array<i32>} : memref<1x144xf32, #tpu.memory_space<vmem>>, vector<1x12xf32>,
    %c432 = arith.constant 432 : index
    %c0_201 = arith.constant 0 : index
    %979 = vector.load %arg10[%c432, %c0_201] : memref<1152x10xf32, #tpu.memory_space<vmem>>, vector<144x10xf32>
    %c0_202 = arith.constant 0 : index
    %c0_203 = arith.constant 0 : index
    %980 = vector.load %arg13[%c0_202, %c0_203] : memref<1x144xf32, #tpu.memory_space<vmem>>, vector<1x144xf32>
    %cst_204 = arith.constant dense<0.000000e+00> : vector<1x10xf32>
    %981 = tpu.matmul %980, %979, %cst_204 {dimension_numbers = #tpu.dot_dimension_numbers<[1], [0], [0], [1], [0, 0, 1, 1], [], []>} : vector<1x144xf32>, vector<144x10xf32>, vector<1x10xf32> -> vector<1x10xf32>
    %982 = arith.addf %954, %981 : vector<1x10xf32>
    %983 = vector.extract_strided_slice %599 {offsets = [0, 0], sizes = [1, 12], strides = [1, 1]} : vector<12x12xf32> to vector<1x12xf32>
    %c0_205 = arith.constant 0 : index
    %c0_206 = arith.constant 0 : index
    %984 = vector.load %arg13[%c0_205, %c0_206] : memref<1x144xf32, #tpu.memory_space<vmem>>, vector<1x12xf32>
    tpu.vector_store %arg13[%c0_205, %c0_206], %983 {strides = array<i32>} : memref<1x144xf32, #tpu.memory_space<vmem>>, vector<1x12xf32>,
    %985 = vector.extract_strided_slice %599 {offsets = [1, 0], sizes = [1, 12], strides = [1, 1]} : vector<12x12xf32> to vector<1x12xf32>
    %c0_207 = arith.constant 0 : index
    %c12_208 = arith.constant 12 : index
    %986 = vector.load %arg13[%c0_207, %c12_208] : memref<1x144xf32, #tpu.memory_space<vmem>>, vector<1x12xf32>
    tpu.vector_store %arg13[%c0_207, %c12_208], %985 {strides = array<i32>} : memref<1x144xf32, #tpu.memory_space<vmem>>, vector<1x12xf32>,
    %987 = vector.extract_strided_slice %599 {offsets = [2, 0], sizes = [1, 12], strides = [1, 1]} : vector<12x12xf32> to vector<1x12xf32>
    %c0_209 = arith.constant 0 : index
    %c24_210 = arith.constant 24 : index
    %988 = vector.load %arg13[%c0_209, %c24_210] : memref<1x144xf32, #tpu.memory_space<vmem>>, vector<1x12xf32>
    tpu.vector_store %arg13[%c0_209, %c24_210], %987 {strides = array<i32>} : memref<1x144xf32, #tpu.memory_space<vmem>>, vector<1x12xf32>,
    %989 = vector.extract_strided_slice %599 {offsets = [3, 0], sizes = [1, 12], strides = [1, 1]} : vector<12x12xf32> to vector<1x12xf32>
    %c0_211 = arith.constant 0 : index
    %c36_212 = arith.constant 36 : index
    %990 = vector.load %arg13[%c0_211, %c36_212] : memref<1x144xf32, #tpu.memory_space<vmem>>, vector<1x12xf32>
    tpu.vector_store %arg13[%c0_211, %c36_212], %989 {strides = array<i32>} : memref<1x144xf32, #tpu.memory_space<vmem>>, vector<1x12xf32>,
    %991 = vector.extract_strided_slice %599 {offsets = [4, 0], sizes = [1, 12], strides = [1, 1]} : vector<12x12xf32> to vector<1x12xf32>
    %c0_213 = arith.constant 0 : index
    %c48_214 = arith.constant 48 : index
    %992 = vector.load %arg13[%c0_213, %c48_214] : memref<1x144xf32, #tpu.memory_space<vmem>>, vector<1x12xf32>
    tpu.vector_store %arg13[%c0_213, %c48_214], %991 {strides = array<i32>} : memref<1x144xf32, #tpu.memory_space<vmem>>, vector<1x12xf32>,
    %993 = vector.extract_strided_slice %599 {offsets = [5, 0], sizes = [1, 12], strides = [1, 1]} : vector<12x12xf32> to vector<1x12xf32>
    %c0_215 = arith.constant 0 : index
    %c60_216 = arith.constant 60 : index
    %994 = vector.load %arg13[%c0_215, %c60_216] : memref<1x144xf32, #tpu.memory_space<vmem>>, vector<1x12xf32>
    tpu.vector_store %arg13[%c0_215, %c60_216], %993 {strides = array<i32>} : memref<1x144xf32, #tpu.memory_space<vmem>>, vector<1x12xf32>,
    %995 = vector.extract_strided_slice %599 {offsets = [6, 0], sizes = [1, 12], strides = [1, 1]} : vector<12x12xf32> to vector<1x12xf32>
    %c0_217 = arith.constant 0 : index
    %c72_218 = arith.constant 72 : index
    %996 = vector.load %arg13[%c0_217, %c72_218] : memref<1x144xf32, #tpu.memory_space<vmem>>, vector<1x12xf32>
    tpu.vector_store %arg13[%c0_217, %c72_218], %995 {strides = array<i32>} : memref<1x144xf32, #tpu.memory_space<vmem>>, vector<1x12xf32>,
    %997 = vector.extract_strided_slice %599 {offsets = [7, 0], sizes = [1, 12], strides = [1, 1]} : vector<12x12xf32> to vector<1x12xf32>
    %c0_219 = arith.constant 0 : index
    %c84_220 = arith.constant 84 : index
    %998 = vector.load %arg13[%c0_219, %c84_220] : memref<1x144xf32, #tpu.memory_space<vmem>>, vector<1x12xf32>
    tpu.vector_store %arg13[%c0_219, %c84_220], %997 {strides = array<i32>} : memref<1x144xf32, #tpu.memory_space<vmem>>, vector<1x12xf32>,
    %999 = vector.extract_strided_slice %599 {offsets = [8, 0], sizes = [1, 12], strides = [1, 1]} : vector<12x12xf32> to vector<1x12xf32>
    %c0_221 = arith.constant 0 : index
    %c96_222 = arith.constant 96 : index
    %1000 = vector.load %arg13[%c0_221, %c96_222] : memref<1x144xf32, #tpu.memory_space<vmem>>, vector<1x12xf32>
    tpu.vector_store %arg13[%c0_221, %c96_222], %999 {strides = array<i32>} : memref<1x144xf32, #tpu.memory_space<vmem>>, vector<1x12xf32>,
    %1001 = vector.extract_strided_slice %599 {offsets = [9, 0], sizes = [1, 12], strides = [1, 1]} : vector<12x12xf32> to vector<1x12xf32>
    %c0_223 = arith.constant 0 : index
    %c108_224 = arith.constant 108 : index
    %1002 = vector.load %arg13[%c0_223, %c108_224] : memref<1x144xf32, #tpu.memory_space<vmem>>, vector<1x12xf32>
    tpu.vector_store %arg13[%c0_223, %c108_224], %1001 {strides = array<i32>} : memref<1x144xf32, #tpu.memory_space<vmem>>, vector<1x12xf32>,
    %1003 = vector.extract_strided_slice %599 {offsets = [10, 0], sizes = [1, 12], strides = [1, 1]} : vector<12x12xf32> to vector<1x12xf32>
    %c0_225 = arith.constant 0 : index
    %c120_226 = arith.constant 120 : index
    %1004 = vector.load %arg13[%c0_225, %c120_226] : memref<1x144xf32, #tpu.memory_space<vmem>>, vector<1x12xf32>
    tpu.vector_store %arg13[%c0_225, %c120_226], %1003 {strides = array<i32>} : memref<1x144xf32, #tpu.memory_space<vmem>>, vector<1x12xf32>,
    %1005 = vector.extract_strided_slice %599 {offsets = [11, 0], sizes = [1, 12], strides = [1, 1]} : vector<12x12xf32> to vector<1x12xf32>
    %c0_227 = arith.constant 0 : index
    %c132_228 = arith.constant 132 : index
    %1006 = vector.load %arg13[%c0_227, %c132_228] : memref<1x144xf32, #tpu.memory_space<vmem>>, vector<1x12xf32>
    tpu.vector_store %arg13[%c0_227, %c132_228], %1005 {strides = array<i32>} : memref<1x144xf32, #tpu.memory_space<vmem>>, vector<1x12xf32>,
    %c576 = arith.constant 576 : index
    %c0_229 = arith.constant 0 : index
    %1007 = vector.load %arg10[%c576, %c0_229] : memref<1152x10xf32, #tpu.memory_space<vmem>>, vector<144x10xf32>
    %c0_230 = arith.constant 0 : index
    %c0_231 = arith.constant 0 : index
    %1008 = vector.load %arg13[%c0_230, %c0_231] : memref<1x144xf32, #tpu.memory_space<vmem>>, vector<1x144xf32>
    %cst_232 = arith.constant dense<0.000000e+00> : vector<1x10xf32>
    %1009 = tpu.matmul %1008, %1007, %cst_232 {dimension_numbers = #tpu.dot_dimension_numbers<[1], [0], [0], [1], [0, 0, 1, 1], [], []>} : vector<1x144xf32>, vector<144x10xf32>, vector<1x10xf32> -> vector<1x10xf32>
    %1010 = arith.addf %982, %1009 : vector<1x10xf32>
    %1011 = vector.extract_strided_slice %689 {offsets = [0, 0], sizes = [1, 12], strides = [1, 1]} : vector<12x12xf32> to vector<1x12xf32>
    %c0_233 = arith.constant 0 : index
    %c0_234 = arith.constant 0 : index
    %1012 = vector.load %arg13[%c0_233, %c0_234] : memref<1x144xf32, #tpu.memory_space<vmem>>, vector<1x12xf32>
    tpu.vector_store %arg13[%c0_233, %c0_234], %1011 {strides = array<i32>} : memref<1x144xf32, #tpu.memory_space<vmem>>, vector<1x12xf32>,
    %1013 = vector.extract_strided_slice %689 {offsets = [1, 0], sizes = [1, 12], strides = [1, 1]} : vector<12x12xf32> to vector<1x12xf32>
    %c0_235 = arith.constant 0 : index
    %c12_236 = arith.constant 12 : index
    %1014 = vector.load %arg13[%c0_235, %c12_236] : memref<1x144xf32, #tpu.memory_space<vmem>>, vector<1x12xf32>
    tpu.vector_store %arg13[%c0_235, %c12_236], %1013 {strides = array<i32>} : memref<1x144xf32, #tpu.memory_space<vmem>>, vector<1x12xf32>,
    %1015 = vector.extract_strided_slice %689 {offsets = [2, 0], sizes = [1, 12], strides = [1, 1]} : vector<12x12xf32> to vector<1x12xf32>
    %c0_237 = arith.constant 0 : index
    %c24_238 = arith.constant 24 : index
    %1016 = vector.load %arg13[%c0_237, %c24_238] : memref<1x144xf32, #tpu.memory_space<vmem>>, vector<1x12xf32>
    tpu.vector_store %arg13[%c0_237, %c24_238], %1015 {strides = array<i32>} : memref<1x144xf32, #tpu.memory_space<vmem>>, vector<1x12xf32>,
    %1017 = vector.extract_strided_slice %689 {offsets = [3, 0], sizes = [1, 12], strides = [1, 1]} : vector<12x12xf32> to vector<1x12xf32>
    %c0_239 = arith.constant 0 : index
    %c36_240 = arith.constant 36 : index
    %1018 = vector.load %arg13[%c0_239, %c36_240] : memref<1x144xf32, #tpu.memory_space<vmem>>, vector<1x12xf32>
    tpu.vector_store %arg13[%c0_239, %c36_240], %1017 {strides = array<i32>} : memref<1x144xf32, #tpu.memory_space<vmem>>, vector<1x12xf32>,
    %1019 = vector.extract_strided_slice %689 {offsets = [4, 0], sizes = [1, 12], strides = [1, 1]} : vector<12x12xf32> to vector<1x12xf32>
    %c0_241 = arith.constant 0 : index
    %c48_242 = arith.constant 48 : index
    %1020 = vector.load %arg13[%c0_241, %c48_242] : memref<1x144xf32, #tpu.memory_space<vmem>>, vector<1x12xf32>
    tpu.vector_store %arg13[%c0_241, %c48_242], %1019 {strides = array<i32>} : memref<1x144xf32, #tpu.memory_space<vmem>>, vector<1x12xf32>,
    %1021 = vector.extract_strided_slice %689 {offsets = [5, 0], sizes = [1, 12], strides = [1, 1]} : vector<12x12xf32> to vector<1x12xf32>
    %c0_243 = arith.constant 0 : index
    %c60_244 = arith.constant 60 : index
    %1022 = vector.load %arg13[%c0_243, %c60_244] : memref<1x144xf32, #tpu.memory_space<vmem>>, vector<1x12xf32>
    tpu.vector_store %arg13[%c0_243, %c60_244], %1021 {strides = array<i32>} : memref<1x144xf32, #tpu.memory_space<vmem>>, vector<1x12xf32>,
    %1023 = vector.extract_strided_slice %689 {offsets = [6, 0], sizes = [1, 12], strides = [1, 1]} : vector<12x12xf32> to vector<1x12xf32>
    %c0_245 = arith.constant 0 : index
    %c72_246 = arith.constant 72 : index
    %1024 = vector.load %arg13[%c0_245, %c72_246] : memref<1x144xf32, #tpu.memory_space<vmem>>, vector<1x12xf32>
    tpu.vector_store %arg13[%c0_245, %c72_246], %1023 {strides = array<i32>} : memref<1x144xf32, #tpu.memory_space<vmem>>, vector<1x12xf32>,
    %1025 = vector.extract_strided_slice %689 {offsets = [7, 0], sizes = [1, 12], strides = [1, 1]} : vector<12x12xf32> to vector<1x12xf32>
    %c0_247 = arith.constant 0 : index
    %c84_248 = arith.constant 84 : index
    %1026 = vector.load %arg13[%c0_247, %c84_248] : memref<1x144xf32, #tpu.memory_space<vmem>>, vector<1x12xf32>
    tpu.vector_store %arg13[%c0_247, %c84_248], %1025 {strides = array<i32>} : memref<1x144xf32, #tpu.memory_space<vmem>>, vector<1x12xf32>,
    %1027 = vector.extract_strided_slice %689 {offsets = [8, 0], sizes = [1, 12], strides = [1, 1]} : vector<12x12xf32> to vector<1x12xf32>
    %c0_249 = arith.constant 0 : index
    %c96_250 = arith.constant 96 : index
    %1028 = vector.load %arg13[%c0_249, %c96_250] : memref<1x144xf32, #tpu.memory_space<vmem>>, vector<1x12xf32>
    tpu.vector_store %arg13[%c0_249, %c96_250], %1027 {strides = array<i32>} : memref<1x144xf32, #tpu.memory_space<vmem>>, vector<1x12xf32>,
    %1029 = vector.extract_strided_slice %689 {offsets = [9, 0], sizes = [1, 12], strides = [1, 1]} : vector<12x12xf32> to vector<1x12xf32>
    %c0_251 = arith.constant 0 : index
    %c108_252 = arith.constant 108 : index
    %1030 = vector.load %arg13[%c0_251, %c108_252] : memref<1x144xf32, #tpu.memory_space<vmem>>, vector<1x12xf32>
    tpu.vector_store %arg13[%c0_251, %c108_252], %1029 {strides = array<i32>} : memref<1x144xf32, #tpu.memory_space<vmem>>, vector<1x12xf32>,
    %1031 = vector.extract_strided_slice %689 {offsets = [10, 0], sizes = [1, 12], strides = [1, 1]} : vector<12x12xf32> to vector<1x12xf32>
    %c0_253 = arith.constant 0 : index
    %c120_254 = arith.constant 120 : index
    %1032 = vector.load %arg13[%c0_253, %c120_254] : memref<1x144xf32, #tpu.memory_space<vmem>>, vector<1x12xf32>
    tpu.vector_store %arg13[%c0_253, %c120_254], %1031 {strides = array<i32>} : memref<1x144xf32, #tpu.memory_space<vmem>>, vector<1x12xf32>,
    %1033 = vector.extract_strided_slice %689 {offsets = [11, 0], sizes = [1, 12], strides = [1, 1]} : vector<12x12xf32> to vector<1x12xf32>
    %c0_255 = arith.constant 0 : index
    %c132_256 = arith.constant 132 : index
    %1034 = vector.load %arg13[%c0_255, %c132_256] : memref<1x144xf32, #tpu.memory_space<vmem>>, vector<1x12xf32>
    tpu.vector_store %arg13[%c0_255, %c132_256], %1033 {strides = array<i32>} : memref<1x144xf32, #tpu.memory_space<vmem>>, vector<1x12xf32>,
    %c720 = arith.constant 720 : index
    %c0_257 = arith.constant 0 : index
    %1035 = vector.load %arg10[%c720, %c0_257] : memref<1152x10xf32, #tpu.memory_space<vmem>>, vector<144x10xf32>
    %c0_258 = arith.constant 0 : index
    %c0_259 = arith.constant 0 : index
    %1036 = vector.load %arg13[%c0_258, %c0_259] : memref<1x144xf32, #tpu.memory_space<vmem>>, vector<1x144xf32>
    %cst_260 = arith.constant dense<0.000000e+00> : vector<1x10xf32>
    %1037 = tpu.matmul %1036, %1035, %cst_260 {dimension_numbers = #tpu.dot_dimension_numbers<[1], [0], [0], [1], [0, 0, 1, 1], [], []>} : vector<1x144xf32>, vector<144x10xf32>, vector<1x10xf32> -> vector<1x10xf32>
    %1038 = arith.addf %1010, %1037 : vector<1x10xf32>
    %1039 = vector.extract_strided_slice %779 {offsets = [0, 0], sizes = [1, 12], strides = [1, 1]} : vector<12x12xf32> to vector<1x12xf32>
    %c0_261 = arith.constant 0 : index
    %c0_262 = arith.constant 0 : index
    %1040 = vector.load %arg13[%c0_261, %c0_262] : memref<1x144xf32, #tpu.memory_space<vmem>>, vector<1x12xf32>
    tpu.vector_store %arg13[%c0_261, %c0_262], %1039 {strides = array<i32>} : memref<1x144xf32, #tpu.memory_space<vmem>>, vector<1x12xf32>,
    %1041 = vector.extract_strided_slice %779 {offsets = [1, 0], sizes = [1, 12], strides = [1, 1]} : vector<12x12xf32> to vector<1x12xf32>
    %c0_263 = arith.constant 0 : index
    %c12_264 = arith.constant 12 : index
    %1042 = vector.load %arg13[%c0_263, %c12_264] : memref<1x144xf32, #tpu.memory_space<vmem>>, vector<1x12xf32>
    tpu.vector_store %arg13[%c0_263, %c12_264], %1041 {strides = array<i32>} : memref<1x144xf32, #tpu.memory_space<vmem>>, vector<1x12xf32>,
    %1043 = vector.extract_strided_slice %779 {offsets = [2, 0], sizes = [1, 12], strides = [1, 1]} : vector<12x12xf32> to vector<1x12xf32>
    %c0_265 = arith.constant 0 : index
    %c24_266 = arith.constant 24 : index
    %1044 = vector.load %arg13[%c0_265, %c24_266] : memref<1x144xf32, #tpu.memory_space<vmem>>, vector<1x12xf32>
    tpu.vector_store %arg13[%c0_265, %c24_266], %1043 {strides = array<i32>} : memref<1x144xf32, #tpu.memory_space<vmem>>, vector<1x12xf32>,
    %1045 = vector.extract_strided_slice %779 {offsets = [3, 0], sizes = [1, 12], strides = [1, 1]} : vector<12x12xf32> to vector<1x12xf32>
    %c0_267 = arith.constant 0 : index
    %c36_268 = arith.constant 36 : index
    %1046 = vector.load %arg13[%c0_267, %c36_268] : memref<1x144xf32, #tpu.memory_space<vmem>>, vector<1x12xf32>
    tpu.vector_store %arg13[%c0_267, %c36_268], %1045 {strides = array<i32>} : memref<1x144xf32, #tpu.memory_space<vmem>>, vector<1x12xf32>,
    %1047 = vector.extract_strided_slice %779 {offsets = [4, 0], sizes = [1, 12], strides = [1, 1]} : vector<12x12xf32> to vector<1x12xf32>
    %c0_269 = arith.constant 0 : index
    %c48_270 = arith.constant 48 : index
    %1048 = vector.load %arg13[%c0_269, %c48_270] : memref<1x144xf32, #tpu.memory_space<vmem>>, vector<1x12xf32>
    tpu.vector_store %arg13[%c0_269, %c48_270], %1047 {strides = array<i32>} : memref<1x144xf32, #tpu.memory_space<vmem>>, vector<1x12xf32>,
    %1049 = vector.extract_strided_slice %779 {offsets = [5, 0], sizes = [1, 12], strides = [1, 1]} : vector<12x12xf32> to vector<1x12xf32>
    %c0_271 = arith.constant 0 : index
    %c60_272 = arith.constant 60 : index
    %1050 = vector.load %arg13[%c0_271, %c60_272] : memref<1x144xf32, #tpu.memory_space<vmem>>, vector<1x12xf32>
    tpu.vector_store %arg13[%c0_271, %c60_272], %1049 {strides = array<i32>} : memref<1x144xf32, #tpu.memory_space<vmem>>, vector<1x12xf32>,
    %1051 = vector.extract_strided_slice %779 {offsets = [6, 0], sizes = [1, 12], strides = [1, 1]} : vector<12x12xf32> to vector<1x12xf32>
    %c0_273 = arith.constant 0 : index
    %c72_274 = arith.constant 72 : index
    %1052 = vector.load %arg13[%c0_273, %c72_274] : memref<1x144xf32, #tpu.memory_space<vmem>>, vector<1x12xf32>
    tpu.vector_store %arg13[%c0_273, %c72_274], %1051 {strides = array<i32>} : memref<1x144xf32, #tpu.memory_space<vmem>>, vector<1x12xf32>,
    %1053 = vector.extract_strided_slice %779 {offsets = [7, 0], sizes = [1, 12], strides = [1, 1]} : vector<12x12xf32> to vector<1x12xf32>
    %c0_275 = arith.constant 0 : index
    %c84_276 = arith.constant 84 : index
    %1054 = vector.load %arg13[%c0_275, %c84_276] : memref<1x144xf32, #tpu.memory_space<vmem>>, vector<1x12xf32>
    tpu.vector_store %arg13[%c0_275, %c84_276], %1053 {strides = array<i32>} : memref<1x144xf32, #tpu.memory_space<vmem>>, vector<1x12xf32>,
    %1055 = vector.extract_strided_slice %779 {offsets = [8, 0], sizes = [1, 12], strides = [1, 1]} : vector<12x12xf32> to vector<1x12xf32>
    %c0_277 = arith.constant 0 : index
    %c96_278 = arith.constant 96 : index
    %1056 = vector.load %arg13[%c0_277, %c96_278] : memref<1x144xf32, #tpu.memory_space<vmem>>, vector<1x12xf32>
    tpu.vector_store %arg13[%c0_277, %c96_278], %1055 {strides = array<i32>} : memref<1x144xf32, #tpu.memory_space<vmem>>, vector<1x12xf32>,
    %1057 = vector.extract_strided_slice %779 {offsets = [9, 0], sizes = [1, 12], strides = [1, 1]} : vector<12x12xf32> to vector<1x12xf32>
    %c0_279 = arith.constant 0 : index
    %c108_280 = arith.constant 108 : index
    %1058 = vector.load %arg13[%c0_279, %c108_280] : memref<1x144xf32, #tpu.memory_space<vmem>>, vector<1x12xf32>
    tpu.vector_store %arg13[%c0_279, %c108_280], %1057 {strides = array<i32>} : memref<1x144xf32, #tpu.memory_space<vmem>>, vector<1x12xf32>,
    %1059 = vector.extract_strided_slice %779 {offsets = [10, 0], sizes = [1, 12], strides = [1, 1]} : vector<12x12xf32> to vector<1x12xf32>
    %c0_281 = arith.constant 0 : index
    %c120_282 = arith.constant 120 : index
    %1060 = vector.load %arg13[%c0_281, %c120_282] : memref<1x144xf32, #tpu.memory_space<vmem>>, vector<1x12xf32>
    tpu.vector_store %arg13[%c0_281, %c120_282], %1059 {strides = array<i32>} : memref<1x144xf32, #tpu.memory_space<vmem>>, vector<1x12xf32>,
    %1061 = vector.extract_strided_slice %779 {offsets = [11, 0], sizes = [1, 12], strides = [1, 1]} : vector<12x12xf32> to vector<1x12xf32>
    %c0_283 = arith.constant 0 : index
    %c132_284 = arith.constant 132 : index
    %1062 = vector.load %arg13[%c0_283, %c132_284] : memref<1x144xf32, #tpu.memory_space<vmem>>, vector<1x12xf32>
    tpu.vector_store %arg13[%c0_283, %c132_284], %1061 {strides = array<i32>} : memref<1x144xf32, #tpu.memory_space<vmem>>, vector<1x12xf32>,
    %c864 = arith.constant 864 : index
    %c0_285 = arith.constant 0 : index
    %1063 = vector.load %arg10[%c864, %c0_285] : memref<1152x10xf32, #tpu.memory_space<vmem>>, vector<144x10xf32>
    %c0_286 = arith.constant 0 : index
    %c0_287 = arith.constant 0 : index
    %1064 = vector.load %arg13[%c0_286, %c0_287] : memref<1x144xf32, #tpu.memory_space<vmem>>, vector<1x144xf32>
    %cst_288 = arith.constant dense<0.000000e+00> : vector<1x10xf32>
    %1065 = tpu.matmul %1064, %1063, %cst_288 {dimension_numbers = #tpu.dot_dimension_numbers<[1], [0], [0], [1], [0, 0, 1, 1], [], []>} : vector<1x144xf32>, vector<144x10xf32>, vector<1x10xf32> -> vector<1x10xf32>
    %1066 = arith.addf %1038, %1065 : vector<1x10xf32>
    %1067 = vector.extract_strided_slice %869 {offsets = [0, 0], sizes = [1, 12], strides = [1, 1]} : vector<12x12xf32> to vector<1x12xf32>
    %c0_289 = arith.constant 0 : index
    %c0_290 = arith.constant 0 : index
    %1068 = vector.load %arg13[%c0_289, %c0_290] : memref<1x144xf32, #tpu.memory_space<vmem>>, vector<1x12xf32>
    tpu.vector_store %arg13[%c0_289, %c0_290], %1067 {strides = array<i32>} : memref<1x144xf32, #tpu.memory_space<vmem>>, vector<1x12xf32>,
    %1069 = vector.extract_strided_slice %869 {offsets = [1, 0], sizes = [1, 12], strides = [1, 1]} : vector<12x12xf32> to vector<1x12xf32>
    %c0_291 = arith.constant 0 : index
    %c12_292 = arith.constant 12 : index
    %1070 = vector.load %arg13[%c0_291, %c12_292] : memref<1x144xf32, #tpu.memory_space<vmem>>, vector<1x12xf32>
    tpu.vector_store %arg13[%c0_291, %c12_292], %1069 {strides = array<i32>} : memref<1x144xf32, #tpu.memory_space<vmem>>, vector<1x12xf32>,
    %1071 = vector.extract_strided_slice %869 {offsets = [2, 0], sizes = [1, 12], strides = [1, 1]} : vector<12x12xf32> to vector<1x12xf32>
    %c0_293 = arith.constant 0 : index
    %c24_294 = arith.constant 24 : index
    %1072 = vector.load %arg13[%c0_293, %c24_294] : memref<1x144xf32, #tpu.memory_space<vmem>>, vector<1x12xf32>
    tpu.vector_store %arg13[%c0_293, %c24_294], %1071 {strides = array<i32>} : memref<1x144xf32, #tpu.memory_space<vmem>>, vector<1x12xf32>,
    %1073 = vector.extract_strided_slice %869 {offsets = [3, 0], sizes = [1, 12], strides = [1, 1]} : vector<12x12xf32> to vector<1x12xf32>
    %c0_295 = arith.constant 0 : index
    %c36_296 = arith.constant 36 : index
    %1074 = vector.load %arg13[%c0_295, %c36_296] : memref<1x144xf32, #tpu.memory_space<vmem>>, vector<1x12xf32>
    tpu.vector_store %arg13[%c0_295, %c36_296], %1073 {strides = array<i32>} : memref<1x144xf32, #tpu.memory_space<vmem>>, vector<1x12xf32>,
    %1075 = vector.extract_strided_slice %869 {offsets = [4, 0], sizes = [1, 12], strides = [1, 1]} : vector<12x12xf32> to vector<1x12xf32>
    %c0_297 = arith.constant 0 : index
    %c48_298 = arith.constant 48 : index
    %1076 = vector.load %arg13[%c0_297, %c48_298] : memref<1x144xf32, #tpu.memory_space<vmem>>, vector<1x12xf32>
    tpu.vector_store %arg13[%c0_297, %c48_298], %1075 {strides = array<i32>} : memref<1x144xf32, #tpu.memory_space<vmem>>, vector<1x12xf32>,
    %1077 = vector.extract_strided_slice %869 {offsets = [5, 0], sizes = [1, 12], strides = [1, 1]} : vector<12x12xf32> to vector<1x12xf32>
    %c0_299 = arith.constant 0 : index
    %c60_300 = arith.constant 60 : index
    %1078 = vector.load %arg13[%c0_299, %c60_300] : memref<1x144xf32, #tpu.memory_space<vmem>>, vector<1x12xf32>
    tpu.vector_store %arg13[%c0_299, %c60_300], %1077 {strides = array<i32>} : memref<1x144xf32, #tpu.memory_space<vmem>>, vector<1x12xf32>,
    %1079 = vector.extract_strided_slice %869 {offsets = [6, 0], sizes = [1, 12], strides = [1, 1]} : vector<12x12xf32> to vector<1x12xf32>
    %c0_301 = arith.constant 0 : index
    %c72_302 = arith.constant 72 : index
    %1080 = vector.load %arg13[%c0_301, %c72_302] : memref<1x144xf32, #tpu.memory_space<vmem>>, vector<1x12xf32>
    tpu.vector_store %arg13[%c0_301, %c72_302], %1079 {strides = array<i32>} : memref<1x144xf32, #tpu.memory_space<vmem>>, vector<1x12xf32>,
    %1081 = vector.extract_strided_slice %869 {offsets = [7, 0], sizes = [1, 12], strides = [1, 1]} : vector<12x12xf32> to vector<1x12xf32>
    %c0_303 = arith.constant 0 : index
    %c84_304 = arith.constant 84 : index
    %1082 = vector.load %arg13[%c0_303, %c84_304] : memref<1x144xf32, #tpu.memory_space<vmem>>, vector<1x12xf32>
    tpu.vector_store %arg13[%c0_303, %c84_304], %1081 {strides = array<i32>} : memref<1x144xf32, #tpu.memory_space<vmem>>, vector<1x12xf32>,
    %1083 = vector.extract_strided_slice %869 {offsets = [8, 0], sizes = [1, 12], strides = [1, 1]} : vector<12x12xf32> to vector<1x12xf32>
    %c0_305 = arith.constant 0 : index
    %c96_306 = arith.constant 96 : index
    %1084 = vector.load %arg13[%c0_305, %c96_306] : memref<1x144xf32, #tpu.memory_space<vmem>>, vector<1x12xf32>
    tpu.vector_store %arg13[%c0_305, %c96_306], %1083 {strides = array<i32>} : memref<1x144xf32, #tpu.memory_space<vmem>>, vector<1x12xf32>,
    %1085 = vector.extract_strided_slice %869 {offsets = [9, 0], sizes = [1, 12], strides = [1, 1]} : vector<12x12xf32> to vector<1x12xf32>
    %c0_307 = arith.constant 0 : index
    %c108_308 = arith.constant 108 : index
    %1086 = vector.load %arg13[%c0_307, %c108_308] : memref<1x144xf32, #tpu.memory_space<vmem>>, vector<1x12xf32>
    tpu.vector_store %arg13[%c0_307, %c108_308], %1085 {strides = array<i32>} : memref<1x144xf32, #tpu.memory_space<vmem>>, vector<1x12xf32>,
    %1087 = vector.extract_strided_slice %869 {offsets = [10, 0], sizes = [1, 12], strides = [1, 1]} : vector<12x12xf32> to vector<1x12xf32>
    %c0_309 = arith.constant 0 : index
    %c120_310 = arith.constant 120 : index
    %1088 = vector.load %arg13[%c0_309, %c120_310] : memref<1x144xf32, #tpu.memory_space<vmem>>, vector<1x12xf32>
    tpu.vector_store %arg13[%c0_309, %c120_310], %1087 {strides = array<i32>} : memref<1x144xf32, #tpu.memory_space<vmem>>, vector<1x12xf32>,
    %1089 = vector.extract_strided_slice %869 {offsets = [11, 0], sizes = [1, 12], strides = [1, 1]} : vector<12x12xf32> to vector<1x12xf32>
    %c0_311 = arith.constant 0 : index
    %c132_312 = arith.constant 132 : index
    %1090 = vector.load %arg13[%c0_311, %c132_312] : memref<1x144xf32, #tpu.memory_space<vmem>>, vector<1x12xf32>
    tpu.vector_store %arg13[%c0_311, %c132_312], %1089 {strides = array<i32>} : memref<1x144xf32, #tpu.memory_space<vmem>>, vector<1x12xf32>,
    %c1008 = arith.constant 1008 : index
    %c0_313 = arith.constant 0 : index
    %1091 = vector.load %arg10[%c1008, %c0_313] : memref<1152x10xf32, #tpu.memory_space<vmem>>, vector<144x10xf32>
    %c0_314 = arith.constant 0 : index
    %c0_315 = arith.constant 0 : index
    %1092 = vector.load %arg13[%c0_314, %c0_315] : memref<1x144xf32, #tpu.memory_space<vmem>>, vector<1x144xf32>
    %cst_316 = arith.constant dense<0.000000e+00> : vector<1x10xf32>
    %1093 = tpu.matmul %1092, %1091, %cst_316 {dimension_numbers = #tpu.dot_dimension_numbers<[1], [0], [0], [1], [0, 0, 1, 1], [], []>} : vector<1x144xf32>, vector<144x10xf32>, vector<1x10xf32> -> vector<1x10xf32>
    %1094 = arith.addf %1066, %1093 : vector<1x10xf32>
    %c0_317 = arith.constant 0 : index
    %c0_318 = arith.constant 0 : index
    %c0_319 = arith.constant 0 : index
    %1095 = vector.load %arg12[%c0_317, %c0_318, %c0_319] : memref<1x1x10xf32, #tpu.memory_space<vmem>>, vector<1x1x10xf32>
    %1096 = vector.shape_cast %1095 : vector<1x1x10xf32> to vector<1x10xf32>
    %1097 = vector.shape_cast %1094 : vector<1x10xf32> to vector<1x1x10xf32>
    tpu.vector_store %arg12[%c0_317, %c0_318, %c0_319], %1097 {strides = array<i32>} : memref<1x1x10xf32, #tpu.memory_space<vmem>>, vector<1x1x10xf32>,
    return
  }
  func.func @transform_0(%arg0: i32) -> (i32, i32, i32, i32) {
    %c0_i32 = arith.constant 0 : i32
    %c0_i32_0 = arith.constant 0 : i32
    %c0_i32_1 = arith.constant 0 : i32
    %c0_i32_2 = arith.constant 0 : i32
    return %arg0, %c0_i32, %c0_i32_0, %c0_i32_1 : i32, i32, i32, i32
  }
  func.func @transform_1(%arg0: i32) -> i32 {
    %c0_i32 = arith.constant 0 : i32
    %c0_i32_0 = arith.constant 0 : i32
    return %c0_i32 : i32
  }
  func.func @transform_2(%arg0: i32) -> i32 {
    %c0_i32 = arith.constant 0 : i32
    %c0_i32_0 = arith.constant 0 : i32
    return %c0_i32 : i32
  }
  func.func @transform_3(%arg0: i32) -> i32 {
    %c0_i32 = arith.constant 0 : i32
    %c0_i32_0 = arith.constant 0 : i32
    return %c0_i32 : i32
  }
  func.func @transform_4(%arg0: i32) -> i32 {
    %c0_i32 = arith.constant 0 : i32
    %c0_i32_0 = arith.constant 0 : i32
    return %c0_i32 : i32
  }
  func.func @transform_5(%arg0: i32) -> (i32, i32) {
    %c0_i32 = arith.constant 0 : i32
    %c0_i32_0 = arith.constant 0 : i32
    %c0_i32_1 = arith.constant 0 : i32
    return %c0_i32, %c0_i32_0 : i32, i32
  }
  func.func @transform_6(%arg0: i32) -> (i32, i32) {
    %c0_i32 = arith.constant 0 : i32
    %c0_i32_0 = arith.constant 0 : i32
    %c0_i32_1 = arith.constant 0 : i32
    return %c0_i32, %c0_i32_0 : i32, i32
  }
  func.func @transform_7(%arg0: i32) -> (i32, i32) {
    %c0_i32 = arith.constant 0 : i32
    %c0_i32_0 = arith.constant 0 : i32
    %c0_i32_1 = arith.constant 0 : i32
    return %c0_i32, %c0_i32_0 : i32, i32
  }
  func.func @transform_8(%arg0: i32) -> (i32, i32) {
    %c0_i32 = arith.constant 0 : i32
    %c0_i32_0 = arith.constant 0 : i32
    %c0_i32_1 = arith.constant 0 : i32
    return %c0_i32, %c0_i32_0 : i32, i32
  }
  func.func @transform_9(%arg0: i32) -> (i32, i32) {
    %c0_i32 = arith.constant 0 : i32
    %c0_i32_0 = arith.constant 0 : i32
    %c0_i32_1 = arith.constant 0 : i32
    return %c0_i32, %c0_i32_0 : i32, i32
  }
  func.func @transform_10(%arg0: i32) -> (i32, i32) {
    %c0_i32 = arith.constant 0 : i32
    %c0_i32_0 = arith.constant 0 : i32
    %c0_i32_1 = arith.constant 0 : i32
    return %c0_i32, %c0_i32_0 : i32, i32
  }
  func.func @transform_11(%arg0: i32) -> (i32, i32, i32) {
    %c0_i32 = arith.constant 0 : i32
    %c0_i32_0 = arith.constant 0 : i32
    %c0_i32_1 = arith.constant 0 : i32
    return %arg0, %c0_i32, %c0_i32_0 : i32, i32, i32
  }
}

</mosaic_0001>

<llo_original>
// kernel: _forward_impl.1
$region0: #{_forward_impl.1}
  #allocation0 [shape = 'u32[]', space=smem, size = 0x4, offset = 0x4, fixed_abs, tag = 'smem constant byte address 0x4 - core index']
  #allocation1 [shape = 'u32[72,128]{1,0:T(1,128)}', space=vmem, size = 0x9000, scoped, tag = 'internal scratch']
  #allocation2 [shape = 'f32[1,144]{1,0:T(1,128)}', space=vmem, size = 0x400, scoped, tag = 'scratch operand']
  %s0 = inlined_call_operand.vmem [shape: f32[2,1,28,28], index: 0, kind: input, shape index: {}]
  %s1 = inlined_call_operand.vmem [shape: f32[16], index: 1, kind: input, shape index: {}]
  %s2 = inlined_call_operand.vmem [shape: f32[4], index: 2, kind: input, shape index: {}]
  %s3 = inlined_call_operand.vmem [shape: f32[128], index: 3, kind: input, shape index: {}]
  %s4 = inlined_call_operand.vmem [shape: f32[8], index: 4, kind: input, shape index: {}]
  %s5 = inlined_call_operand.vmem [shape: f32[13,27], index: 5, kind: input, shape index: {}]
  %s6 = inlined_call_operand.vmem [shape: f32[13,27], index: 6, kind: input, shape index: {}]
  %s7 = inlined_call_operand.vmem [shape: f32[27,13], index: 7, kind: input, shape index: {}]
  %s8 = inlined_call_operand.vmem [shape: f32[27,13], index: 8, kind: input, shape index: {}]
  %s9 = inlined_call_operand.vmem [shape: f32[1152,10], index: 9, kind: input, shape index: {}]
  %s10 = inlined_call_operand.vmem [shape: f32[1,10], index: 10, kind: input, shape index: {}]
  %s11 = inlined_call_operand.hbm [shape: f32[2,1,10], index: 11, kind: output, shape index: {}]
  %s12 = sld [smem:[#allocation0]]
  $region93: #{_forward_impl.1} parent=0
    _
  %s14 = ssub.s32 1, %s12
  %s15 = scalar_select 0, %s14, %s12
  $region1: #{_forward_impl.1} parent=0
    #allocation3 [shape = 'u8[512]{0}', space=smem, size = 0x200, scoped, tag = 'input window, operand 1, single buffered']
    #allocation4 [shape = 's32[2]{0}', space=sflag, size = 0x8, scoped, tag = 'scoped memory for _forward_impl.1']
    #allocation5 [shape = 's32[2]{0}', space=sflag, size = 0x8, scoped, tag = 'scoped memory for _forward_impl.1']
    #allocation6 [shape = 'u8[512]{0}', space=smem, size = 0x200, scoped, tag = 'input window, operand 2, single buffered']
    #allocation7 [shape = 's32[1]{0}', space=sflag, size = 0x4, scoped, tag = 'scoped memory for _forward_impl.1']
    #allocation8 [shape = 'u8[512]{0}', space=smem, size = 0x200, scoped, tag = 'input window, operand 3, single buffered']
    #allocation9 [shape = 'u8[512]{0}', space=smem, size = 0x200, scoped, tag = 'input window, operand 4, single buffered']
    #allocation10 [shape = 's32[1]{0}', space=sflag, size = 0x4, scoped, tag = 'scoped memory for _forward_impl.1']
    #allocation11 [shape = 'u8[1024]{0}', space=vmem, size = 0x400, scoped, tag = 'output window, operand 0']
    %16 = vsyncpa [#allocation5], 0
    %17 = vsyncpa [#allocation7], 0
    %18 = vsyncpa [#allocation10], 0
    %19 = vsyncpa [#allocation4], 0
    %s20 = scalar_lea.sflag [#allocation4], 1
    %21 = vsyncpa %s20, 0
    loop: start=0, step=1, limit=4
    $region2: #{_forward_impl.1} parent=1 // loop_pre_header
      _
    $region3: #{_forward_impl.1} parent=1 // loop_header
      %s23 = sphi 0, %s27
      %p24 = scmp.ge.s32.totalorder %s23, 4
      %s33 = sphi 0, %s35
      %s36 = sphi 0, %s33
      %s37 = sphi 0, %s36
      %s53 = sphi 0, %s37
      %s57 = sphi 0, %s57
      %s59 = sphi 0, %s57
      %s60 = sphi 0, %s59
      %s74 = sphi 0, %s60
      %s78 = sphi 0, %s78
      %s80 = sphi 0, %s78
      %s81 = sphi 0, %s80
      %s95 = sphi 0, %s81
      %s99 = sphi 0, %s99
      %s101 = sphi 0, %s99
      %s102 = sphi 0, %s101
      %s116 = sphi 0, %s102
      %s120 = sphi 0, %s120
      %s122 = sphi 0, %s120
      %s123 = sphi 0, %s122
      %s137 = sphi 0, %s123
      %s141 = sphi 0, %s141
      %s143 = sphi 0, %s141
      %s144 = sphi 0, %s143
      %s158 = sphi 0, %s144
      %s162 = sphi 0, %s162
      %s164 = sphi 0, %s162
      %s165 = sphi 0, %s164
      %s179 = sphi 0, %s165
      %s183 = sphi 0, %s183
      %s185 = sphi 0, %s183
      %s186 = sphi 0, %s185
      %s200 = sphi 0, %s186
      %s204 = sphi 0, %s204
      %s206 = sphi 0, %s204
      %s207 = sphi 0, %s206
      %s221 = sphi 0, %s207
      %s225 = sphi 0, %s225
      %s227 = sphi 0, %s225
      %s228 = sphi 0, %s227
      %s242 = sphi 0, %s228
      %s246 = sphi 0, %s246
      %s248 = sphi 0, %s246
      %s249 = sphi 0, %s248
      %s263 = sphi 0, %s249
      %s269 = sphi 0, %s271
      %s272 = sphi 0, %s269
      %s273 = sphi 0, %s272
      %s289 = sphi 0, %s273
    $region4: #{_forward_impl.1} parent=1 // loop_header_branch
      %26 = sbr.rel (%p24) target = $region8
    $region5: #{_forward_impl.1} parent=1 // loop_body
      %s28 = ssub.s32 %s23, 1
      %s29 = ssub.s32 %s23, 2
      %s30 = sadd.s32 %s23, 1
      %s31 = ssub.s32 %s23, %s30
      %p32 = scmp.eq.s32.totalorder %s31, 0
      %s34 = sadd.s32 %s33, 1
      %s35 = scalar_select %p32, %s33, %s34
      %p38 = pneg %p32
      %p39 = scmp.eq.s32.totalorder %s23, 1
      %p40 = por %p38, %p39
      %p41 = scmp.ne.s32.totalorder %s33, %s36
      %p42 = scmp.eq.s32.totalorder %s23, 0
      %p43 = por %p41, %p42
      %p44 = scmp.ne.s32.totalorder %s33, %s36
      %p45 = scmp.eq.s32.totalorder %s28, 1
      %p46 = por %p44, %p45
      %p47 = scmp.ne.s32.totalorder %s36, %s37
      %p48 = scmp.eq.s32.totalorder %s28, 0
      %p49 = por %p47, %p48
      %p50 = scmp.ne.s32.totalorder %s36, %s37
      %p51 = scmp.eq.s32.totalorder %s29, 1
      %p52 = por %p50, %p51
      %p54 = scmp.ne.s32.totalorder %s37, %s53
      %p55 = scmp.eq.s32.totalorder %s29, 0
      %p56 = por %p54, %p55
      %s58 = sadd.s32 %s57, 1
      %p61 = scmp.eq.s32.totalorder %s23, 1
      %p62 = scmp.ne.s32.totalorder %s57, %s59
      %p63 = scmp.eq.s32.totalorder %s23, 0
      %p64 = por %p62, %p63
      %p65 = scmp.ne.s32.totalorder %s57, %s59
      %p66 = scmp.eq.s32.totalorder %s28, 1
      %p67 = por %p65, %p66
      %p68 = scmp.ne.s32.totalorder %s59, %s60
      %p69 = scmp.eq.s32.totalorder %s28, 0
      %p70 = por %p68, %p69
      %p71 = scmp.ne.s32.totalorder %s59, %s60
      %p72 = scmp.eq.s32.totalorder %s29, 1
      %p73 = por %p71, %p72
      %p75 = scmp.ne.s32.totalorder %s60, %s74
      %p76 = scmp.eq.s32.totalorder %s29, 0
      %p77 = por %p75, %p76
      %s79 = sadd.s32 %s78, 1
      %p82 = scmp.eq.s32.totalorder %s23, 1
      %p83 = scmp.ne.s32.totalorder %s78, %s80
      %p84 = scmp.eq.s32.totalorder %s23, 0
      %p85 = por %p83, %p84
      %p86 = scmp.ne.s32.totalorder %s78, %s80
      %p87 = scmp.eq.s32.totalorder %s28, 1
      %p88 = por %p86, %p87
      %p89 = scmp.ne.s32.totalorder %s80, %s81
      %p90 = scmp.eq.s32.totalorder %s28, 0
      %p91 = por %p89, %p90
      %p92 = scmp.ne.s32.totalorder %s80, %s81
      %p93 = scmp.eq.s32.totalorder %s29, 1
      %p94 = por %p92, %p93
      %p96 = scmp.ne.s32.totalorder %s81, %s95
      %p97 = scmp.eq.s32.totalorder %s29, 0
      %p98 = por %p96, %p97
      %s100 = sadd.s32 %s99, 1
      %p103 = scmp.eq.s32.totalorder %s23, 1
      %p104 = scmp.ne.s32.totalorder %s99, %s101
      %p105 = scmp.eq.s32.totalorder %s23, 0
      %p106 = por %p104, %p105
      %p107 = scmp.ne.s32.totalorder %s99, %s101
      %p108 = scmp.eq.s32.totalorder %s28, 1
      %p109 = por %p107, %p108
      %p110 = scmp.ne.s32.totalorder %s101, %s102
      %p111 = scmp.eq.s32.totalorder %s28, 0
      %p112 = por %p110, %p111
      %p113 = scmp.ne.s32.totalorder %s101, %s102
      %p114 = scmp.eq.s32.totalorder %s29, 1
      %p115 = por %p113, %p114
      %p117 = scmp.ne.s32.totalorder %s102, %s116
      %p118 = scmp.eq.s32.totalorder %s29, 0
      %p119 = por %p117, %p118
      %s121 = sadd.s32 %s120, 1
      %p124 = scmp.eq.s32.totalorder %s23, 1
      %p125 = scmp.ne.s32.totalorder %s120, %s122
      %p126 = scmp.eq.s32.totalorder %s23, 0
      %p127 = por %p125, %p126
      %p128 = scmp.ne.s32.totalorder %s120, %s122
      %p129 = scmp.eq.s32.totalorder %s28, 1
      %p130 = por %p128, %p129
      %p131 = scmp.ne.s32.totalorder %s122, %s123
      %p132 = scmp.eq.s32.totalorder %s28, 0
      %p133 = por %p131, %p132
      %p134 = scmp.ne.s32.totalorder %s122, %s123
      %p135 = scmp.eq.s32.totalorder %s29, 1
      %p136 = por %p134, %p135
      %p138 = scmp.ne.s32.totalorder %s123, %s137
      %p139 = scmp.eq.s32.totalorder %s29, 0
      %p140 = por %p138, %p139
      %s142 = sadd.s32 %s141, 1
      %p145 = scmp.eq.s32.totalorder %s23, 1
      %p146 = scmp.ne.s32.totalorder %s141, %s143
      %p147 = scmp.eq.s32.totalorder %s23, 0
      %p148 = por %p146, %p147
      %p149 = scmp.ne.s32.totalorder %s141, %s143
      %p150 = scmp.eq.s32.totalorder %s28, 1
      %p151 = por %p149, %p150
      %p152 = scmp.ne.s32.totalorder %s143, %s144
      %p153 = scmp.eq.s32.totalorder %s28, 0
      %p154 = por %p152, %p153
      %p155 = scmp.ne.s32.totalorder %s143, %s144
      %p156 = scmp.eq.s32.totalorder %s29, 1
      %p157 = por %p155, %p156
      %p159 = scmp.ne.s32.totalorder %s144, %s158
      %p160 = scmp.eq.s32.totalorder %s29, 0
      %p161 = por %p159, %p160
      %s163 = sadd.s32 %s162, 1
      %p166 = scmp.eq.s32.totalorder %s23, 1
      %p167 = scmp.ne.s32.totalorder %s162, %s164
      %p168 = scmp.eq.s32.totalorder %s23, 0
      %p169 = por %p167, %p168
      %p170 = scmp.ne.s32.totalorder %s162, %s164
      %p171 = scmp.eq.s32.totalorder %s28, 1
      %p172 = por %p170, %p171
      %p173 = scmp.ne.s32.totalorder %s164, %s165
      %p174 = scmp.eq.s32.totalorder %s28, 0
      %p175 = por %p173, %p174
      %p176 = scmp.ne.s32.totalorder %s164, %s165
      %p177 = scmp.eq.s32.totalorder %s29, 1
      %p178 = por %p176, %p177
      %p180 = scmp.ne.s32.totalorder %s165, %s179
      %p181 = scmp.eq.s32.totalorder %s29, 0
      %p182 = por %p180, %p181
      %s184 = sadd.s32 %s183, 1
      %p187 = scmp.eq.s32.totalorder %s23, 1
      %p188 = scmp.ne.s32.totalorder %s183, %s185
      %p189 = scmp.eq.s32.totalorder %s23, 0
      %p190 = por %p188, %p189
      %p191 = scmp.ne.s32.totalorder %s183, %s185
      %p192 = scmp.eq.s32.totalorder %s28, 1
      %p193 = por %p191, %p192
      %p194 = scmp.ne.s32.totalorder %s185, %s186
      %p195 = scmp.eq.s32.totalorder %s28, 0
      %p196 = por %p194, %p195
      %p197 = scmp.ne.s32.totalorder %s185, %s186
      %p198 = scmp.eq.s32.totalorder %s29, 1
      %p199 = por %p197, %p198
      %p201 = scmp.ne.s32.totalorder %s186, %s200
      %p202 = scmp.eq.s32.totalorder %s29, 0
      %p203 = por %p201, %p202
      %s205 = sadd.s32 %s204, 1
      %p208 = scmp.eq.s32.totalorder %s23, 1
      %p209 = scmp.ne.s32.totalorder %s204, %s206
      %p210 = scmp.eq.s32.totalorder %s23, 0
      %p211 = por %p209, %p210
      %p212 = scmp.ne.s32.totalorder %s204, %s206
      %p213 = scmp.eq.s32.totalorder %s28, 1
      %p214 = por %p212, %p213
      %p215 = scmp.ne.s32.totalorder %s206, %s207
      %p216 = scmp.eq.s32.totalorder %s28, 0
      %p217 = por %p215, %p216
      %p218 = scmp.ne.s32.totalorder %s206, %s207
      %p219 = scmp.eq.s32.totalorder %s29, 1
      %p220 = por %p218, %p219
      %p222 = scmp.ne.s32.totalorder %s207, %s221
      %p223 = scmp.eq.s32.totalorder %s29, 0
      %p224 = por %p222, %p223
      %s226 = sadd.s32 %s225, 1
      %p229 = scmp.eq.s32.totalorder %s23, 1
      %p230 = scmp.ne.s32.totalorder %s225, %s227
      %p231 = scmp.eq.s32.totalorder %s23, 0
      %p232 = por %p230, %p231
      %p233 = scmp.ne.s32.totalorder %s225, %s227
      %p234 = scmp.eq.s32.totalorder %s28, 1
      %p235 = por %p233, %p234
      %p236 = scmp.ne.s32.totalorder %s227, %s228
      %p237 = scmp.eq.s32.totalorder %s28, 0
      %p238 = por %p236, %p237
      %p239 = scmp.ne.s32.totalorder %s227, %s228
      %p240 = scmp.eq.s32.totalorder %s29, 1
      %p241 = por %p239, %p240
      %p243 = scmp.ne.s32.totalorder %s228, %s242
      %p244 = scmp.eq.s32.totalorder %s29, 0
      %p245 = por %p243, %p244
      %s247 = sadd.s32 %s246, 1
      %p250 = scmp.eq.s32.totalorder %s23, 1
      %p251 = scmp.ne.s32.totalorder %s246, %s248
      %p252 = scmp.eq.s32.totalorder %s23, 0
      %p253 = por %p251, %p252
      %p254 = scmp.ne.s32.totalorder %s246, %s248
      %p255 = scmp.eq.s32.totalorder %s28, 1
      %p256 = por %p254, %p255
      %p257 = scmp.ne.s32.totalorder %s248, %s249
      %p258 = scmp.eq.s32.totalorder %s28, 0
      %p259 = por %p257, %p258
      %p260 = scmp.ne.s32.totalorder %s248, %s249
      %p261 = scmp.eq.s32.totalorder %s29, 1
      %p262 = por %p260, %p261
      %p264 = scmp.ne.s32.totalorder %s249, %s263
      %p265 = scmp.eq.s32.totalorder %s29, 0
      %p266 = por %p264, %p265
      %s267 = ssub.s32 %s23, %s30
      %p268 = scmp.eq.s32.totalorder %s267, 0
      %s270 = sadd.s32 %s269, 1
      %s271 = scalar_select %p268, %s269, %s270
      %p274 = pneg %p268
      %p275 = scmp.eq.s32.totalorder %s23, 1
      %p276 = por %p274, %p275
      %p277 = scmp.ne.s32.totalorder %s269, %s272
      %p278 = scmp.eq.s32.totalorder %s23, 0
      %p279 = por %p277, %p278
      %p280 = scmp.ne.s32.totalorder %s269, %s272
      %p281 = scmp.eq.s32.totalorder %s28, 1
      %p282 = por %p280, %p281
      %p283 = scmp.ne.s32.totalorder %s272, %s273
      %p284 = scmp.eq.s32.totalorder %s28, 0
      %p285 = por %p283, %p284
      %p286 = scmp.ne.s32.totalorder %s272, %s273
      %p287 = scmp.eq.s32.totalorder %s29, 1
      %p288 = por %p286, %p287
      %p290 = scmp.ne.s32.totalorder %s273, %s289
      %p291 = scmp.eq.s32.totalorder %s29, 0
      %p292 = por %p290, %p291
      %p293 = scmp.le.s32.totalorder 1, %s23
      %p294 = scmp.lt.s32.totalorder %s23, 3
      %p295 = pnand %p293, %p294
      %p296 = pneg %p295
      // Predicated region
      $region9: #{_forward_impl.1} parent=5 // pred_check
        _
      $region10: #{_forward_impl.1} parent=5 // pred_check_branch
        %298 = sbr.rel (%p295) target = $region12
      $region11: #{_forward_impl.1} parent=5 // pred_region
        %s299 = ssub.s32 %s23, 1
        // Predicated region
        $region13: #{_forward_impl.1} parent=11 // pred_check
          %p300 = pneg %p70
        $region14: #{_forward_impl.1} parent=11 // pred_check_branch
          %302 = sbr.rel (%p300) target = $region16
        $region15: #{_forward_impl.1} parent=11 // pred_region
          %304 = vsyncadd [#allocation5], 0
          %s306 = sshll.u32 %s1, 4
          %s307 = int_to_ptr.vmem [resolvable:$true] %s306
          %309 = dma.vmem_to_smem %s307, 16, [#allocation3], [#allocation5]
        $region16: #{_forward_impl.1} parent=11 // pred_fallthru
          _
        // Predicated region
        $region17: #{_forward_impl.1} parent=11 // pred_check
          %p310 = pneg %p91
        $region18: #{_forward_impl.1} parent=11 // pred_check_branch
          %312 = sbr.rel (%p310) target = $region20
        $region19: #{_forward_impl.1} parent=11 // pred_region
          %314 = vsyncadd [#allocation7], 0
          %s316 = sshll.u32 %s2, 4
          %s317 = int_to_ptr.vmem [resolvable:$true] %s316
          %319 = dma.vmem_to_smem %s317, 16, [#allocation6], [#allocation7]
        $region20: #{_forward_impl.1} parent=11 // pred_fallthru
          _
        // Predicated region
        $region21: #{_forward_impl.1} parent=11 // pred_check
          %p320 = pneg %p112
        $region22: #{_forward_impl.1} parent=11 // pred_check_branch
          %322 = sbr.rel (%p320) target = $region24
        $region23: #{_forward_impl.1} parent=11 // pred_region
          %324 = vsyncadd [#allocation7], 0
          %s326 = sshll.u32 %s3, 4
          %s327 = int_to_ptr.vmem [resolvable:$true] %s326
          %329 = dma.vmem_to_smem %s327, 16, [#allocation8], [#allocation7]
        $region24: #{_forward_impl.1} parent=11 // pred_fallthru
          _
        // Predicated region
        $region25: #{_forward_impl.1} parent=11 // pred_check
          %p330 = pneg %p133
        $region26: #{_forward_impl.1} parent=11 // pred_check_branch
          %332 = sbr.rel (%p330) target = $region28
        $region27: #{_forward_impl.1} parent=11 // pred_region
          %334 = vsyncadd [#allocation10], 0
          %s336 = sshll.u32 %s4, 4
          %s337 = int_to_ptr.vmem [resolvable:$true] %s336
          %339 = dma.vmem_to_smem %s337, 16, [#allocation9], [#allocation10]
        $region28: #{_forward_impl.1} parent=11 // pred_fallthru
          _
        // Predicated region
        $region29: #{_forward_impl.1} parent=11 // pred_check
          %p340 = pneg %p154
        $region30: #{_forward_impl.1} parent=11 // pred_check_branch
          %342 = sbr.rel (%p340) target = $region32
        $region31: #{_forward_impl.1} parent=11 // pred_region
          _
        $region32: #{_forward_impl.1} parent=11 // pred_fallthru
          _
        // Predicated region
        $region33: #{_forward_impl.1} parent=11 // pred_check
          %p343 = pneg %p175
        $region34: #{_forward_impl.1} parent=11 // pred_check_branch
          %345 = sbr.rel (%p343) target = $region36
        $region35: #{_forward_impl.1} parent=11 // pred_region
          _
        $region36: #{_forward_impl.1} parent=11 // pred_fallthru
          _
        // Predicated region
        $region37: #{_forward_impl.1} parent=11 // pred_check
          %p346 = pneg %p196
        $region38: #{_forward_impl.1} parent=11 // pred_check_branch
          %348 = sbr.rel (%p346) target = $region40
        $region39: #{_forward_impl.1} parent=11 // pred_region
          _
        $region40: #{_forward_impl.1} parent=11 // pred_fallthru
          _
        // Predicated region
        $region41: #{_forward_impl.1} parent=11 // pred_check
          %p349 = pneg %p217
        $region42: #{_forward_impl.1} parent=11 // pred_check_branch
          %351 = sbr.rel (%p349) target = $region44
        $region43: #{_forward_impl.1} parent=11 // pred_region
          _
        $region44: #{_forward_impl.1} parent=11 // pred_fallthru
          _
        // Predicated region
        $region45: #{_forward_impl.1} parent=11 // pred_check
          %p352 = pneg %p238
        $region46: #{_forward_impl.1} parent=11 // pred_check_branch
          %354 = sbr.rel (%p352) target = $region48
        $region47: #{_forward_impl.1} parent=11 // pred_region
          _
        $region48: #{_forward_impl.1} parent=11 // pred_fallthru
          _
        // Predicated region
        $region49: #{_forward_impl.1} parent=11 // pred_check
          %p355 = pneg %p259
        $region50: #{_forward_impl.1} parent=11 // pred_check_branch
          %357 = sbr.rel (%p355) target = $region52
        $region51: #{_forward_impl.1} parent=11 // pred_region
          _
        $region52: #{_forward_impl.1} parent=11 // pred_fallthru
          _
      $region12: #{_forward_impl.1} parent=5 // pred_fallthru
        _
      %p358 = scmp.lt.s32.totalorder %s23, 2
      // Predicated region
      $region53: #{_forward_impl.1} parent=5 // pred_check
        %p359 = pneg %p358
      $region54: #{_forward_impl.1} parent=5 // pred_check_branch
        %361 = sbr.rel (%p359) target = $region56
      $region55: #{_forward_impl.1} parent=5 // pred_region
        // Predicated region
        $region57: #{_forward_impl.1} parent=55 // pred_check
          %p362 = pneg %p43
        $region58: #{_forward_impl.1} parent=55 // pred_check_branch
          %364 = sbr.rel (%p362) target = $region60
        $region59: #{_forward_impl.1} parent=55 // pred_region
          %p365 = scmp.lt.s32.totalorder %s23, 1
          %s366 = scalar_select %p365, %s23, 1
          %s367 = smul.addr %s366, 4
          %s368 = smul.addr %s367, 8
          %s369 = scalar_lea.vmem %s0, %s368
        $region60: #{_forward_impl.1} parent=55 // pred_fallthru
          _
      $region56: #{_forward_impl.1} parent=5 // pred_fallthru
        _
      %p370 = scmp.le.s32.totalorder 1, %s23
      %p371 = scmp.lt.s32.totalorder %s23, 3
      %p372 = pnand %p370, %p371
      %p373 = pneg %p372
      // Predicated region
      $region61: #{_forward_impl.1} parent=5 // pred_check
        _
      $region62: #{_forward_impl.1} parent=5 // pred_check_branch
        %375 = sbr.rel (%p372) target = $region64
      $region63: #{_forward_impl.1} parent=5 // pred_region
        %s376 = ssub.s32 %s23, 1
        // Predicated region
        $region65: #{_forward_impl.1} parent=63 // pred_check
          %p377 = pneg %p70
        $region66: #{_forward_impl.1} parent=63 // pred_check_branch
          %379 = sbr.rel (%p377) target = $region68
        $region67: #{_forward_impl.1} parent=63 // pred_region
          %381 = dma.done [#allocation5], 16
        $region68: #{_forward_impl.1} parent=63 // pred_fallthru
          _
        // Predicated region
        $region69: #{_forward_impl.1} parent=63 // pred_check
          %p382 = pneg %p91
        $region70: #{_forward_impl.1} parent=63 // pred_check_branch
          %384 = sbr.rel (%p382) target = $region72
        $region71: #{_forward_impl.1} parent=63 // pred_region
          %386 = dma.done [#allocation7], 16
        $region72: #{_forward_impl.1} parent=63 // pred_fallthru
          _
        // Predicated region
        $region73: #{_forward_impl.1} parent=63 // pred_check
          %p387 = pneg %p112
        $region74: #{_forward_impl.1} parent=63 // pred_check_branch
          %389 = sbr.rel (%p387) target = $region76
        $region75: #{_forward_impl.1} parent=63 // pred_region
          %391 = dma.done [#allocation7], 16
        $region76: #{_forward_impl.1} parent=63 // pred_fallthru
          _
        // Predicated region
        $region77: #{_forward_impl.1} parent=63 // pred_check
          %p392 = pneg %p133
        $region78: #{_forward_impl.1} parent=63 // pred_check_branch
          %394 = sbr.rel (%p392) target = $region80
        $region79: #{_forward_impl.1} parent=63 // pred_region
          %396 = dma.done [#allocation10], 16
        $region80: #{_forward_impl.1} parent=63 // pred_fallthru
          _
        %397 = sfence
        %p398 = scmp.lt.s32.totalorder %s28, 1
        %s399 = scalar_select %p398, %s28, 1
        %s400 = smul.addr %s399, 4
        %s401 = smul.addr %s400, 8
        %s402 = scalar_lea.vmem %s0, %s401
        %p403 = pneg %p49
        %p404 = pneg %p46
        %p405 = pneg %p70
        %p406 = pneg %p67
        %p407 = pneg %p91
        %p408 = pneg %p88
        %p409 = pneg %p112
        %p410 = pneg %p109
        %p411 = pneg %p133
        %p412 = pneg %p130
        %p413 = pneg %p154
        %p414 = pneg %p151
        %p415 = pneg %p175
        %p416 = pneg %p172
        %p417 = pneg %p196
        %p418 = pneg %p193
        %p419 = pneg %p217
        %p420 = pneg %p214
        %p421 = pneg %p238
        %p422 = pneg %p235
        %p423 = pneg %p259
        %p424 = pneg %p256
        %p425 = pneg %p285
        %p426 = pneg %p282
        %s427 = sand.u32 %s272, 1
        %s428 = scalar_lea.sflag [#allocation4], %s427
        %s429 = sand.u32 %s272, 1
        %s430 = scalar_lea.vmem [#allocation11], %s429
        %p431 = scmp.lt.s32.totalorder %s28, 1
        %s432 = scalar_select %p431, %s28, 1
        %s433 = smul.addr %s432, 4
        %s434 = smul.addr %s433, 8
        %s435 = scalar_lea.vmem %s0, %s434
        %v436 = vld [vmem:[%s5] sm:$0xff]
        %v437 = vld [vmem:[%s5 + $0x8] sm:$0x1f]
        %v438 = vld [vmem:[%s6] sm:$0xff]
        %v439 = vld [vmem:[%s6 + $0x8] sm:$0x1f]
        %v440 = vld [vmem:[%s7] sm:$0xff]
        %v441 = vld [vmem:[%s7 + $0x8] sm:$0xff]
        %v442 = vld [vmem:[%s7 + $0x10] sm:$0xff]
        %v443 = vld [vmem:[%s7 + $0x18] sm:$0x7]
        %v444 = vld [vmem:[%s8] sm:$0xff]
        %v445 = vld [vmem:[%s8 + $0x8] sm:$0xff]
        %v446 = vld [vmem:[%s8 + $0x10] sm:$0xff]
        %v447 = vld [vmem:[%s8 + $0x18] sm:$0x7]
        %v448 = vld [vmem:[%s435] sm:$0xff]
        %v449 = vld [vmem:[%s435 + $0x8] sm:$0xff]
        %v450 = vld [vmem:[%s435 + $0x10] sm:$0xff]
        %v451 = vld [vmem:[%s435 + $0x18] sm:$0xf]
        %s452 = sld [smem:[#allocation6]]
        %v453 = vstv %s452
        %v454 = vadd.f32 %v453, 0.0
        %s455 = sld [smem:[#allocation3]]
        %v456 = vstv %s455
        %v457 = vmul.f32 %v456, %v448
        %v458 = vmul.f32 %v456, %v449
        %v459 = vmul.f32 %v456, %v450
        %v460 = vmul.f32 %v456, %v451
        %v461 = vadd.f32 %v454, %v457
        %v462 = vadd.f32 %v454, %v458
        %v463 = vadd.f32 %v454, %v459
        %v464 = vadd.f32 %v454, %v460
        %s465 = sld [smem:[#allocation3 + $0x1]]
        %v466 = vstv %s465
        %v467 = vmul.f32 %v466, %v448
        %v468 = vmul.f32 %v466, %v449
        %v469 = vmul.f32 %v466, %v450
        %v470 = vmul.f32 %v466, %v451
        %475 = vrot.lane.b32.xlu0 %v467, 127
        %v476 = vpop.permute.xlu0 %475
        %477 = vrot.lane.b32.xlu0 %v468, 127
        %v478 = vpop.permute.xlu0 %477
        %479 = vrot.lane.b32.xlu0 %v469, 127
        %v480 = vpop.permute.xlu0 %479
        %481 = vrot.lane.b32.xlu0 %v470, 127
        %v482 = vpop.permute.xlu0 %481
        %v487 = vadd.f32 %v461, %v476
        %v488 = vadd.f32 %v462, %v478
        %v489 = vadd.f32 %v463, %v480
        %v490 = vadd.f32 %v464, %v482
        %s491 = sld [smem:[#allocation3 + $0x2]]
        %v492 = vstv %s491
        %v493 = vmul.f32 %v492, %v448
        %v494 = vmul.f32 %v492, %v449
        %v495 = vmul.f32 %v492, %v450
        %v496 = vmul.f32 %v492, %v451
        %vm501 = vcmask 1046528
        %v502 = vrot.slane %v493, 1
        %v503 = vrot.slane %v494, 1
        %v504 = vsel %vm501, %v502, %v503
        %v505 = vrot.slane %v495, 1
        %v506 = vsel %vm501, %v503, %v505
        %v507 = vrot.slane %v496, 1
        %v508 = vsel %vm501, %v505, %v507
        %v513 = vadd.f32 %v487, %v504
        %v514 = vadd.f32 %v488, %v506
        %v515 = vadd.f32 %v489, %v508
        %v516 = vadd.f32 %v490, %v507
        %s517 = sld [smem:[#allocation3 + $0x3]]
        %v518 = vstv %s517
        %v519 = vmul.f32 %v518, %v448
        %v520 = vmul.f32 %v518, %v449
        %v521 = vmul.f32 %v518, %v450
        %v522 = vmul.f32 %v518, %v451
        %v527 = vrot.slane %v519, 1
        %v528 = vrot.slane %v520, 1
        %v529 = vsel %vm501, %v527, %v528
        %v530 = vrot.slane %v521, 1
        %v531 = vsel %vm501, %v528, %v530
        %v532 = vrot.slane %v522, 1
        %v533 = vsel %vm501, %v530, %v532
        %534 = vrot.lane.b32.xlu0 %v529, 127
        %v535 = vpop.permute.xlu0 %534
        %536 = vrot.lane.b32.xlu0 %v531, 127
        %v537 = vpop.permute.xlu0 %536
        %538 = vrot.lane.b32.xlu0 %v533, 127
        %v539 = vpop.permute.xlu0 %538
        %540 = vrot.lane.b32.xlu0 %v532, 127
        %v541 = vpop.permute.xlu0 %540
        %v546 = vadd.f32 %v513, %v535
        %v547 = vadd.f32 %v514, %v537
        %v548 = vadd.f32 %v515, %v539
        %v549 = vadd.f32 %v516, %v541
        %vm550 = vcmp.gt.f32.partialorder %v546, 0.0
        %vm551 = vcmp.gt.f32.partialorder %v547, 0.0
        %vm552 = vcmp.gt.f32.partialorder %v548, 0.0
        %vm553 = vcmp.gt.f32.partialorder %v549, 0.0
        %v554 = vmul.f32 %v546, 1.442695
        %v555 = vpow.pop %v554
        %v556 = vmul.f32 %v547, 1.442695
        %v557 = vpow.pop %v556
        %v558 = vmul.f32 %v548, 1.442695
        %v559 = vpow.pop %v558
        %v560 = vmul.f32 %v549, 1.442695
        %v561 = vpow.pop %v560
        %v562 = vsub.f32 %v555, 1.0
        %v563 = vsub.f32 %v557, 1.0
        %v564 = vsub.f32 %v559, 1.0
        %v565 = vsub.f32 %v561, 1.0
        %v566 = vsel %vm550, %v546, %v562
        %v567 = vsel %vm551, %v547, %v563
        %v568 = vsel %vm552, %v548, %v564
        %v569 = vsel %vm553, %v549, %v565
        %vm570 = vcmask 220160
        %v572 = vsel %vm570, %v436, 0
        %v575 = vsel %vm570, %v437, 0
        %vm577 = vcmask 1042432
        %v579 = vsel %vm577, %v569, 0
        %581 = vmatpush.msra.mxu0 0.0
        %582 = vmatpush.msra.mxu0 0.0
        %583 = vmatpush.msra.mxu0 0.0
        %584 = vmatpush.msra.mxu0 0.0
        %585 = vmatpush.msra.mxu0 0.0
        %586 = vmatpush.msra.mxu0 0.0
        %587 = vmatpush.msra.mxu0 0.0
        %588 = vmatpush.msra.mxu0 0.0
        %589 = vmatpush.msra.mxu0 0.0
        %590 = vmatpush.msra.mxu0 0.0
        %591 = vmatpush.msra.mxu0 0.0
        %592 = vmatpush.msra.mxu0 0.0
        %593 = vmatpush.msra.mxu0 %v579
        %594 = vmatpush.msra.mxu0 %v568
        %595 = vmatpush.msra.mxu0 %v567
        %596 = vmatpush.msra.mxu0 %v566
        %597 = vmatmul.f32.gmra.mxu0 %v572
        %v598 = vpop.f32.mrf.mxu0
        %v599 = vadd.f32 0.0, %v598
        %600 = vmatmul.f32.gmra.mxu0 %v575
        %v601 = vpop.f32.mrf.mxu0
        %v602 = vadd.f32 0.0, %v601
        %603 = vdwg.mxu0
        %v605 = vsel %vm570, %v438, 0
        %v608 = vsel %vm570, %v439, 0
        %610 = vmatpush.msra.mxu0 0.0
        %611 = vmatpush.msra.mxu0 0.0
        %612 = vmatpush.msra.mxu0 0.0
        %613 = vmatpush.msra.mxu0 0.0
        %614 = vmatpush.msra.mxu0 0.0
        %615 = vmatpush.msra.mxu0 0.0
        %616 = vmatpush.msra.mxu0 0.0
        %617 = vmatpush.msra.mxu0 0.0
        %618 = vmatpush.msra.mxu0 0.0
        %619 = vmatpush.msra.mxu0 0.0
        %620 = vmatpush.msra.mxu0 0.0
        %621 = vmatpush.msra.mxu0 0.0
        %622 = vmatpush.msra.mxu0 %v579
        %623 = vmatpush.msra.mxu0 %v568
        %624 = vmatpush.msra.mxu0 %v567
        %625 = vmatpush.msra.mxu0 %v566
        %626 = vmatmul.f32.gmra.mxu0 %v605
        %v627 = vpop.f32.mrf.mxu0
        %v628 = vadd.f32 0.0, %v627
        %629 = vmatmul.f32.gmra.mxu0 %v608
        %v630 = vpop.f32.mrf.mxu0
        %v631 = vadd.f32 0.0, %v630
        %632 = vdwg.mxu0
        %v633 = vmax.f32 %v599, %v628
        %v634 = vmax.f32 %v602, %v631
        %v636 = vsel %vm570, %v633, 0
        %v639 = vsel %vm570, %v634, 0
        %v642 = vsel %vm577, %v443, 0
        %644 = vmatpush.msra.mxu0 0.0
        %645 = vmatpush.msra.mxu0 0.0
        %646 = vmatpush.msra.mxu0 0.0
        %647 = vmatpush.msra.mxu0 0.0
        %648 = vmatpush.msra.mxu0 0.0
        %649 = vmatpush.msra.mxu0 0.0
        %650 = vmatpush.msra.mxu0 0.0
        %651 = vmatpush.msra.mxu0 0.0
        %652 = vmatpush.msra.mxu0 0.0
        %653 = vmatpush.msra.mxu0 0.0
        %654 = vmatpush.msra.mxu0 0.0
        %655 = vmatpush.msra.mxu0 0.0
        %656 = vmatpush.msra.mxu0 %v642
        %657 = vmatpush.msra.mxu0 %v442
        %658 = vmatpush.msra.mxu0 %v441
        %659 = vmatpush.msra.mxu0 %v440
        %660 = vmatmul.f32.gmra.mxu0 %v636
        %v661 = vpop.f32.mrf.mxu0
        %v662 = vadd.f32 0.0, %v661
        %663 = vmatmul.f32.gmra.mxu0 %v639
        %v664 = vpop.f32.mrf.mxu0
        %v665 = vadd.f32 0.0, %v664
        %666 = vdwg.mxu0
        %v668 = vsel %vm577, %v447, 0
        %670 = vmatpush.msra.mxu0 0.0
        %671 = vmatpush.msra.mxu0 0.0
        %672 = vmatpush.msra.mxu0 0.0
        %673 = vmatpush.msra.mxu0 0.0
        %674 = vmatpush.msra.mxu0 0.0
        %675 = vmatpush.msra.mxu0 0.0
        %676 = vmatpush.msra.mxu0 0.0
        %677 = vmatpush.msra.mxu0 0.0
        %678 = vmatpush.msra.mxu0 0.0
        %679 = vmatpush.msra.mxu0 0.0
        %680 = vmatpush.msra.mxu0 0.0
        %681 = vmatpush.msra.mxu0 0.0
        %682 = vmatpush.msra.mxu0 %v668
        %683 = vmatpush.msra.mxu0 %v446
        %684 = vmatpush.msra.mxu0 %v445
        %685 = vmatpush.msra.mxu0 %v444
        %686 = vmatmul.f32.gmra.mxu0 %v636
        %v687 = vpop.f32.mrf.mxu0
        %v688 = vadd.f32 0.0, %v687
        %689 = vmatmul.f32.gmra.mxu0 %v639
        %v690 = vpop.f32.mrf.mxu0
        %v691 = vadd.f32 0.0, %v690
        %692 = vdwg.mxu0
        %v693 = vmax.f32 %v662, %v688
        %v694 = vmax.f32 %v665, %v691
        %s695 = sld [smem:[#allocation6 + $0x1]]
        %v696 = vstv %s695
        %v697 = vadd.f32 %v696, 0.0
        %s698 = sld [smem:[#allocation3 + $0x4]]
        %v699 = vstv %s698
        %v700 = vmul.f32 %v699, %v448
        %v701 = vmul.f32 %v699, %v449
        %v702 = vmul.f32 %v699, %v450
        %v703 = vmul.f32 %v699, %v451
        %v704 = vadd.f32 %v697, %v700
        %v705 = vadd.f32 %v697, %v701
        %v706 = vadd.f32 %v697, %v702
        %v707 = vadd.f32 %v697, %v703
        %s708 = sld [smem:[#allocation3 + $0x5]]
        %v709 = vstv %s708
        %v710 = vmul.f32 %v709, %v448
        %v711 = vmul.f32 %v709, %v449
        %v712 = vmul.f32 %v709, %v450
        %v713 = vmul.f32 %v709, %v451
        %718 = vrot.lane.b32.xlu0 %v710, 127
        %v719 = vpop.permute.xlu0 %718
        %720 = vrot.lane.b32.xlu0 %v711, 127
        %v721 = vpop.permute.xlu0 %720
        %722 = vrot.lane.b32.xlu0 %v712, 127
        %v723 = vpop.permute.xlu0 %722
        %724 = vrot.lane.b32.xlu0 %v713, 127
        %v725 = vpop.permute.xlu0 %724
        %v730 = vadd.f32 %v704, %v719
        %v731 = vadd.f32 %v705, %v721
        %v732 = vadd.f32 %v706, %v723
        %v733 = vadd.f32 %v707, %v725
        %s734 = sld [smem:[#allocation3 + $0x6]]
        %v735 = vstv %s734
        %v736 = vmul.f32 %v735, %v448
        %v737 = vmul.f32 %v735, %v449
        %v738 = vmul.f32 %v735, %v450
        %v739 = vmul.f32 %v735, %v451
        %v744 = vrot.slane %v736, 1
        %v745 = vrot.slane %v737, 1
        %v746 = vsel %vm501, %v744, %v745
        %v747 = vrot.slane %v738, 1
        %v748 = vsel %vm501, %v745, %v747
        %v749 = vrot.slane %v739, 1
        %v750 = vsel %vm501, %v747, %v749
        %v755 = vadd.f32 %v730, %v746
        %v756 = vadd.f32 %v731, %v748
        %v757 = vadd.f32 %v732, %v750
        %v758 = vadd.f32 %v733, %v749
        %s759 = sld [smem:[#allocation3 + $0x7]]
        %v760 = vstv %s759
        %v761 = vmul.f32 %v760, %v448
        %v762 = vmul.f32 %v760, %v449
        %v763 = vmul.f32 %v760, %v450
        %v764 = vmul.f32 %v760, %v451
        %v769 = vrot.slane %v761, 1
        %v770 = vrot.slane %v762, 1
        %v771 = vsel %vm501, %v769, %v770
        %v772 = vrot.slane %v763, 1
        %v773 = vsel %vm501, %v770, %v772
        %v774 = vrot.slane %v764, 1
        %v775 = vsel %vm501, %v772, %v774
        %776 = vrot.lane.b32.xlu0 %v771, 127
        %v777 = vpop.permute.xlu0 %776
        %778 = vrot.lane.b32.xlu0 %v773, 127
        %v779 = vpop.permute.xlu0 %778
        %780 = vrot.lane.b32.xlu0 %v775, 127
        %v781 = vpop.permute.xlu0 %780
        %782 = vrot.lane.b32.xlu0 %v774, 127
        %v783 = vpop.permute.xlu0 %782
        %v788 = vadd.f32 %v755, %v777
        %v789 = vadd.f32 %v756, %v779
        %v790 = vadd.f32 %v757, %v781
        %v791 = vadd.f32 %v758, %v783
        %vm792 = vcmp.gt.f32.partialorder %v788, 0.0
        %vm793 = vcmp.gt.f32.partialorder %v789, 0.0
        %vm794 = vcmp.gt.f32.partialorder %v790, 0.0
        %vm795 = vcmp.gt.f32.partialorder %v791, 0.0
        %v796 = vmul.f32 %v788, 1.442695
        %v797 = vpow.pop %v796
        %v798 = vmul.f32 %v789, 1.442695
        %v799 = vpow.pop %v798
        %v800 = vmul.f32 %v790, 1.442695
        %v801 = vpow.pop %v800
        %v802 = vmul.f32 %v791, 1.442695
        %v803 = vpow.pop %v802
        %v804 = vsub.f32 %v797, 1.0
        %v805 = vsub.f32 %v799, 1.0
        %v806 = vsub.f32 %v801, 1.0
        %v807 = vsub.f32 %v803, 1.0
        %v808 = vsel %vm792, %v788, %v804
        %v809 = vsel %vm793, %v789, %v805
        %v810 = vsel %vm794, %v790, %v806
        %v811 = vsel %vm795, %v791, %v807
        %v813 = vsel %vm577, %v811, 0
        %815 = vmatpush.msra.mxu0 0.0
        %816 = vmatpush.msra.mxu0 0.0
        %817 = vmatpush.msra.mxu0 0.0
        %818 = vmatpush.msra.mxu0 0.0
        %819 = vmatpush.msra.mxu0 0.0
        %820 = vmatpush.msra.mxu0 0.0
        %821 = vmatpush.msra.mxu0 0.0
        %822 = vmatpush.msra.mxu0 0.0
        %823 = vmatpush.msra.mxu0 0.0
        %824 = vmatpush.msra.mxu0 0.0
        %825 = vmatpush.msra.mxu0 0.0
        %826 = vmatpush.msra.mxu0 0.0
        %827 = vmatpush.msra.mxu0 %v813
        %828 = vmatpush.msra.mxu0 %v810
        %829 = vmatpush.msra.mxu0 %v809
        %830 = vmatpush.msra.mxu0 %v808
        %831 = vmatmul.f32.gmra.mxu0 %v572
        %v832 = vpop.f32.mrf.mxu0
        %v833 = vadd.f32 0.0, %v832
        %834 = vmatmul.f32.gmra.mxu0 %v575
        %v835 = vpop.f32.mrf.mxu0
        %v836 = vadd.f32 0.0, %v835
        %837 = vdwg.mxu0
        %838 = vmatpush.msra.mxu0 0.0
        %839 = vmatpush.msra.mxu0 0.0
        %840 = vmatpush.msra.mxu0 0.0
        %841 = vmatpush.msra.mxu0 0.0
        %842 = vmatpush.msra.mxu0 0.0
        %843 = vmatpush.msra.mxu0 0.0
        %844 = vmatpush.msra.mxu0 0.0
        %845 = vmatpush.msra.mxu0 0.0
        %846 = vmatpush.msra.mxu0 0.0
        %847 = vmatpush.msra.mxu0 0.0
        %848 = vmatpush.msra.mxu0 0.0
        %849 = vmatpush.msra.mxu0 0.0
        %850 = vmatpush.msra.mxu0 %v813
        %851 = vmatpush.msra.mxu0 %v810
        %852 = vmatpush.msra.mxu0 %v809
        %853 = vmatpush.msra.mxu0 %v808
        %854 = vmatmul.f32.gmra.mxu0 %v605
        %v855 = vpop.f32.mrf.mxu0
        %v856 = vadd.f32 0.0, %v855
        %857 = vmatmul.f32.gmra.mxu0 %v608
        %v858 = vpop.f32.mrf.mxu0
        %v859 = vadd.f32 0.0, %v858
        %860 = vdwg.mxu0
        %v861 = vmax.f32 %v833, %v856
        %v862 = vmax.f32 %v836, %v859
        %v864 = vsel %vm570, %v861, 0
        %v867 = vsel %vm570, %v862, 0
        %869 = vmatpush.msra.mxu0 0.0
        %870 = vmatpush.msra.mxu0 0.0
        %871 = vmatpush.msra.mxu0 0.0
        %872 = vmatpush.msra.mxu0 0.0
        %873 = vmatpush.msra.mxu0 0.0
        %874 = vmatpush.msra.mxu0 0.0
        %875 = vmatpush.msra.mxu0 0.0
        %876 = vmatpush.msra.mxu0 0.0
        %877 = vmatpush.msra.mxu0 0.0
        %878 = vmatpush.msra.mxu0 0.0
        %879 = vmatpush.msra.mxu0 0.0
        %880 = vmatpush.msra.mxu0 0.0
        %881 = vmatpush.msra.mxu0 %v642
        %882 = vmatpush.msra.mxu0 %v442
        %883 = vmatpush.msra.mxu0 %v441
        %884 = vmatpush.msra.mxu0 %v440
        %885 = vmatmul.f32.gmra.mxu0 %v864
        %v886 = vpop.f32.mrf.mxu0
        %v887 = vadd.f32 0.0, %v886
        %888 = vmatmul.f32.gmra.mxu0 %v867
        %v889 = vpop.f32.mrf.mxu0
        %v890 = vadd.f32 0.0, %v889
        %891 = vdwg.mxu0
        %892 = vmatpush.msra.mxu0 0.0
        %893 = vmatpush.msra.mxu0 0.0
        %894 = vmatpush.msra.mxu0 0.0
        %895 = vmatpush.msra.mxu0 0.0
        %896 = vmatpush.msra.mxu0 0.0
        %897 = vmatpush.msra.mxu0 0.0
        %898 = vmatpush.msra.mxu0 0.0
        %899 = vmatpush.msra.mxu0 0.0
        %900 = vmatpush.msra.mxu0 0.0
        %901 = vmatpush.msra.mxu0 0.0
        %902 = vmatpush.msra.mxu0 0.0
        %903 = vmatpush.msra.mxu0 0.0
        %904 = vmatpush.msra.mxu0 %v668
        %905 = vmatpush.msra.mxu0 %v446
        %906 = vmatpush.msra.mxu0 %v445
        %907 = vmatpush.msra.mxu0 %v444
        %908 = vmatmul.f32.gmra.mxu0 %v864
        %v909 = vpop.f32.mrf.mxu0
        %v910 = vadd.f32 0.0, %v909
        %911 = vmatmul.f32.gmra.mxu0 %v867
        %v912 = vpop.f32.mrf.mxu0
        %v913 = vadd.f32 0.0, %v912
        %914 = vdwg.mxu0
        %v915 = vmax.f32 %v887, %v910
        %v916 = vmax.f32 %v890, %v913
        %s917 = sld [smem:[#allocation6 + $0x2]]
        %v918 = vstv %s917
        %v919 = vadd.f32 %v918, 0.0
        %s920 = sld [smem:[#allocation3 + $0x8]]
        %v921 = vstv %s920
        %v922 = vmul.f32 %v921, %v448
        %v923 = vmul.f32 %v921, %v449
        %v924 = vmul.f32 %v921, %v450
        %v925 = vmul.f32 %v921, %v451
        %v926 = vadd.f32 %v919, %v922
        %v927 = vadd.f32 %v919, %v923
        %v928 = vadd.f32 %v919, %v924
        %v929 = vadd.f32 %v919, %v925
        %s930 = sld [smem:[#allocation3 + $0x9]]
        %v931 = vstv %s930
        %v932 = vmul.f32 %v931, %v448
        %v933 = vmul.f32 %v931, %v449
        %v934 = vmul.f32 %v931, %v450
        %v935 = vmul.f32 %v931, %v451
        %940 = vrot.lane.b32.xlu0 %v932, 127
        %v941 = vpop.permute.xlu0 %940
        %942 = vrot.lane.b32.xlu0 %v933, 127
        %v943 = vpop.permute.xlu0 %942
        %944 = vrot.lane.b32.xlu0 %v934, 127
        %v945 = vpop.permute.xlu0 %944
        %946 = vrot.lane.b32.xlu0 %v935, 127
        %v947 = vpop.permute.xlu0 %946
        %v952 = vadd.f32 %v926, %v941
        %v953 = vadd.f32 %v927, %v943
        %v954 = vadd.f32 %v928, %v945
        %v955 = vadd.f32 %v929, %v947
        %s956 = sld [smem:[#allocation3 + $0xa]]
        %v957 = vstv %s956
        %v958 = vmul.f32 %v957, %v448
        %v959 = vmul.f32 %v957, %v449
        %v960 = vmul.f32 %v957, %v450
        %v961 = vmul.f32 %v957, %v451
        %v966 = vrot.slane %v958, 1
        %v967 = vrot.slane %v959, 1
        %v968 = vsel %vm501, %v966, %v967
        %v969 = vrot.slane %v960, 1
        %v970 = vsel %vm501, %v967, %v969
        %v971 = vrot.slane %v961, 1
        %v972 = vsel %vm501, %v969, %v971
        %v977 = vadd.f32 %v952, %v968
        %v978 = vadd.f32 %v953, %v970
        %v979 = vadd.f32 %v954, %v972
        %v980 = vadd.f32 %v955, %v971
        %s981 = sld [smem:[#allocation3 + $0xb]]
        %v982 = vstv %s981
        %v983 = vmul.f32 %v982, %v448
        %v984 = vmul.f32 %v982, %v449
        %v985 = vmul.f32 %v982, %v450
        %v986 = vmul.f32 %v982, %v451
        %v991 = vrot.slane %v983, 1
        %v992 = vrot.slane %v984, 1
        %v993 = vsel %vm501, %v991, %v992
        %v994 = vrot.slane %v985, 1
        %v995 = vsel %vm501, %v992, %v994
        %v996 = vrot.slane %v986, 1
        %v997 = vsel %vm501, %v994, %v996
        %998 = vrot.lane.b32.xlu0 %v993, 127
        %v999 = vpop.permute.xlu0 %998
        %1000 = vrot.lane.b32.xlu0 %v995, 127
        %v1001 = vpop.permute.xlu0 %1000
        %1002 = vrot.lane.b32.xlu0 %v997, 127
        %v1003 = vpop.permute.xlu0 %1002
        %1004 = vrot.lane.b32.xlu0 %v996, 127
        %v1005 = vpop.permute.xlu0 %1004
        %v1010 = vadd.f32 %v977, %v999
        %v1011 = vadd.f32 %v978, %v1001
        %v1012 = vadd.f32 %v979, %v1003
        %v1013 = vadd.f32 %v980, %v1005
        %vm1014 = vcmp.gt.f32.partialorder %v1010, 0.0
        %vm1015 = vcmp.gt.f32.partialorder %v1011, 0.0
        %vm1016 = vcmp.gt.f32.partialorder %v1012, 0.0
        %vm1017 = vcmp.gt.f32.partialorder %v1013, 0.0
        %v1018 = vmul.f32 %v1010, 1.442695
        %v1019 = vpow.pop %v1018
        %v1020 = vmul.f32 %v1011, 1.442695
        %v1021 = vpow.pop %v1020
        %v1022 = vmul.f32 %v1012, 1.442695
        %v1023 = vpow.pop %v1022
        %v1024 = vmul.f32 %v1013, 1.442695
        %v1025 = vpow.pop %v1024
        %v1026 = vsub.f32 %v1019, 1.0
        %v1027 = vsub.f32 %v1021, 1.0
        %v1028 = vsub.f32 %v1023, 1.0
        %v1029 = vsub.f32 %v1025, 1.0
        %v1030 = vsel %vm1014, %v1010, %v1026
        %v1031 = vsel %vm1015, %v1011, %v1027
        %v1032 = vsel %vm1016, %v1012, %v1028
        %v1033 = vsel %vm1017, %v1013, %v1029
        %v1035 = vsel %vm577, %v1033, 0
        %1037 = vmatpush.msra.mxu0 0.0
        %1038 = vmatpush.msra.mxu0 0.0
        %1039 = vmatpush.msra.mxu0 0.0
        %1040 = vmatpush.msra.mxu0 0.0
        %1041 = vmatpush.msra.mxu0 0.0
        %1042 = vmatpush.msra.mxu0 0.0
        %1043 = vmatpush.msra.mxu0 0.0
        %1044 = vmatpush.msra.mxu0 0.0
        %1045 = vmatpush.msra.mxu0 0.0
        %1046 = vmatpush.msra.mxu0 0.0
        %1047 = vmatpush.msra.mxu0 0.0
        %1048 = vmatpush.msra.mxu0 0.0
        %1049 = vmatpush.msra.mxu0 %v1035
        %1050 = vmatpush.msra.mxu0 %v1032
        %1051 = vmatpush.msra.mxu0 %v1031
        %1052 = vmatpush.msra.mxu0 %v1030
        %1053 = vmatmul.f32.gmra.mxu0 %v572
        %v1054 = vpop.f32.mrf.mxu0
        %v1055 = vadd.f32 0.0, %v1054
        %1056 = vmatmul.f32.gmra.mxu0 %v575
        %v1057 = vpop.f32.mrf.mxu0
        %v1058 = vadd.f32 0.0, %v1057
        %1059 = vdwg.mxu0
        %1060 = vmatpush.msra.mxu0 0.0
        %1061 = vmatpush.msra.mxu0 0.0
        %1062 = vmatpush.msra.mxu0 0.0
        %1063 = vmatpush.msra.mxu0 0.0
        %1064 = vmatpush.msra.mxu0 0.0
        %1065 = vmatpush.msra.mxu0 0.0
        %1066 = vmatpush.msra.mxu0 0.0
        %1067 = vmatpush.msra.mxu0 0.0
        %1068 = vmatpush.msra.mxu0 0.0
        %1069 = vmatpush.msra.mxu0 0.0
        %1070 = vmatpush.msra.mxu0 0.0
        %1071 = vmatpush.msra.mxu0 0.0
        %1072 = vmatpush.msra.mxu0 %v1035
        %1073 = vmatpush.msra.mxu0 %v1032
        %1074 = vmatpush.msra.mxu0 %v1031
        %1075 = vmatpush.msra.mxu0 %v1030
        %1076 = vmatmul.f32.gmra.mxu0 %v605
        %v1077 = vpop.f32.mrf.mxu0
        %v1078 = vadd.f32 0.0, %v1077
        %1079 = vmatmul.f32.gmra.mxu0 %v608
        %v1080 = vpop.f32.mrf.mxu0
        %v1081 = vadd.f32 0.0, %v1080
        %1082 = vdwg.mxu0
        %v1083 = vmax.f32 %v1055, %v1078
        %v1084 = vmax.f32 %v1058, %v1081
        %v1086 = vsel %vm570, %v1083, 0
        %v1089 = vsel %vm570, %v1084, 0
        %1091 = vmatpush.msra.mxu0 0.0
        %1092 = vmatpush.msra.mxu0 0.0
        %1093 = vmatpush.msra.mxu0 0.0
        %1094 = vmatpush.msra.mxu0 0.0
        %1095 = vmatpush.msra.mxu0 0.0
        %1096 = vmatpush.msra.mxu0 0.0
        %1097 = vmatpush.msra.mxu0 0.0
        %1098 = vmatpush.msra.mxu0 0.0
        %1099 = vmatpush.msra.mxu0 0.0
        %1100 = vmatpush.msra.mxu0 0.0
        %1101 = vmatpush.msra.mxu0 0.0
        %1102 = vmatpush.msra.mxu0 0.0
        %1103 = vmatpush.msra.mxu0 %v642
        %1104 = vmatpush.msra.mxu0 %v442
        %1105 = vmatpush.msra.mxu0 %v441
        %1106 = vmatpush.msra.mxu0 %v440
        %1107 = vmatmul.f32.gmra.mxu0 %v1086
        %v1108 = vpop.f32.mrf.mxu0
        %v1109 = vadd.f32 0.0, %v1108
        %1110 = vmatmul.f32.gmra.mxu0 %v1089
        %v1111 = vpop.f32.mrf.mxu0
        %v1112 = vadd.f32 0.0, %v1111
        %1113 = vdwg.mxu0
        %1114 = vmatpush.msra.mxu0 0.0
        %1115 = vmatpush.msra.mxu0 0.0
        %1116 = vmatpush.msra.mxu0 0.0
        %1117 = vmatpush.msra.mxu0 0.0
        %1118 = vmatpush.msra.mxu0 0.0
        %1119 = vmatpush.msra.mxu0 0.0
        %1120 = vmatpush.msra.mxu0 0.0
        %1121 = vmatpush.msra.mxu0 0.0
        %1122 = vmatpush.msra.mxu0 0.0
        %1123 = vmatpush.msra.mxu0 0.0
        %1124 = vmatpush.msra.mxu0 0.0
        %1125 = vmatpush.msra.mxu0 0.0
        %1126 = vmatpush.msra.mxu0 %v668
        %1127 = vmatpush.msra.mxu0 %v446
        %1128 = vmatpush.msra.mxu0 %v445
        %1129 = vmatpush.msra.mxu0 %v444
        %1130 = vmatmul.f32.gmra.mxu0 %v1086
        %v1131 = vpop.f32.mrf.mxu0
        %v1132 = vadd.f32 0.0, %v1131
        %1133 = vmatmul.f32.gmra.mxu0 %v1089
        %v1134 = vpop.f32.mrf.mxu0
        %v1135 = vadd.f32 0.0, %v1134
        %1136 = vdwg.mxu0
        %v1137 = vmax.f32 %v1109, %v1132
        %v1138 = vmax.f32 %v1112, %v1135
        %s1139 = sld [smem:[#allocation6 + $0x3]]
        %v1140 = vstv %s1139
        %v1141 = vadd.f32 %v1140, 0.0
        %s1142 = sld [smem:[#allocation3 + $0xc]]
        %v1143 = vstv %s1142
        %v1144 = vmul.f32 %v1143, %v448
        %v1145 = vmul.f32 %v1143, %v449
        %v1146 = vmul.f32 %v1143, %v450
        %v1147 = vmul.f32 %v1143, %v451
        %v1148 = vadd.f32 %v1141, %v1144
        %v1149 = vadd.f32 %v1141, %v1145
        %v1150 = vadd.f32 %v1141, %v1146
        %v1151 = vadd.f32 %v1141, %v1147
        %s1152 = sld [smem:[#allocation3 + $0xd]]
        %v1153 = vstv %s1152
        %v1154 = vmul.f32 %v1153, %v448
        %v1155 = vmul.f32 %v1153, %v449
        %v1156 = vmul.f32 %v1153, %v450
        %v1157 = vmul.f32 %v1153, %v451
        %1162 = vrot.lane.b32.xlu0 %v1154, 127
        %v1163 = vpop.permute.xlu0 %1162
        %1164 = vrot.lane.b32.xlu0 %v1155, 127
        %v1165 = vpop.permute.xlu0 %1164
        %1166 = vrot.lane.b32.xlu0 %v1156, 127
        %v1167 = vpop.permute.xlu0 %1166
        %1168 = vrot.lane.b32.xlu0 %v1157, 127
        %v1169 = vpop.permute.xlu0 %1168
        %v1174 = vadd.f32 %v1148, %v1163
        %v1175 = vadd.f32 %v1149, %v1165
        %v1176 = vadd.f32 %v1150, %v1167
        %v1177 = vadd.f32 %v1151, %v1169
        %s1178 = sld [smem:[#allocation3 + $0xe]]
        %v1179 = vstv %s1178
        %v1180 = vmul.f32 %v1179, %v448
        %v1181 = vmul.f32 %v1179, %v449
        %v1182 = vmul.f32 %v1179, %v450
        %v1183 = vmul.f32 %v1179, %v451
        %v1188 = vrot.slane %v1180, 1
        %v1189 = vrot.slane %v1181, 1
        %v1190 = vsel %vm501, %v1188, %v1189
        %v1191 = vrot.slane %v1182, 1
        %v1192 = vsel %vm501, %v1189, %v1191
        %v1193 = vrot.slane %v1183, 1
        %v1194 = vsel %vm501, %v1191, %v1193
        %v1199 = vadd.f32 %v1174, %v1190
        %v1200 = vadd.f32 %v1175, %v1192
        %v1201 = vadd.f32 %v1176, %v1194
        %v1202 = vadd.f32 %v1177, %v1193
        %s1203 = sld [smem:[#allocation3 + $0xf]]
        %v1204 = vstv %s1203
        %v1205 = vmul.f32 %v1204, %v448
        %v1206 = vmul.f32 %v1204, %v449
        %v1207 = vmul.f32 %v1204, %v450
        %v1208 = vmul.f32 %v1204, %v451
        %v1213 = vrot.slane %v1205, 1
        %v1214 = vrot.slane %v1206, 1
        %v1215 = vsel %vm501, %v1213, %v1214
        %v1216 = vrot.slane %v1207, 1
        %v1217 = vsel %vm501, %v1214, %v1216
        %v1218 = vrot.slane %v1208, 1
        %v1219 = vsel %vm501, %v1216, %v1218
        %1220 = vrot.lane.b32.xlu0 %v1215, 127
        %v1221 = vpop.permute.xlu0 %1220
        %1222 = vrot.lane.b32.xlu0 %v1217, 127
        %v1223 = vpop.permute.xlu0 %1222
        %1224 = vrot.lane.b32.xlu0 %v1219, 127
        %v1225 = vpop.permute.xlu0 %1224
        %1226 = vrot.lane.b32.xlu0 %v1218, 127
        %v1227 = vpop.permute.xlu0 %1226
        %v1232 = vadd.f32 %v1199, %v1221
        %v1233 = vadd.f32 %v1200, %v1223
        %v1234 = vadd.f32 %v1201, %v1225
        %v1235 = vadd.f32 %v1202, %v1227
        %vm1236 = vcmp.gt.f32.partialorder %v1232, 0.0
        %vm1237 = vcmp.gt.f32.partialorder %v1233, 0.0
        %vm1238 = vcmp.gt.f32.partialorder %v1234, 0.0
        %vm1239 = vcmp.gt.f32.partialorder %v1235, 0.0
        %v1240 = vmul.f32 %v1232, 1.442695
        %v1241 = vpow.pop %v1240
        %v1242 = vmul.f32 %v1233, 1.442695
        %v1243 = vpow.pop %v1242
        %v1244 = vmul.f32 %v1234, 1.442695
        %v1245 = vpow.pop %v1244
        %v1246 = vmul.f32 %v1235, 1.442695
        %v1247 = vpow.pop %v1246
        %v1248 = vsub.f32 %v1241, 1.0
        %v1249 = vsub.f32 %v1243, 1.0
        %v1250 = vsub.f32 %v1245, 1.0
        %v1251 = vsub.f32 %v1247, 1.0
        %v1252 = vsel %vm1236, %v1232, %v1248
        %v1253 = vsel %vm1237, %v1233, %v1249
        %v1254 = vsel %vm1238, %v1234, %v1250
        %v1255 = vsel %vm1239, %v1235, %v1251
        %v1257 = vsel %vm577, %v1255, 0
        %1259 = vmatpush.msra.mxu0 0.0
        %1260 = vmatpush.msra.mxu0 0.0
        %1261 = vmatpush.msra.mxu0 0.0
        %1262 = vmatpush.msra.mxu0 0.0
        %1263 = vmatpush.msra.mxu0 0.0
        %1264 = vmatpush.msra.mxu0 0.0
        %1265 = vmatpush.msra.mxu0 0.0
        %1266 = vmatpush.msra.mxu0 0.0
        %1267 = vmatpush.msra.mxu0 0.0
        %1268 = vmatpush.msra.mxu0 0.0
        %1269 = vmatpush.msra.mxu0 0.0
        %1270 = vmatpush.msra.mxu0 0.0
        %1271 = vmatpush.msra.mxu0 %v1257
        %1272 = vmatpush.msra.mxu0 %v1254
        %1273 = vmatpush.msra.mxu0 %v1253
        %1274 = vmatpush.msra.mxu0 %v1252
        %1275 = vmatmul.f32.gmra.mxu0 %v572
        %v1276 = vpop.f32.mrf.mxu0
        %v1277 = vadd.f32 0.0, %v1276
        %1278 = vmatmul.f32.gmra.mxu0 %v575
        %v1279 = vpop.f32.mrf.mxu0
        %v1280 = vadd.f32 0.0, %v1279
        %1281 = vdwg.mxu0
        %1282 = vmatpush.msra.mxu0 0.0
        %1283 = vmatpush.msra.mxu0 0.0
        %1284 = vmatpush.msra.mxu0 0.0
        %1285 = vmatpush.msra.mxu0 0.0
        %1286 = vmatpush.msra.mxu0 0.0
        %1287 = vmatpush.msra.mxu0 0.0
        %1288 = vmatpush.msra.mxu0 0.0
        %1289 = vmatpush.msra.mxu0 0.0
        %1290 = vmatpush.msra.mxu0 0.0
        %1291 = vmatpush.msra.mxu0 0.0
        %1292 = vmatpush.msra.mxu0 0.0
        %1293 = vmatpush.msra.mxu0 0.0
        %1294 = vmatpush.msra.mxu0 %v1257
        %1295 = vmatpush.msra.mxu0 %v1254
        %1296 = vmatpush.msra.mxu0 %v1253
        %1297 = vmatpush.msra.mxu0 %v1252
        %1298 = vmatmul.f32.gmra.mxu0 %v605
        %v1299 = vpop.f32.mrf.mxu0
        %v1300 = vadd.f32 0.0, %v1299
        %1301 = vmatmul.f32.gmra.mxu0 %v608
        %v1302 = vpop.f32.mrf.mxu0
        %v1303 = vadd.f32 0.0, %v1302
        %1304 = vdwg.mxu0
        %v1305 = vmax.f32 %v1277, %v1300
        %v1306 = vmax.f32 %v1280, %v1303
        %v1308 = vsel %vm570, %v1305, 0
        %v1311 = vsel %vm570, %v1306, 0
        %1313 = vmatpush.msra.mxu0 0.0
        %1314 = vmatpush.msra.mxu0 0.0
        %1315 = vmatpush.msra.mxu0 0.0
        %1316 = vmatpush.msra.mxu0 0.0
        %1317 = vmatpush.msra.mxu0 0.0
        %1318 = vmatpush.msra.mxu0 0.0
        %1319 = vmatpush.msra.mxu0 0.0
        %1320 = vmatpush.msra.mxu0 0.0
        %1321 = vmatpush.msra.mxu0 0.0
        %1322 = vmatpush.msra.mxu0 0.0
        %1323 = vmatpush.msra.mxu0 0.0
        %1324 = vmatpush.msra.mxu0 0.0
        %1325 = vmatpush.msra.mxu0 %v642
        %1326 = vmatpush.msra.mxu0 %v442
        %1327 = vmatpush.msra.mxu0 %v441
        %1328 = vmatpush.msra.mxu0 %v440
        %1329 = vmatmul.f32.gmra.mxu0 %v1308
        %v1330 = vpop.f32.mrf.mxu0
        %v1331 = vadd.f32 0.0, %v1330
        %1332 = vmatmul.f32.gmra.mxu0 %v1311
        %v1333 = vpop.f32.mrf.mxu0
        %v1334 = vadd.f32 0.0, %v1333
        %1335 = vdwg.mxu0
        %1336 = vmatpush.msra.mxu0 0.0
        %1337 = vmatpush.msra.mxu0 0.0
        %1338 = vmatpush.msra.mxu0 0.0
        %1339 = vmatpush.msra.mxu0 0.0
        %1340 = vmatpush.msra.mxu0 0.0
        %1341 = vmatpush.msra.mxu0 0.0
        %1342 = vmatpush.msra.mxu0 0.0
        %1343 = vmatpush.msra.mxu0 0.0
        %1344 = vmatpush.msra.mxu0 0.0
        %1345 = vmatpush.msra.mxu0 0.0
        %1346 = vmatpush.msra.mxu0 0.0
        %1347 = vmatpush.msra.mxu0 0.0
        %1348 = vmatpush.msra.mxu0 %v668
        %1349 = vmatpush.msra.mxu0 %v446
        %1350 = vmatpush.msra.mxu0 %v445
        %1351 = vmatpush.msra.mxu0 %v444
        %1352 = vmatmul.f32.gmra.mxu0 %v1308
        %v1353 = vpop.f32.mrf.mxu0
        %v1354 = vadd.f32 0.0, %v1353
        %1355 = vmatmul.f32.gmra.mxu0 %v1311
        %v1356 = vpop.f32.mrf.mxu0
        %v1357 = vadd.f32 0.0, %v1356
        %1358 = vdwg.mxu0
        %v1359 = vmax.f32 %v1331, %v1354
        %v1360 = vmax.f32 %v1334, %v1357
        %s1361 = sld [smem:[#allocation9]]
        %v1362 = vstv %s1361
        %v1363 = vadd.f32 %v1362, 0.0
        %s1364 = sld [smem:[#allocation8]]
        %v1365 = vstv %s1364
        %v1366 = vmul.f32 %v1365, %v693
        %v1367 = vmul.f32 %v1365, %v694
        %v1368 = vadd.f32 %v1363, %v1366
        %v1369 = vadd.f32 %v1363, %v1367
        %s1370 = sld [smem:[#allocation8 + $0x1]]
        %v1371 = vstv %s1370
        %v1372 = vmul.f32 %v1371, %v693
        %v1373 = vmul.f32 %v1371, %v694
        %1376 = vrot.lane.b32.xlu0 %v1372, 127
        %v1377 = vpop.permute.xlu0 %1376
        %1378 = vrot.lane.b32.xlu0 %v1373, 127
        %v1379 = vpop.permute.xlu0 %1378
        %v1382 = vadd.f32 %v1368, %v1377
        %v1383 = vadd.f32 %v1369, %v1379
        %s1384 = sld [smem:[#allocation8 + $0x2]]
        %v1385 = vstv %s1384
        %v1386 = vmul.f32 %v1385, %v693
        %v1387 = vmul.f32 %v1385, %v694
        %v1390 = vrot.slane %v1386, 1
        %v1391 = vrot.slane %v1387, 1
        %v1392 = vsel %vm501, %v1390, %v1391
        %v1395 = vadd.f32 %v1382, %v1392
        %v1396 = vadd.f32 %v1383, %v1391
        %s1397 = sld [smem:[#allocation8 + $0x3]]
        %v1398 = vstv %s1397
        %v1399 = vmul.f32 %v1398, %v693
        %v1400 = vmul.f32 %v1398, %v694
        %v1403 = vrot.slane %v1399, 1
        %v1404 = vrot.slane %v1400, 1
        %v1405 = vsel %vm501, %v1403, %v1404
        %1406 = vrot.lane.b32.xlu0 %v1405, 127
        %v1407 = vpop.permute.xlu0 %1406
        %1408 = vrot.lane.b32.xlu0 %v1404, 127
        %v1409 = vpop.permute.xlu0 %1408
        %v1412 = vadd.f32 %v1395, %v1407
        %v1413 = vadd.f32 %v1396, %v1409
        %s1414 = sld [smem:[#allocation8 + $0x4]]
        %v1415 = vstv %s1414
        %v1416 = vmul.f32 %v1415, %v915
        %v1417 = vmul.f32 %v1415, %v916
        %v1418 = vadd.f32 %v1412, %v1416
        %v1419 = vadd.f32 %v1413, %v1417
        %s1420 = sld [smem:[#allocation8 + $0x5]]
        %v1421 = vstv %s1420
        %v1422 = vmul.f32 %v1421, %v915
        %v1423 = vmul.f32 %v1421, %v916
        %1426 = vrot.lane.b32.xlu0 %v1422, 127
        %v1427 = vpop.permute.xlu0 %1426
        %1428 = vrot.lane.b32.xlu0 %v1423, 127
        %v1429 = vpop.permute.xlu0 %1428
        %v1432 = vadd.f32 %v1418, %v1427
        %v1433 = vadd.f32 %v1419, %v1429
        %s1434 = sld [smem:[#allocation8 + $0x6]]
        %v1435 = vstv %s1434
        %v1436 = vmul.f32 %v1435, %v915
        %v1437 = vmul.f32 %v1435, %v916
        %v1440 = vrot.slane %v1436, 1
        %v1441 = vrot.slane %v1437, 1
        %v1442 = vsel %vm501, %v1440, %v1441
        %v1445 = vadd.f32 %v1432, %v1442
        %v1446 = vadd.f32 %v1433, %v1441
        %s1447 = sld [smem:[#allocation8 + $0x7]]
        %v1448 = vstv %s1447
        %v1449 = vmul.f32 %v1448, %v915
        %v1450 = vmul.f32 %v1448, %v916
        %v1453 = vrot.slane %v1449, 1
        %v1454 = vrot.slane %v1450, 1
        %v1455 = vsel %vm501, %v1453, %v1454
        %1456 = vrot.lane.b32.xlu0 %v1455, 127
        %v1457 = vpop.permute.xlu0 %1456
        %1458 = vrot.lane.b32.xlu0 %v1454, 127
        %v1459 = vpop.permute.xlu0 %1458
        %v1462 = vadd.f32 %v1445, %v1457
        %v1463 = vadd.f32 %v1446, %v1459
        %s1464 = sld [smem:[#allocation8 + $0x8]]
        %v1465 = vstv %s1464
        %v1466 = vmul.f32 %v1465, %v1137
        %v1467 = vmul.f32 %v1465, %v1138
        %v1468 = vadd.f32 %v1462, %v1466
        %v1469 = vadd.f32 %v1463, %v1467
        %s1470 = sld [smem:[#allocation8 + $0x9]]
        %v1471 = vstv %s1470
        %v1472 = vmul.f32 %v1471, %v1137
        %v1473 = vmul.f32 %v1471, %v1138
        %1476 = vrot.lane.b32.xlu0 %v1472, 127
        %v1477 = vpop.permute.xlu0 %1476
        %1478 = vrot.lane.b32.xlu0 %v1473, 127
        %v1479 = vpop.permute.xlu0 %1478
        %v1482 = vadd.f32 %v1468, %v1477
        %v1483 = vadd.f32 %v1469, %v1479
        %s1484 = sld [smem:[#allocation8 + $0xa]]
        %v1485 = vstv %s1484
        %v1486 = vmul.f32 %v1485, %v1137
        %v1487 = vmul.f32 %v1485, %v1138
        %v1490 = vrot.slane %v1486, 1
        %v1491 = vrot.slane %v1487, 1
        %v1492 = vsel %vm501, %v1490, %v1491
        %v1495 = vadd.f32 %v1482, %v1492
        %v1496 = vadd.f32 %v1483, %v1491
        %s1497 = sld [smem:[#allocation8 + $0xb]]
        %v1498 = vstv %s1497
        %v1499 = vmul.f32 %v1498, %v1137
        %v1500 = vmul.f32 %v1498, %v1138
        %v1503 = vrot.slane %v1499, 1
        %v1504 = vrot.slane %v1500, 1
        %v1505 = vsel %vm501, %v1503, %v1504
        %1506 = vrot.lane.b32.xlu0 %v1505, 127
        %v1507 = vpop.permute.xlu0 %1506
        %1508 = vrot.lane.b32.xlu0 %v1504, 127
        %v1509 = vpop.permute.xlu0 %1508
        %v1512 = vadd.f32 %v1495, %v1507
        %v1513 = vadd.f32 %v1496, %v1509
        %s1514 = sld [smem:[#allocation8 + $0xc]]
        %v1515 = vstv %s1514
        %v1516 = vmul.f32 %v1515, %v1359
        %v1517 = vmul.f32 %v1515, %v1360
        %v1518 = vadd.f32 %v1512, %v1516
        %v1519 = vadd.f32 %v1513, %v1517
        %s1520 = sld [smem:[#allocation8 + $0xd]]
        %v1521 = vstv %s1520
        %v1522 = vmul.f32 %v1521, %v1359
        %v1523 = vmul.f32 %v1521, %v1360
        %1526 = vrot.lane.b32.xlu0 %v1522, 127
        %v1527 = vpop.permute.xlu0 %1526
        %1528 = vrot.lane.b32.xlu0 %v1523, 127
        %v1529 = vpop.permute.xlu0 %1528
        %v1532 = vadd.f32 %v1518, %v1527
        %v1533 = vadd.f32 %v1519, %v1529
        %s1534 = sld [smem:[#allocation8 + $0xe]]
        %v1535 = vstv %s1534
        %v1536 = vmul.f32 %v1535, %v1359
        %v1537 = vmul.f32 %v1535, %v1360
        %v1540 = vrot.slane %v1536, 1
        %v1541 = vrot.slane %v1537, 1
        %v1542 = vsel %vm501, %v1540, %v1541
        %v1545 = vadd.f32 %v1532, %v1542
        %v1546 = vadd.f32 %v1533, %v1541
        %s1547 = sld [smem:[#allocation8 + $0xf]]
        %v1548 = vstv %s1547
        %v1549 = vmul.f32 %v1548, %v1359
        %v1550 = vmul.f32 %v1548, %v1360
        %v1553 = vrot.slane %v1549, 1
        %v1554 = vrot.slane %v1550, 1
        %v1555 = vsel %vm501, %v1553, %v1554
        %1556 = vrot.lane.b32.xlu0 %v1555, 127
        %v1557 = vpop.permute.xlu0 %1556
        %1558 = vrot.lane.b32.xlu0 %v1554, 127
        %v1559 = vpop.permute.xlu0 %1558
        %v1562 = vadd.f32 %v1545, %v1557
        %v1563 = vadd.f32 %v1546, %v1559
        %vm1564 = vcmp.gt.f32.partialorder %v1562, 0.0
        %vm1565 = vcmp.gt.f32.partialorder %v1563, 0.0
        %v1566 = vmul.f32 %v1562, 1.442695
        %v1567 = vpow.pop %v1566
        %v1568 = vmul.f32 %v1563, 1.442695
        %v1569 = vpow.pop %v1568
        %v1570 = vsub.f32 %v1567, 1.0
        %v1571 = vsub.f32 %v1569, 1.0
        %v1572 = vsel %vm1564, %v1562, %v1570
        %v1573 = vsel %vm1565, %v1563, %v1571
        %s1574 = sld [smem:[#allocation9 + $0x1]]
        %v1575 = vstv %s1574
        %v1576 = vadd.f32 %v1575, 0.0
        %s1577 = sld [smem:[#allocation8 + $0x10]]
        %v1578 = vstv %s1577
        %v1579 = vmul.f32 %v1578, %v693
        %v1580 = vmul.f32 %v1578, %v694
        %v1581 = vadd.f32 %v1576, %v1579
        %v1582 = vadd.f32 %v1576, %v1580
        %s1583 = sld [smem:[#allocation8 + $0x11]]
        %v1584 = vstv %s1583
        %v1585 = vmul.f32 %v1584, %v693
        %v1586 = vmul.f32 %v1584, %v694
        %1589 = vrot.lane.b32.xlu0 %v1585, 127
        %v1590 = vpop.permute.xlu0 %1589
        %1591 = vrot.lane.b32.xlu0 %v1586, 127
        %v1592 = vpop.permute.xlu0 %1591
        %v1595 = vadd.f32 %v1581, %v1590
        %v1596 = vadd.f32 %v1582, %v1592
        %s1597 = sld [smem:[#allocation8 + $0x12]]
        %v1598 = vstv %s1597
        %v1599 = vmul.f32 %v1598, %v693
        %v1600 = vmul.f32 %v1598, %v694
        %v1603 = vrot.slane %v1599, 1
        %v1604 = vrot.slane %v1600, 1
        %v1605 = vsel %vm501, %v1603, %v1604
        %v1608 = vadd.f32 %v1595, %v1605
        %v1609 = vadd.f32 %v1596, %v1604
        %s1610 = sld [smem:[#allocation8 + $0x13]]
        %v1611 = vstv %s1610
        %v1612 = vmul.f32 %v1611, %v693
        %v1613 = vmul.f32 %v1611, %v694
        %v1616 = vrot.slane %v1612, 1
        %v1617 = vrot.slane %v1613, 1
        %v1618 = vsel %vm501, %v1616, %v1617
        %1619 = vrot.lane.b32.xlu0 %v1618, 127
        %v1620 = vpop.permute.xlu0 %1619
        %1621 = vrot.lane.b32.xlu0 %v1617, 127
        %v1622 = vpop.permute.xlu0 %1621
        %v1625 = vadd.f32 %v1608, %v1620
        %v1626 = vadd.f32 %v1609, %v1622
        %s1627 = sld [smem:[#allocation8 + $0x14]]
        %v1628 = vstv %s1627
        %v1629 = vmul.f32 %v1628, %v915
        %v1630 = vmul.f32 %v1628, %v916
        %v1631 = vadd.f32 %v1625, %v1629
        %v1632 = vadd.f32 %v1626, %v1630
        %s1633 = sld [smem:[#allocation8 + $0x15]]
        %v1634 = vstv %s1633
        %v1635 = vmul.f32 %v1634, %v915
        %v1636 = vmul.f32 %v1634, %v916
        %1639 = vrot.lane.b32.xlu0 %v1635, 127
        %v1640 = vpop.permute.xlu0 %1639
        %1641 = vrot.lane.b32.xlu0 %v1636, 127
        %v1642 = vpop.permute.xlu0 %1641
        %v1645 = vadd.f32 %v1631, %v1640
        %v1646 = vadd.f32 %v1632, %v1642
        %s1647 = sld [smem:[#allocation8 + $0x16]]
        %v1648 = vstv %s1647
        %v1649 = vmul.f32 %v1648, %v915
        %v1650 = vmul.f32 %v1648, %v916
        %v1653 = vrot.slane %v1649, 1
        %v1654 = vrot.slane %v1650, 1
        %v1655 = vsel %vm501, %v1653, %v1654
        %v1658 = vadd.f32 %v1645, %v1655
        %v1659 = vadd.f32 %v1646, %v1654
        %s1660 = sld [smem:[#allocation8 + $0x17]]
        %v1661 = vstv %s1660
        %v1662 = vmul.f32 %v1661, %v915
        %v1663 = vmul.f32 %v1661, %v916
        %v1666 = vrot.slane %v1662, 1
        %v1667 = vrot.slane %v1663, 1
        %v1668 = vsel %vm501, %v1666, %v1667
        %1669 = vrot.lane.b32.xlu0 %v1668, 127
        %v1670 = vpop.permute.xlu0 %1669
        %1671 = vrot.lane.b32.xlu0 %v1667, 127
        %v1672 = vpop.permute.xlu0 %1671
        %v1675 = vadd.f32 %v1658, %v1670
        %v1676 = vadd.f32 %v1659, %v1672
        %s1677 = sld [smem:[#allocation8 + $0x18]]
        %v1678 = vstv %s1677
        %v1679 = vmul.f32 %v1678, %v1137
        %v1680 = vmul.f32 %v1678, %v1138
        %v1681 = vadd.f32 %v1675, %v1679
        %v1682 = vadd.f32 %v1676, %v1680
        %s1683 = sld [smem:[#allocation8 + $0x19]]
        %v1684 = vstv %s1683
        %v1685 = vmul.f32 %v1684, %v1137
        %v1686 = vmul.f32 %v1684, %v1138
        %1689 = vrot.lane.b32.xlu0 %v1685, 127
        %v1690 = vpop.permute.xlu0 %1689
        %1691 = vrot.lane.b32.xlu0 %v1686, 127
        %v1692 = vpop.permute.xlu0 %1691
        %v1695 = vadd.f32 %v1681, %v1690
        %v1696 = vadd.f32 %v1682, %v1692
        %s1697 = sld [smem:[#allocation8 + $0x1a]]
        %v1698 = vstv %s1697
        %v1699 = vmul.f32 %v1698, %v1137
        %v1700 = vmul.f32 %v1698, %v1138
        %v1703 = vrot.slane %v1699, 1
        %v1704 = vrot.slane %v1700, 1
        %v1705 = vsel %vm501, %v1703, %v1704
        %v1708 = vadd.f32 %v1695, %v1705
        %v1709 = vadd.f32 %v1696, %v1704
        %s1710 = sld [smem:[#allocation8 + $0x1b]]
        %v1711 = vstv %s1710
        %v1712 = vmul.f32 %v1711, %v1137
        %v1713 = vmul.f32 %v1711, %v1138
        %v1716 = vrot.slane %v1712, 1
        %v1717 = vrot.slane %v1713, 1
        %v1718 = vsel %vm501, %v1716, %v1717
        %1719 = vrot.lane.b32.xlu0 %v1718, 127
        %v1720 = vpop.permute.xlu0 %1719
        %1721 = vrot.lane.b32.xlu0 %v1717, 127
        %v1722 = vpop.permute.xlu0 %1721
        %v1725 = vadd.f32 %v1708, %v1720
        %v1726 = vadd.f32 %v1709, %v1722
        %s1727 = sld [smem:[#allocation8 + $0x1c]]
        %v1728 = vstv %s1727
        %v1729 = vmul.f32 %v1728, %v1359
        %v1730 = vmul.f32 %v1728, %v1360
        %v1731 = vadd.f32 %v1725, %v1729
        %v1732 = vadd.f32 %v1726, %v1730
        %s1733 = sld [smem:[#allocation8 + $0x1d]]
        %v1734 = vstv %s1733
        %v1735 = vmul.f32 %v1734, %v1359
        %v1736 = vmul.f32 %v1734, %v1360
        %1739 = vrot.lane.b32.xlu0 %v1735, 127
        %v1740 = vpop.permute.xlu0 %1739
        %1741 = vrot.lane.b32.xlu0 %v1736, 127
        %v1742 = vpop.permute.xlu0 %1741
        %v1745 = vadd.f32 %v1731, %v1740
        %v1746 = vadd.f32 %v1732, %v1742
        %s1747 = sld [smem:[#allocation8 + $0x1e]]
        %v1748 = vstv %s1747
        %v1749 = vmul.f32 %v1748, %v1359
        %v1750 = vmul.f32 %v1748, %v1360
        %v1753 = vrot.slane %v1749, 1
        %v1754 = vrot.slane %v1750, 1
        %v1755 = vsel %vm501, %v1753, %v1754
        %v1758 = vadd.f32 %v1745, %v1755
        %v1759 = vadd.f32 %v1746, %v1754
        %s1760 = sld [smem:[#allocation8 + $0x1f]]
        %v1761 = vstv %s1760
        %v1762 = vmul.f32 %v1761, %v1359
        %v1763 = vmul.f32 %v1761, %v1360
        %v1766 = vrot.slane %v1762, 1
        %v1767 = vrot.slane %v1763, 1
        %v1768 = vsel %vm501, %v1766, %v1767
        %1769 = vrot.lane.b32.xlu0 %v1768, 127
        %v1770 = vpop.permute.xlu0 %1769
        %1771 = vrot.lane.b32.xlu0 %v1767, 127
        %v1772 = vpop.permute.xlu0 %1771
        %v1775 = vadd.f32 %v1758, %v1770
        %v1776 = vadd.f32 %v1759, %v1772
        %vm1777 = vcmp.gt.f32.partialorder %v1775, 0.0
        %vm1778 = vcmp.gt.f32.partialorder %v1776, 0.0
        %v1779 = vmul.f32 %v1775, 1.442695
        %v1780 = vpow.pop %v1779
        %v1781 = vmul.f32 %v1776, 1.442695
        %v1782 = vpow.pop %v1781
        %v1783 = vsub.f32 %v1780, 1.0
        %v1784 = vsub.f32 %v1782, 1.0
        %v1785 = vsel %vm1777, %v1775, %v1783
        %v1786 = vsel %vm1778, %v1776, %v1784
        %s1787 = sld [smem:[#allocation9 + $0x2]]
        %v1788 = vstv %s1787
        %v1789 = vadd.f32 %v1788, 0.0
        %s1790 = sld [smem:[#allocation8 + $0x20]]
        %v1791 = vstv %s1790
        %v1792 = vmul.f32 %v1791, %v693
        %v1793 = vmul.f32 %v1791, %v694
        %v1794 = vadd.f32 %v1789, %v1792
        %v1795 = vadd.f32 %v1789, %v1793
        %s1796 = sld [smem:[#allocation8 + $0x21]]
        %v1797 = vstv %s1796
        %v1798 = vmul.f32 %v1797, %v693
        %v1799 = vmul.f32 %v1797, %v694
        %1802 = vrot.lane.b32.xlu0 %v1798, 127
        %v1803 = vpop.permute.xlu0 %1802
        %1804 = vrot.lane.b32.xlu0 %v1799, 127
        %v1805 = vpop.permute.xlu0 %1804
        %v1808 = vadd.f32 %v1794, %v1803
        %v1809 = vadd.f32 %v1795, %v1805
        %s1810 = sld [smem:[#allocation8 + $0x22]]
        %v1811 = vstv %s1810
        %v1812 = vmul.f32 %v1811, %v693
        %v1813 = vmul.f32 %v1811, %v694
        %v1816 = vrot.slane %v1812, 1
        %v1817 = vrot.slane %v1813, 1
        %v1818 = vsel %vm501, %v1816, %v1817
        %v1821 = vadd.f32 %v1808, %v1818
        %v1822 = vadd.f32 %v1809, %v1817
        %s1823 = sld [smem:[#allocation8 + $0x23]]
        %v1824 = vstv %s1823
        %v1825 = vmul.f32 %v1824, %v693
        %v1826 = vmul.f32 %v1824, %v694
        %v1829 = vrot.slane %v1825, 1
        %v1830 = vrot.slane %v1826, 1
        %v1831 = vsel %vm501, %v1829, %v1830
        %1832 = vrot.lane.b32.xlu0 %v1831, 127
        %v1833 = vpop.permute.xlu0 %1832
        %1834 = vrot.lane.b32.xlu0 %v1830, 127
        %v1835 = vpop.permute.xlu0 %1834
        %v1838 = vadd.f32 %v1821, %v1833
        %v1839 = vadd.f32 %v1822, %v1835
        %s1840 = sld [smem:[#allocation8 + $0x24]]
        %v1841 = vstv %s1840
        %v1842 = vmul.f32 %v1841, %v915
        %v1843 = vmul.f32 %v1841, %v916
        %v1844 = vadd.f32 %v1838, %v1842
        %v1845 = vadd.f32 %v1839, %v1843
        %s1846 = sld [smem:[#allocation8 + $0x25]]
        %v1847 = vstv %s1846
        %v1848 = vmul.f32 %v1847, %v915
        %v1849 = vmul.f32 %v1847, %v916
        %1852 = vrot.lane.b32.xlu0 %v1848, 127
        %v1853 = vpop.permute.xlu0 %1852
        %1854 = vrot.lane.b32.xlu0 %v1849, 127
        %v1855 = vpop.permute.xlu0 %1854
        %v1858 = vadd.f32 %v1844, %v1853
        %v1859 = vadd.f32 %v1845, %v1855
        %s1860 = sld [smem:[#allocation8 + $0x26]]
        %v1861 = vstv %s1860
        %v1862 = vmul.f32 %v1861, %v915
        %v1863 = vmul.f32 %v1861, %v916
        %v1866 = vrot.slane %v1862, 1
        %v1867 = vrot.slane %v1863, 1
        %v1868 = vsel %vm501, %v1866, %v1867
        %v1871 = vadd.f32 %v1858, %v1868
        %v1872 = vadd.f32 %v1859, %v1867
        %s1873 = sld [smem:[#allocation8 + $0x27]]
        %v1874 = vstv %s1873
        %v1875 = vmul.f32 %v1874, %v915
        %v1876 = vmul.f32 %v1874, %v916
        %v1879 = vrot.slane %v1875, 1
        %v1880 = vrot.slane %v1876, 1
        %v1881 = vsel %vm501, %v1879, %v1880
        %1882 = vrot.lane.b32.xlu0 %v1881, 127
        %v1883 = vpop.permute.xlu0 %1882
        %1884 = vrot.lane.b32.xlu0 %v1880, 127
        %v1885 = vpop.permute.xlu0 %1884
        %v1888 = vadd.f32 %v1871, %v1883
        %v1889 = vadd.f32 %v1872, %v1885
        %s1890 = sld [smem:[#allocation8 + $0x28]]
        %v1891 = vstv %s1890
        %v1892 = vmul.f32 %v1891, %v1137
        %v1893 = vmul.f32 %v1891, %v1138
        %v1894 = vadd.f32 %v1888, %v1892
        %v1895 = vadd.f32 %v1889, %v1893
        %s1896 = sld [smem:[#allocation8 + $0x29]]
        %v1897 = vstv %s1896
        %v1898 = vmul.f32 %v1897, %v1137
        %v1899 = vmul.f32 %v1897, %v1138
        %1902 = vrot.lane.b32.xlu0 %v1898, 127
        %v1903 = vpop.permute.xlu0 %1902
        %1904 = vrot.lane.b32.xlu0 %v1899, 127
        %v1905 = vpop.permute.xlu0 %1904
        %v1908 = vadd.f32 %v1894, %v1903
        %v1909 = vadd.f32 %v1895, %v1905
        %s1910 = sld [smem:[#allocation8 + $0x2a]]
        %v1911 = vstv %s1910
        %v1912 = vmul.f32 %v1911, %v1137
        %v1913 = vmul.f32 %v1911, %v1138
        %v1916 = vrot.slane %v1912, 1
        %v1917 = vrot.slane %v1913, 1
        %v1918 = vsel %vm501, %v1916, %v1917
        %v1921 = vadd.f32 %v1908, %v1918
        %v1922 = vadd.f32 %v1909, %v1917
        %s1923 = sld [smem:[#allocation8 + $0x2b]]
        %v1924 = vstv %s1923
        %v1925 = vmul.f32 %v1924, %v1137
        %v1926 = vmul.f32 %v1924, %v1138
        %v1929 = vrot.slane %v1925, 1
        %v1930 = vrot.slane %v1926, 1
        %v1931 = vsel %vm501, %v1929, %v1930
        %1932 = vrot.lane.b32.xlu0 %v1931, 127
        %v1933 = vpop.permute.xlu0 %1932
        %1934 = vrot.lane.b32.xlu0 %v1930, 127
        %v1935 = vpop.permute.xlu0 %1934
        %v1938 = vadd.f32 %v1921, %v1933
        %v1939 = vadd.f32 %v1922, %v1935
        %s1940 = sld [smem:[#allocation8 + $0x2c]]
        %v1941 = vstv %s1940
        %v1942 = vmul.f32 %v1941, %v1359
        %v1943 = vmul.f32 %v1941, %v1360
        %v1944 = vadd.f32 %v1938, %v1942
        %v1945 = vadd.f32 %v1939, %v1943
        %s1946 = sld [smem:[#allocation8 + $0x2d]]
        %v1947 = vstv %s1946
        %v1948 = vmul.f32 %v1947, %v1359
        %v1949 = vmul.f32 %v1947, %v1360
        %1952 = vrot.lane.b32.xlu0 %v1948, 127
        %v1953 = vpop.permute.xlu0 %1952
        %1954 = vrot.lane.b32.xlu0 %v1949, 127
        %v1955 = vpop.permute.xlu0 %1954
        %v1958 = vadd.f32 %v1944, %v1953
        %v1959 = vadd.f32 %v1945, %v1955
        %s1960 = sld [smem:[#allocation8 + $0x2e]]
        %v1961 = vstv %s1960
        %v1962 = vmul.f32 %v1961, %v1359
        %v1963 = vmul.f32 %v1961, %v1360
        %v1966 = vrot.slane %v1962, 1
        %v1967 = vrot.slane %v1963, 1
        %v1968 = vsel %vm501, %v1966, %v1967
        %v1971 = vadd.f32 %v1958, %v1968
        %v1972 = vadd.f32 %v1959, %v1967
        %s1973 = sld [smem:[#allocation8 + $0x2f]]
        %v1974 = vstv %s1973
        %v1975 = vmul.f32 %v1974, %v1359
        %v1976 = vmul.f32 %v1974, %v1360
        %v1979 = vrot.slane %v1975, 1
        %v1980 = vrot.slane %v1976, 1
        %v1981 = vsel %vm501, %v1979, %v1980
        %1982 = vrot.lane.b32.xlu0 %v1981, 127
        %v1983 = vpop.permute.xlu0 %1982
        %1984 = vrot.lane.b32.xlu0 %v1980, 127
        %v1985 = vpop.permute.xlu0 %1984
        %v1988 = vadd.f32 %v1971, %v1983
        %v1989 = vadd.f32 %v1972, %v1985
        %vm1990 = vcmp.gt.f32.partialorder %v1988, 0.0
        %vm1991 = vcmp.gt.f32.partialorder %v1989, 0.0
        %v1992 = vmul.f32 %v1988, 1.442695
        %v1993 = vpow.pop %v1992
        %v1994 = vmul.f32 %v1989, 1.442695
        %v1995 = vpow.pop %v1994
        %v1996 = vsub.f32 %v1993, 1.0
        %v1997 = vsub.f32 %v1995, 1.0
        %v1998 = vsel %vm1990, %v1988, %v1996
        %v1999 = vsel %vm1991, %v1989, %v1997
        %s2000 = sld [smem:[#allocation9 + $0x3]]
        %v2001 = vstv %s2000
        %v2002 = vadd.f32 %v2001, 0.0
        %s2003 = sld [smem:[#allocation8 + $0x30]]
        %v2004 = vstv %s2003
        %v2005 = vmul.f32 %v2004, %v693
        %v2006 = vmul.f32 %v2004, %v694
        %v2007 = vadd.f32 %v2002, %v2005
        %v2008 = vadd.f32 %v2002, %v2006
        %s2009 = sld [smem:[#allocation8 + $0x31]]
        %v2010 = vstv %s2009
        %v2011 = vmul.f32 %v2010, %v693
        %v2012 = vmul.f32 %v2010, %v694
        %2015 = vrot.lane.b32.xlu0 %v2011, 127
        %v2016 = vpop.permute.xlu0 %2015
        %2017 = vrot.lane.b32.xlu0 %v2012, 127
        %v2018 = vpop.permute.xlu0 %2017
        %v2021 = vadd.f32 %v2007, %v2016
        %v2022 = vadd.f32 %v2008, %v2018
        %s2023 = sld [smem:[#allocation8 + $0x32]]
        %v2024 = vstv %s2023
        %v2025 = vmul.f32 %v2024, %v693
        %v2026 = vmul.f32 %v2024, %v694
        %v2029 = vrot.slane %v2025, 1
        %v2030 = vrot.slane %v2026, 1
        %v2031 = vsel %vm501, %v2029, %v2030
        %v2034 = vadd.f32 %v2021, %v2031
        %v2035 = vadd.f32 %v2022, %v2030
        %s2036 = sld [smem:[#allocation8 + $0x33]]
        %v2037 = vstv %s2036
        %v2038 = vmul.f32 %v2037, %v693
        %v2039 = vmul.f32 %v2037, %v694
        %v2042 = vrot.slane %v2038, 1
        %v2043 = vrot.slane %v2039, 1
        %v2044 = vsel %vm501, %v2042, %v2043
        %2045 = vrot.lane.b32.xlu0 %v2044, 127
        %v2046 = vpop.permute.xlu0 %2045
        %2047 = vrot.lane.b32.xlu0 %v2043, 127
        %v2048 = vpop.permute.xlu0 %2047
        %v2051 = vadd.f32 %v2034, %v2046
        %v2052 = vadd.f32 %v2035, %v2048
        %s2053 = sld [smem:[#allocation8 + $0x34]]
        %v2054 = vstv %s2053
        %v2055 = vmul.f32 %v2054, %v915
        %v2056 = vmul.f32 %v2054, %v916
        %v2057 = vadd.f32 %v2051, %v2055
        %v2058 = vadd.f32 %v2052, %v2056
        %s2059 = sld [smem:[#allocation8 + $0x35]]
        %v2060 = vstv %s2059
        %v2061 = vmul.f32 %v2060, %v915
        %v2062 = vmul.f32 %v2060, %v916
        %2065 = vrot.lane.b32.xlu0 %v2061, 127
        %v2066 = vpop.permute.xlu0 %2065
        %2067 = vrot.lane.b32.xlu0 %v2062, 127
        %v2068 = vpop.permute.xlu0 %2067
        %v2071 = vadd.f32 %v2057, %v2066
        %v2072 = vadd.f32 %v2058, %v2068
        %s2073 = sld [smem:[#allocation8 + $0x36]]
        %v2074 = vstv %s2073
        %v2075 = vmul.f32 %v2074, %v915
        %v2076 = vmul.f32 %v2074, %v916
        %v2079 = vrot.slane %v2075, 1
        %v2080 = vrot.slane %v2076, 1
        %v2081 = vsel %vm501, %v2079, %v2080
        %v2084 = vadd.f32 %v2071, %v2081
        %v2085 = vadd.f32 %v2072, %v2080
        %s2086 = sld [smem:[#allocation8 + $0x37]]
        %v2087 = vstv %s2086
        %v2088 = vmul.f32 %v2087, %v915
        %v2089 = vmul.f32 %v2087, %v916
        %v2092 = vrot.slane %v2088, 1
        %v2093 = vrot.slane %v2089, 1
        %v2094 = vsel %vm501, %v2092, %v2093
        %2095 = vrot.lane.b32.xlu0 %v2094, 127
        %v2096 = vpop.permute.xlu0 %2095
        %2097 = vrot.lane.b32.xlu0 %v2093, 127
        %v2098 = vpop.permute.xlu0 %2097
        %v2101 = vadd.f32 %v2084, %v2096
        %v2102 = vadd.f32 %v2085, %v2098
        %s2103 = sld [smem:[#allocation8 + $0x38]]
        %v2104 = vstv %s2103
        %v2105 = vmul.f32 %v2104, %v1137
        %v2106 = vmul.f32 %v2104, %v1138
        %v2107 = vadd.f32 %v2101, %v2105
        %v2108 = vadd.f32 %v2102, %v2106
        %s2109 = sld [smem:[#allocation8 + $0x39]]
        %v2110 = vstv %s2109
        %v2111 = vmul.f32 %v2110, %v1137
        %v2112 = vmul.f32 %v2110, %v1138
        %2115 = vrot.lane.b32.xlu0 %v2111, 127
        %v2116 = vpop.permute.xlu0 %2115
        %2117 = vrot.lane.b32.xlu0 %v2112, 127
        %v2118 = vpop.permute.xlu0 %2117
        %v2121 = vadd.f32 %v2107, %v2116
        %v2122 = vadd.f32 %v2108, %v2118
        %s2123 = sld [smem:[#allocation8 + $0x3a]]
        %v2124 = vstv %s2123
        %v2125 = vmul.f32 %v2124, %v1137
        %v2126 = vmul.f32 %v2124, %v1138
        %v2129 = vrot.slane %v2125, 1
        %v2130 = vrot.slane %v2126, 1
        %v2131 = vsel %vm501, %v2129, %v2130
        %v2134 = vadd.f32 %v2121, %v2131
        %v2135 = vadd.f32 %v2122, %v2130
        %s2136 = sld [smem:[#allocation8 + $0x3b]]
        %v2137 = vstv %s2136
        %v2138 = vmul.f32 %v2137, %v1137
        %v2139 = vmul.f32 %v2137, %v1138
        %v2142 = vrot.slane %v2138, 1
        %v2143 = vrot.slane %v2139, 1
        %v2144 = vsel %vm501, %v2142, %v2143
        %2145 = vrot.lane.b32.xlu0 %v2144, 127
        %v2146 = vpop.permute.xlu0 %2145
        %2147 = vrot.lane.b32.xlu0 %v2143, 127
        %v2148 = vpop.permute.xlu0 %2147
        %v2151 = vadd.f32 %v2134, %v2146
        %v2152 = vadd.f32 %v2135, %v2148
        %s2153 = sld [smem:[#allocation8 + $0x3c]]
        %v2154 = vstv %s2153
        %v2155 = vmul.f32 %v2154, %v1359
        %v2156 = vmul.f32 %v2154, %v1360
        %v2157 = vadd.f32 %v2151, %v2155
        %v2158 = vadd.f32 %v2152, %v2156
        %s2159 = sld [smem:[#allocation8 + $0x3d]]
        %v2160 = vstv %s2159
        %v2161 = vmul.f32 %v2160, %v1359
        %v2162 = vmul.f32 %v2160, %v1360
        %2165 = vrot.lane.b32.xlu0 %v2161, 127
        %v2166 = vpop.permute.xlu0 %2165
        %2167 = vrot.lane.b32.xlu0 %v2162, 127
        %v2168 = vpop.permute.xlu0 %2167
        %v2171 = vadd.f32 %v2157, %v2166
        %v2172 = vadd.f32 %v2158, %v2168
        %s2173 = sld [smem:[#allocation8 + $0x3e]]
        %v2174 = vstv %s2173
        %v2175 = vmul.f32 %v2174, %v1359
        %v2176 = vmul.f32 %v2174, %v1360
        %v2179 = vrot.slane %v2175, 1
        %v2180 = vrot.slane %v2176, 1
        %v2181 = vsel %vm501, %v2179, %v2180
        %v2184 = vadd.f32 %v2171, %v2181
        %v2185 = vadd.f32 %v2172, %v2180
        %s2186 = sld [smem:[#allocation8 + $0x3f]]
        %v2187 = vstv %s2186
        %v2188 = vmul.f32 %v2187, %v1359
        %v2189 = vmul.f32 %v2187, %v1360
        %v2192 = vrot.slane %v2188, 1
        %v2193 = vrot.slane %v2189, 1
        %v2194 = vsel %vm501, %v2192, %v2193
        %2195 = vrot.lane.b32.xlu0 %v2194, 127
        %v2196 = vpop.permute.xlu0 %2195
        %2197 = vrot.lane.b32.xlu0 %v2193, 127
        %v2198 = vpop.permute.xlu0 %2197
        %v2201 = vadd.f32 %v2184, %v2196
        %v2202 = vadd.f32 %v2185, %v2198
        %vm2203 = vcmp.gt.f32.partialorder %v2201, 0.0
        %vm2204 = vcmp.gt.f32.partialorder %v2202, 0.0
        %v2205 = vmul.f32 %v2201, 1.442695
        %v2206 = vpow.pop %v2205
        %v2207 = vmul.f32 %v2202, 1.442695
        %v2208 = vpow.pop %v2207
        %v2209 = vsub.f32 %v2206, 1.0
        %v2210 = vsub.f32 %v2208, 1.0
        %v2211 = vsel %vm2203, %v2201, %v2209
        %v2212 = vsel %vm2204, %v2202, %v2210
        %s2213 = sld [smem:[#allocation9 + $0x4]]
        %v2214 = vstv %s2213
        %v2215 = vadd.f32 %v2214, 0.0
        %s2216 = sld [smem:[#allocation8 + $0x40]]
        %v2217 = vstv %s2216
        %v2218 = vmul.f32 %v2217, %v693
        %v2219 = vmul.f32 %v2217, %v694
        %v2220 = vadd.f32 %v2215, %v2218
        %v2221 = vadd.f32 %v2215, %v2219
        %s2222 = sld [smem:[#allocation8 + $0x41]]
        %v2223 = vstv %s2222
        %v2224 = vmul.f32 %v2223, %v693
        %v2225 = vmul.f32 %v2223, %v694
        %2228 = vrot.lane.b32.xlu0 %v2224, 127
        %v2229 = vpop.permute.xlu0 %2228
        %2230 = vrot.lane.b32.xlu0 %v2225, 127
        %v2231 = vpop.permute.xlu0 %2230
        %v2234 = vadd.f32 %v2220, %v2229
        %v2235 = vadd.f32 %v2221, %v2231
        %s2236 = sld [smem:[#allocation8 + $0x42]]
        %v2237 = vstv %s2236
        %v2238 = vmul.f32 %v2237, %v693
        %v2239 = vmul.f32 %v2237, %v694
        %v2242 = vrot.slane %v2238, 1
        %v2243 = vrot.slane %v2239, 1
        %v2244 = vsel %vm501, %v2242, %v2243
        %v2247 = vadd.f32 %v2234, %v2244
        %v2248 = vadd.f32 %v2235, %v2243
        %s2249 = sld [smem:[#allocation8 + $0x43]]
        %v2250 = vstv %s2249
        %v2251 = vmul.f32 %v2250, %v693
        %v2252 = vmul.f32 %v2250, %v694
        %v2255 = vrot.slane %v2251, 1
        %v2256 = vrot.slane %v2252, 1
        %v2257 = vsel %vm501, %v2255, %v2256
        %2258 = vrot.lane.b32.xlu0 %v2257, 127
        %v2259 = vpop.permute.xlu0 %2258
        %2260 = vrot.lane.b32.xlu0 %v2256, 127
        %v2261 = vpop.permute.xlu0 %2260
        %v2264 = vadd.f32 %v2247, %v2259
        %v2265 = vadd.f32 %v2248, %v2261
        %s2266 = sld [smem:[#allocation8 + $0x44]]
        %v2267 = vstv %s2266
        %v2268 = vmul.f32 %v2267, %v915
        %v2269 = vmul.f32 %v2267, %v916
        %v2270 = vadd.f32 %v2264, %v2268
        %v2271 = vadd.f32 %v2265, %v2269
        %s2272 = sld [smem:[#allocation8 + $0x45]]
        %v2273 = vstv %s2272
        %v2274 = vmul.f32 %v2273, %v915
        %v2275 = vmul.f32 %v2273, %v916
        %2278 = vrot.lane.b32.xlu0 %v2274, 127
        %v2279 = vpop.permute.xlu0 %2278
        %2280 = vrot.lane.b32.xlu0 %v2275, 127
        %v2281 = vpop.permute.xlu0 %2280
        %v2284 = vadd.f32 %v2270, %v2279
        %v2285 = vadd.f32 %v2271, %v2281
        %s2286 = sld [smem:[#allocation8 + $0x46]]
        %v2287 = vstv %s2286
        %v2288 = vmul.f32 %v2287, %v915
        %v2289 = vmul.f32 %v2287, %v916
        %v2292 = vrot.slane %v2288, 1
        %v2293 = vrot.slane %v2289, 1
        %v2294 = vsel %vm501, %v2292, %v2293
        %v2297 = vadd.f32 %v2284, %v2294
        %v2298 = vadd.f32 %v2285, %v2293
        %s2299 = sld [smem:[#allocation8 + $0x47]]
        %v2300 = vstv %s2299
        %v2301 = vmul.f32 %v2300, %v915
        %v2302 = vmul.f32 %v2300, %v916
        %v2305 = vrot.slane %v2301, 1
        %v2306 = vrot.slane %v2302, 1
        %v2307 = vsel %vm501, %v2305, %v2306
        %2308 = vrot.lane.b32.xlu0 %v2307, 127
        %v2309 = vpop.permute.xlu0 %2308
        %2310 = vrot.lane.b32.xlu0 %v2306, 127
        %v2311 = vpop.permute.xlu0 %2310
        %v2314 = vadd.f32 %v2297, %v2309
        %v2315 = vadd.f32 %v2298, %v2311
        %s2316 = sld [smem:[#allocation8 + $0x48]]
        %v2317 = vstv %s2316
        %v2318 = vmul.f32 %v2317, %v1137
        %v2319 = vmul.f32 %v2317, %v1138
        %v2320 = vadd.f32 %v2314, %v2318
        %v2321 = vadd.f32 %v2315, %v2319
        %s2322 = sld [smem:[#allocation8 + $0x49]]
        %v2323 = vstv %s2322
        %v2324 = vmul.f32 %v2323, %v1137
        %v2325 = vmul.f32 %v2323, %v1138
        %2328 = vrot.lane.b32.xlu0 %v2324, 127
        %v2329 = vpop.permute.xlu0 %2328
        %2330 = vrot.lane.b32.xlu0 %v2325, 127
        %v2331 = vpop.permute.xlu0 %2330
        %v2334 = vadd.f32 %v2320, %v2329
        %v2335 = vadd.f32 %v2321, %v2331
        %s2336 = sld [smem:[#allocation8 + $0x4a]]
        %v2337 = vstv %s2336
        %v2338 = vmul.f32 %v2337, %v1137
        %v2339 = vmul.f32 %v2337, %v1138
        %v2342 = vrot.slane %v2338, 1
        %v2343 = vrot.slane %v2339, 1
        %v2344 = vsel %vm501, %v2342, %v2343
        %v2347 = vadd.f32 %v2334, %v2344
        %v2348 = vadd.f32 %v2335, %v2343
        %s2349 = sld [smem:[#allocation8 + $0x4b]]
        %v2350 = vstv %s2349
        %v2351 = vmul.f32 %v2350, %v1137
        %v2352 = vmul.f32 %v2350, %v1138
        %v2355 = vrot.slane %v2351, 1
        %v2356 = vrot.slane %v2352, 1
        %v2357 = vsel %vm501, %v2355, %v2356
        %2358 = vrot.lane.b32.xlu0 %v2357, 127
        %v2359 = vpop.permute.xlu0 %2358
        %2360 = vrot.lane.b32.xlu0 %v2356, 127
        %v2361 = vpop.permute.xlu0 %2360
        %v2364 = vadd.f32 %v2347, %v2359
        %v2365 = vadd.f32 %v2348, %v2361
        %s2366 = sld [smem:[#allocation8 + $0x4c]]
        %v2367 = vstv %s2366
        %v2368 = vmul.f32 %v2367, %v1359
        %v2369 = vmul.f32 %v2367, %v1360
        %v2370 = vadd.f32 %v2364, %v2368
        %v2371 = vadd.f32 %v2365, %v2369
        %s2372 = sld [smem:[#allocation8 + $0x4d]]
        %v2373 = vstv %s2372
        %v2374 = vmul.f32 %v2373, %v1359
        %v2375 = vmul.f32 %v2373, %v1360
        %2378 = vrot.lane.b32.xlu0 %v2374, 127
        %v2379 = vpop.permute.xlu0 %2378
        %2380 = vrot.lane.b32.xlu0 %v2375, 127
        %v2381 = vpop.permute.xlu0 %2380
        %v2384 = vadd.f32 %v2370, %v2379
        %v2385 = vadd.f32 %v2371, %v2381
        %s2386 = sld [smem:[#allocation8 + $0x4e]]
        %v2387 = vstv %s2386
        %v2388 = vmul.f32 %v2387, %v1359
        %v2389 = vmul.f32 %v2387, %v1360
        %v2392 = vrot.slane %v2388, 1
        %v2393 = vrot.slane %v2389, 1
        %v2394 = vsel %vm501, %v2392, %v2393
        %v2397 = vadd.f32 %v2384, %v2394
        %v2398 = vadd.f32 %v2385, %v2393
        %s2399 = sld [smem:[#allocation8 + $0x4f]]
        %v2400 = vstv %s2399
        %v2401 = vmul.f32 %v2400, %v1359
        %v2402 = vmul.f32 %v2400, %v1360
        %v2405 = vrot.slane %v2401, 1
        %v2406 = vrot.slane %v2402, 1
        %v2407 = vsel %vm501, %v2405, %v2406
        %2408 = vrot.lane.b32.xlu0 %v2407, 127
        %v2409 = vpop.permute.xlu0 %2408
        %2410 = vrot.lane.b32.xlu0 %v2406, 127
        %v2411 = vpop.permute.xlu0 %2410
        %v2414 = vadd.f32 %v2397, %v2409
        %v2415 = vadd.f32 %v2398, %v2411
        %vm2416 = vcmp.gt.f32.partialorder %v2414, 0.0
        %vm2417 = vcmp.gt.f32.partialorder %v2415, 0.0
        %v2418 = vmul.f32 %v2414, 1.442695
        %v2419 = vpow.pop %v2418
        %v2420 = vmul.f32 %v2415, 1.442695
        %v2421 = vpow.pop %v2420
        %v2422 = vsub.f32 %v2419, 1.0
        %v2423 = vsub.f32 %v2421, 1.0
        %v2424 = vsel %vm2416, %v2414, %v2422
        %v2425 = vsel %vm2417, %v2415, %v2423
        %s2426 = sld [smem:[#allocation9 + $0x5]]
        %v2427 = vstv %s2426
        %v2428 = vadd.f32 %v2427, 0.0
        %s2429 = sld [smem:[#allocation8 + $0x50]]
        %v2430 = vstv %s2429
        %v2431 = vmul.f32 %v2430, %v693
        %v2432 = vmul.f32 %v2430, %v694
        %v2433 = vadd.f32 %v2428, %v2431
        %v2434 = vadd.f32 %v2428, %v2432
        %s2435 = sld [smem:[#allocation8 + $0x51]]
        %v2436 = vstv %s2435
        %v2437 = vmul.f32 %v2436, %v693
        %v2438 = vmul.f32 %v2436, %v694
        %2441 = vrot.lane.b32.xlu0 %v2437, 127
        %v2442 = vpop.permute.xlu0 %2441
        %2443 = vrot.lane.b32.xlu0 %v2438, 127
        %v2444 = vpop.permute.xlu0 %2443
        %v2447 = vadd.f32 %v2433, %v2442
        %v2448 = vadd.f32 %v2434, %v2444
        %s2449 = sld [smem:[#allocation8 + $0x52]]
        %v2450 = vstv %s2449
        %v2451 = vmul.f32 %v2450, %v693
        %v2452 = vmul.f32 %v2450, %v694
        %v2455 = vrot.slane %v2451, 1
        %v2456 = vrot.slane %v2452, 1
        %v2457 = vsel %vm501, %v2455, %v2456
        %v2460 = vadd.f32 %v2447, %v2457
        %v2461 = vadd.f32 %v2448, %v2456
        %s2462 = sld [smem:[#allocation8 + $0x53]]
        %v2463 = vstv %s2462
        %v2464 = vmul.f32 %v2463, %v693
        %v2465 = vmul.f32 %v2463, %v694
        %v2468 = vrot.slane %v2464, 1
        %v2469 = vrot.slane %v2465, 1
        %v2470 = vsel %vm501, %v2468, %v2469
        %2471 = vrot.lane.b32.xlu0 %v2470, 127
        %v2472 = vpop.permute.xlu0 %2471
        %2473 = vrot.lane.b32.xlu0 %v2469, 127
        %v2474 = vpop.permute.xlu0 %2473
        %v2477 = vadd.f32 %v2460, %v2472
        %v2478 = vadd.f32 %v2461, %v2474
        %s2479 = sld [smem:[#allocation8 + $0x54]]
        %v2480 = vstv %s2479
        %v2481 = vmul.f32 %v2480, %v915
        %v2482 = vmul.f32 %v2480, %v916
        %v2483 = vadd.f32 %v2477, %v2481
        %v2484 = vadd.f32 %v2478, %v2482
        %s2485 = sld [smem:[#allocation8 + $0x55]]
        %v2486 = vstv %s2485
        %v2487 = vmul.f32 %v2486, %v915
        %v2488 = vmul.f32 %v2486, %v916
        %2491 = vrot.lane.b32.xlu0 %v2487, 127
        %v2492 = vpop.permute.xlu0 %2491
        %2493 = vrot.lane.b32.xlu0 %v2488, 127
        %v2494 = vpop.permute.xlu0 %2493
        %v2497 = vadd.f32 %v2483, %v2492
        %v2498 = vadd.f32 %v2484, %v2494
        %s2499 = sld [smem:[#allocation8 + $0x56]]
        %v2500 = vstv %s2499
        %v2501 = vmul.f32 %v2500, %v915
        %v2502 = vmul.f32 %v2500, %v916
        %v2505 = vrot.slane %v2501, 1
        %v2506 = vrot.slane %v2502, 1
        %v2507 = vsel %vm501, %v2505, %v2506
        %v2510 = vadd.f32 %v2497, %v2507
        %v2511 = vadd.f32 %v2498, %v2506
        %s2512 = sld [smem:[#allocation8 + $0x57]]
        %v2513 = vstv %s2512
        %v2514 = vmul.f32 %v2513, %v915
        %v2515 = vmul.f32 %v2513, %v916
        %v2518 = vrot.slane %v2514, 1
        %v2519 = vrot.slane %v2515, 1
        %v2520 = vsel %vm501, %v2518, %v2519
        %2521 = vrot.lane.b32.xlu0 %v2520, 127
        %v2522 = vpop.permute.xlu0 %2521
        %2523 = vrot.lane.b32.xlu0 %v2519, 127
        %v2524 = vpop.permute.xlu0 %2523
        %v2527 = vadd.f32 %v2510, %v2522
        %v2528 = vadd.f32 %v2511, %v2524
        %s2529 = sld [smem:[#allocation8 + $0x58]]
        %v2530 = vstv %s2529
        %v2531 = vmul.f32 %v2530, %v1137
        %v2532 = vmul.f32 %v2530, %v1138
        %v2533 = vadd.f32 %v2527, %v2531
        %v2534 = vadd.f32 %v2528, %v2532
        %s2535 = sld [smem:[#allocation8 + $0x59]]
        %v2536 = vstv %s2535
        %v2537 = vmul.f32 %v2536, %v1137
        %v2538 = vmul.f32 %v2536, %v1138
        %2541 = vrot.lane.b32.xlu0 %v2537, 127
        %v2542 = vpop.permute.xlu0 %2541
        %2543 = vrot.lane.b32.xlu0 %v2538, 127
        %v2544 = vpop.permute.xlu0 %2543
        %v2547 = vadd.f32 %v2533, %v2542
        %v2548 = vadd.f32 %v2534, %v2544
        %s2549 = sld [smem:[#allocation8 + $0x5a]]
        %v2550 = vstv %s2549
        %v2551 = vmul.f32 %v2550, %v1137
        %v2552 = vmul.f32 %v2550, %v1138
        %v2555 = vrot.slane %v2551, 1
        %v2556 = vrot.slane %v2552, 1
        %v2557 = vsel %vm501, %v2555, %v2556
        %v2560 = vadd.f32 %v2547, %v2557
        %v2561 = vadd.f32 %v2548, %v2556
        %s2562 = sld [smem:[#allocation8 + $0x5b]]
        %v2563 = vstv %s2562
        %v2564 = vmul.f32 %v2563, %v1137
        %v2565 = vmul.f32 %v2563, %v1138
        %v2568 = vrot.slane %v2564, 1
        %v2569 = vrot.slane %v2565, 1
        %v2570 = vsel %vm501, %v2568, %v2569
        %2571 = vrot.lane.b32.xlu0 %v2570, 127
        %v2572 = vpop.permute.xlu0 %2571
        %2573 = vrot.lane.b32.xlu0 %v2569, 127
        %v2574 = vpop.permute.xlu0 %2573
        %v2577 = vadd.f32 %v2560, %v2572
        %v2578 = vadd.f32 %v2561, %v2574
        %s2579 = sld [smem:[#allocation8 + $0x5c]]
        %v2580 = vstv %s2579
        %v2581 = vmul.f32 %v2580, %v1359
        %v2582 = vmul.f32 %v2580, %v1360
        %v2583 = vadd.f32 %v2577, %v2581
        %v2584 = vadd.f32 %v2578, %v2582
        %s2585 = sld [smem:[#allocation8 + $0x5d]]
        %v2586 = vstv %s2585
        %v2587 = vmul.f32 %v2586, %v1359
        %v2588 = vmul.f32 %v2586, %v1360
        %2591 = vrot.lane.b32.xlu0 %v2587, 127
        %v2592 = vpop.permute.xlu0 %2591
        %2593 = vrot.lane.b32.xlu0 %v2588, 127
        %v2594 = vpop.permute.xlu0 %2593
        %v2597 = vadd.f32 %v2583, %v2592
        %v2598 = vadd.f32 %v2584, %v2594
        %s2599 = sld [smem:[#allocation8 + $0x5e]]
        %v2600 = vstv %s2599
        %v2601 = vmul.f32 %v2600, %v1359
        %v2602 = vmul.f32 %v2600, %v1360
        %v2605 = vrot.slane %v2601, 1
        %v2606 = vrot.slane %v2602, 1
        %v2607 = vsel %vm501, %v2605, %v2606
        %v2610 = vadd.f32 %v2597, %v2607
        %v2611 = vadd.f32 %v2598, %v2606
        %s2612 = sld [smem:[#allocation8 + $0x5f]]
        %v2613 = vstv %s2612
        %v2614 = vmul.f32 %v2613, %v1359
        %v2615 = vmul.f32 %v2613, %v1360
        %v2618 = vrot.slane %v2614, 1
        %v2619 = vrot.slane %v2615, 1
        %v2620 = vsel %vm501, %v2618, %v2619
        %2621 = vrot.lane.b32.xlu0 %v2620, 127
        %v2622 = vpop.permute.xlu0 %2621
        %2623 = vrot.lane.b32.xlu0 %v2619, 127
        %v2624 = vpop.permute.xlu0 %2623
        %v2627 = vadd.f32 %v2610, %v2622
        %v2628 = vadd.f32 %v2611, %v2624
        %vm2629 = vcmp.gt.f32.partialorder %v2627, 0.0
        %vm2630 = vcmp.gt.f32.partialorder %v2628, 0.0
        %v2631 = vmul.f32 %v2627, 1.442695
        %v2632 = vpow.pop %v2631
        %v2633 = vmul.f32 %v2628, 1.442695
        %v2634 = vpow.pop %v2633
        %v2635 = vsub.f32 %v2632, 1.0
        %v2636 = vsub.f32 %v2634, 1.0
        %v2637 = vsel %vm2629, %v2627, %v2635
        %v2638 = vsel %vm2630, %v2628, %v2636
        %s2639 = sld [smem:[#allocation9 + $0x6]]
        %v2640 = vstv %s2639
        %v2641 = vadd.f32 %v2640, 0.0
        %s2642 = sld [smem:[#allocation8 + $0x60]]
        %v2643 = vstv %s2642
        %v2644 = vmul.f32 %v2643, %v693
        %v2645 = vmul.f32 %v2643, %v694
        %v2646 = vadd.f32 %v2641, %v2644
        %v2647 = vadd.f32 %v2641, %v2645
        %s2648 = sld [smem:[#allocation8 + $0x61]]
        %v2649 = vstv %s2648
        %v2650 = vmul.f32 %v2649, %v693
        %v2651 = vmul.f32 %v2649, %v694
        %2654 = vrot.lane.b32.xlu0 %v2650, 127
        %v2655 = vpop.permute.xlu0 %2654
        %2656 = vrot.lane.b32.xlu0 %v2651, 127
        %v2657 = vpop.permute.xlu0 %2656
        %v2660 = vadd.f32 %v2646, %v2655
        %v2661 = vadd.f32 %v2647, %v2657
        %s2662 = sld [smem:[#allocation8 + $0x62]]
        %v2663 = vstv %s2662
        %v2664 = vmul.f32 %v2663, %v693
        %v2665 = vmul.f32 %v2663, %v694
        %v2668 = vrot.slane %v2664, 1
        %v2669 = vrot.slane %v2665, 1
        %v2670 = vsel %vm501, %v2668, %v2669
        %v2673 = vadd.f32 %v2660, %v2670
        %v2674 = vadd.f32 %v2661, %v2669
        %s2675 = sld [smem:[#allocation8 + $0x63]]
        %v2676 = vstv %s2675
        %v2677 = vmul.f32 %v2676, %v693
        %v2678 = vmul.f32 %v2676, %v694
        %v2681 = vrot.slane %v2677, 1
        %v2682 = vrot.slane %v2678, 1
        %v2683 = vsel %vm501, %v2681, %v2682
        %2684 = vrot.lane.b32.xlu0 %v2683, 127
        %v2685 = vpop.permute.xlu0 %2684
        %2686 = vrot.lane.b32.xlu0 %v2682, 127
        %v2687 = vpop.permute.xlu0 %2686
        %v2690 = vadd.f32 %v2673, %v2685
        %v2691 = vadd.f32 %v2674, %v2687
        %s2692 = sld [smem:[#allocation8 + $0x64]]
        %v2693 = vstv %s2692
        %v2694 = vmul.f32 %v2693, %v915
        %v2695 = vmul.f32 %v2693, %v916
        %v2696 = vadd.f32 %v2690, %v2694
        %v2697 = vadd.f32 %v2691, %v2695
        %s2698 = sld [smem:[#allocation8 + $0x65]]
        %v2699 = vstv %s2698
        %v2700 = vmul.f32 %v2699, %v915
        %v2701 = vmul.f32 %v2699, %v916
        %2704 = vrot.lane.b32.xlu0 %v2700, 127
        %v2705 = vpop.permute.xlu0 %2704
        %2706 = vrot.lane.b32.xlu0 %v2701, 127
        %v2707 = vpop.permute.xlu0 %2706
        %v2710 = vadd.f32 %v2696, %v2705
        %v2711 = vadd.f32 %v2697, %v2707
        %s2712 = sld [smem:[#allocation8 + $0x66]]
        %v2713 = vstv %s2712
        %v2714 = vmul.f32 %v2713, %v915
        %v2715 = vmul.f32 %v2713, %v916
        %v2718 = vrot.slane %v2714, 1
        %v2719 = vrot.slane %v2715, 1
        %v2720 = vsel %vm501, %v2718, %v2719
        %v2723 = vadd.f32 %v2710, %v2720
        %v2724 = vadd.f32 %v2711, %v2719
        %s2725 = sld [smem:[#allocation8 + $0x67]]
        %v2726 = vstv %s2725
        %v2727 = vmul.f32 %v2726, %v915
        %v2728 = vmul.f32 %v2726, %v916
        %v2731 = vrot.slane %v2727, 1
        %v2732 = vrot.slane %v2728, 1
        %v2733 = vsel %vm501, %v2731, %v2732
        %2734 = vrot.lane.b32.xlu0 %v2733, 127
        %v2735 = vpop.permute.xlu0 %2734
        %2736 = vrot.lane.b32.xlu0 %v2732, 127
        %v2737 = vpop.permute.xlu0 %2736
        %v2740 = vadd.f32 %v2723, %v2735
        %v2741 = vadd.f32 %v2724, %v2737
        %s2742 = sld [smem:[#allocation8 + $0x68]]
        %v2743 = vstv %s2742
        %v2744 = vmul.f32 %v2743, %v1137
        %v2745 = vmul.f32 %v2743, %v1138
        %v2746 = vadd.f32 %v2740, %v2744
        %v2747 = vadd.f32 %v2741, %v2745
        %s2748 = sld [smem:[#allocation8 + $0x69]]
        %v2749 = vstv %s2748
        %v2750 = vmul.f32 %v2749, %v1137
        %v2751 = vmul.f32 %v2749, %v1138
        %2754 = vrot.lane.b32.xlu0 %v2750, 127
        %v2755 = vpop.permute.xlu0 %2754
        %2756 = vrot.lane.b32.xlu0 %v2751, 127
        %v2757 = vpop.permute.xlu0 %2756
        %v2760 = vadd.f32 %v2746, %v2755
        %v2761 = vadd.f32 %v2747, %v2757
        %s2762 = sld [smem:[#allocation8 + $0x6a]]
        %v2763 = vstv %s2762
        %v2764 = vmul.f32 %v2763, %v1137
        %v2765 = vmul.f32 %v2763, %v1138
        %v2768 = vrot.slane %v2764, 1
        %v2769 = vrot.slane %v2765, 1
        %v2770 = vsel %vm501, %v2768, %v2769
        %v2773 = vadd.f32 %v2760, %v2770
        %v2774 = vadd.f32 %v2761, %v2769
        %s2775 = sld [smem:[#allocation8 + $0x6b]]
        %v2776 = vstv %s2775
        %v2777 = vmul.f32 %v2776, %v1137
        %v2778 = vmul.f32 %v2776, %v1138
        %v2781 = vrot.slane %v2777, 1
        %v2782 = vrot.slane %v2778, 1
        %v2783 = vsel %vm501, %v2781, %v2782
        %2784 = vrot.lane.b32.xlu0 %v2783, 127
        %v2785 = vpop.permute.xlu0 %2784
        %2786 = vrot.lane.b32.xlu0 %v2782, 127
        %v2787 = vpop.permute.xlu0 %2786
        %v2790 = vadd.f32 %v2773, %v2785
        %v2791 = vadd.f32 %v2774, %v2787
        %s2792 = sld [smem:[#allocation8 + $0x6c]]
        %v2793 = vstv %s2792
        %v2794 = vmul.f32 %v2793, %v1359
        %v2795 = vmul.f32 %v2793, %v1360
        %v2796 = vadd.f32 %v2790, %v2794
        %v2797 = vadd.f32 %v2791, %v2795
        %s2798 = sld [smem:[#allocation8 + $0x6d]]
        %v2799 = vstv %s2798
        %v2800 = vmul.f32 %v2799, %v1359
        %v2801 = vmul.f32 %v2799, %v1360
        %2804 = vrot.lane.b32.xlu0 %v2800, 127
        %v2805 = vpop.permute.xlu0 %2804
        %2806 = vrot.lane.b32.xlu0 %v2801, 127
        %v2807 = vpop.permute.xlu0 %2806
        %v2810 = vadd.f32 %v2796, %v2805
        %v2811 = vadd.f32 %v2797, %v2807
        %s2812 = sld [smem:[#allocation8 + $0x6e]]
        %v2813 = vstv %s2812
        %v2814 = vmul.f32 %v2813, %v1359
        %v2815 = vmul.f32 %v2813, %v1360
        %v2818 = vrot.slane %v2814, 1
        %v2819 = vrot.slane %v2815, 1
        %v2820 = vsel %vm501, %v2818, %v2819
        %v2823 = vadd.f32 %v2810, %v2820
        %v2824 = vadd.f32 %v2811, %v2819
        %s2825 = sld [smem:[#allocation8 + $0x6f]]
        %v2826 = vstv %s2825
        %v2827 = vmul.f32 %v2826, %v1359
        %v2828 = vmul.f32 %v2826, %v1360
        %v2831 = vrot.slane %v2827, 1
        %v2832 = vrot.slane %v2828, 1
        %v2833 = vsel %vm501, %v2831, %v2832
        %2834 = vrot.lane.b32.xlu0 %v2833, 127
        %v2835 = vpop.permute.xlu0 %2834
        %2836 = vrot.lane.b32.xlu0 %v2832, 127
        %v2837 = vpop.permute.xlu0 %2836
        %v2840 = vadd.f32 %v2823, %v2835
        %v2841 = vadd.f32 %v2824, %v2837
        %vm2842 = vcmp.gt.f32.partialorder %v2840, 0.0
        %vm2843 = vcmp.gt.f32.partialorder %v2841, 0.0
        %v2844 = vmul.f32 %v2840, 1.442695
        %v2845 = vpow.pop %v2844
        %v2846 = vmul.f32 %v2841, 1.442695
        %v2847 = vpow.pop %v2846
        %v2848 = vsub.f32 %v2845, 1.0
        %v2849 = vsub.f32 %v2847, 1.0
        %v2850 = vsel %vm2842, %v2840, %v2848
        %v2851 = vsel %vm2843, %v2841, %v2849
        %s2852 = sld [smem:[#allocation9 + $0x7]]
        %v2853 = vstv %s2852
        %v2854 = vadd.f32 %v2853, 0.0
        %s2855 = sld [smem:[#allocation8 + $0x70]]
        %v2856 = vstv %s2855
        %v2857 = vmul.f32 %v2856, %v693
        %v2858 = vmul.f32 %v2856, %v694
        %v2859 = vadd.f32 %v2854, %v2857
        %v2860 = vadd.f32 %v2854, %v2858
        %s2861 = sld [smem:[#allocation8 + $0x71]]
        %v2862 = vstv %s2861
        %v2863 = vmul.f32 %v2862, %v693
        %v2864 = vmul.f32 %v2862, %v694
        %2867 = vrot.lane.b32.xlu0 %v2863, 127
        %v2868 = vpop.permute.xlu0 %2867
        %2869 = vrot.lane.b32.xlu0 %v2864, 127
        %v2870 = vpop.permute.xlu0 %2869
        %v2873 = vadd.f32 %v2859, %v2868
        %v2874 = vadd.f32 %v2860, %v2870
        %s2875 = sld [smem:[#allocation8 + $0x72]]
        %v2876 = vstv %s2875
        %v2877 = vmul.f32 %v2876, %v693
        %v2878 = vmul.f32 %v2876, %v694
        %v2881 = vrot.slane %v2877, 1
        %v2882 = vrot.slane %v2878, 1
        %v2883 = vsel %vm501, %v2881, %v2882
        %v2886 = vadd.f32 %v2873, %v2883
        %v2887 = vadd.f32 %v2874, %v2882
        %s2888 = sld [smem:[#allocation8 + $0x73]]
        %v2889 = vstv %s2888
        %v2890 = vmul.f32 %v2889, %v693
        %v2891 = vmul.f32 %v2889, %v694
        %v2894 = vrot.slane %v2890, 1
        %v2895 = vrot.slane %v2891, 1
        %v2896 = vsel %vm501, %v2894, %v2895
        %2897 = vrot.lane.b32.xlu0 %v2896, 127
        %v2898 = vpop.permute.xlu0 %2897
        %2899 = vrot.lane.b32.xlu0 %v2895, 127
        %v2900 = vpop.permute.xlu0 %2899
        %v2903 = vadd.f32 %v2886, %v2898
        %v2904 = vadd.f32 %v2887, %v2900
        %s2905 = sld [smem:[#allocation8 + $0x74]]
        %v2906 = vstv %s2905
        %v2907 = vmul.f32 %v2906, %v915
        %v2908 = vmul.f32 %v2906, %v916
        %v2909 = vadd.f32 %v2903, %v2907
        %v2910 = vadd.f32 %v2904, %v2908
        %s2911 = sld [smem:[#allocation8 + $0x75]]
        %v2912 = vstv %s2911
        %v2913 = vmul.f32 %v2912, %v915
        %v2914 = vmul.f32 %v2912, %v916
        %2917 = vrot.lane.b32.xlu0 %v2913, 127
        %v2918 = vpop.permute.xlu0 %2917
        %2919 = vrot.lane.b32.xlu0 %v2914, 127
        %v2920 = vpop.permute.xlu0 %2919
        %v2923 = vadd.f32 %v2909, %v2918
        %v2924 = vadd.f32 %v2910, %v2920
        %s2925 = sld [smem:[#allocation8 + $0x76]]
        %v2926 = vstv %s2925
        %v2927 = vmul.f32 %v2926, %v915
        %v2928 = vmul.f32 %v2926, %v916
        %v2931 = vrot.slane %v2927, 1
        %v2932 = vrot.slane %v2928, 1
        %v2933 = vsel %vm501, %v2931, %v2932
        %v2936 = vadd.f32 %v2923, %v2933
        %v2937 = vadd.f32 %v2924, %v2932
        %s2938 = sld [smem:[#allocation8 + $0x77]]
        %v2939 = vstv %s2938
        %v2940 = vmul.f32 %v2939, %v915
        %v2941 = vmul.f32 %v2939, %v916
        %v2944 = vrot.slane %v2940, 1
        %v2945 = vrot.slane %v2941, 1
        %v2946 = vsel %vm501, %v2944, %v2945
        %2947 = vrot.lane.b32.xlu0 %v2946, 127
        %v2948 = vpop.permute.xlu0 %2947
        %2949 = vrot.lane.b32.xlu0 %v2945, 127
        %v2950 = vpop.permute.xlu0 %2949
        %v2953 = vadd.f32 %v2936, %v2948
        %v2954 = vadd.f32 %v2937, %v2950
        %s2955 = sld [smem:[#allocation8 + $0x78]]
        %v2956 = vstv %s2955
        %v2957 = vmul.f32 %v2956, %v1137
        %v2958 = vmul.f32 %v2956, %v1138
        %v2959 = vadd.f32 %v2953, %v2957
        %v2960 = vadd.f32 %v2954, %v2958
        %s2961 = sld [smem:[#allocation8 + $0x79]]
        %v2962 = vstv %s2961
        %v2963 = vmul.f32 %v2962, %v1137
        %v2964 = vmul.f32 %v2962, %v1138
        %2967 = vrot.lane.b32.xlu0 %v2963, 127
        %v2968 = vpop.permute.xlu0 %2967
        %2969 = vrot.lane.b32.xlu0 %v2964, 127
        %v2970 = vpop.permute.xlu0 %2969
        %v2973 = vadd.f32 %v2959, %v2968
        %v2974 = vadd.f32 %v2960, %v2970
        %s2975 = sld [smem:[#allocation8 + $0x7a]]
        %v2976 = vstv %s2975
        %v2977 = vmul.f32 %v2976, %v1137
        %v2978 = vmul.f32 %v2976, %v1138
        %v2981 = vrot.slane %v2977, 1
        %v2982 = vrot.slane %v2978, 1
        %v2983 = vsel %vm501, %v2981, %v2982
        %v2986 = vadd.f32 %v2973, %v2983
        %v2987 = vadd.f32 %v2974, %v2982
        %s2988 = sld [smem:[#allocation8 + $0x7b]]
        %v2989 = vstv %s2988
        %v2990 = vmul.f32 %v2989, %v1137
        %v2991 = vmul.f32 %v2989, %v1138
        %v2994 = vrot.slane %v2990, 1
        %v2995 = vrot.slane %v2991, 1
        %v2996 = vsel %vm501, %v2994, %v2995
        %2997 = vrot.lane.b32.xlu0 %v2996, 127
        %v2998 = vpop.permute.xlu0 %2997
        %2999 = vrot.lane.b32.xlu0 %v2995, 127
        %v3000 = vpop.permute.xlu0 %2999
        %v3003 = vadd.f32 %v2986, %v2998
        %v3004 = vadd.f32 %v2987, %v3000
        %s3005 = sld [smem:[#allocation8 + $0x7c]]
        %v3006 = vstv %s3005
        %v3007 = vmul.f32 %v3006, %v1359
        %v3008 = vmul.f32 %v3006, %v1360
        %v3009 = vadd.f32 %v3003, %v3007
        %v3010 = vadd.f32 %v3004, %v3008
        %s3011 = sld [smem:[#allocation8 + $0x7d]]
        %v3012 = vstv %s3011
        %v3013 = vmul.f32 %v3012, %v1359
        %v3014 = vmul.f32 %v3012, %v1360
        %3017 = vrot.lane.b32.xlu0 %v3013, 127
        %v3018 = vpop.permute.xlu0 %3017
        %3019 = vrot.lane.b32.xlu0 %v3014, 127
        %v3020 = vpop.permute.xlu0 %3019
        %v3023 = vadd.f32 %v3009, %v3018
        %v3024 = vadd.f32 %v3010, %v3020
        %s3025 = sld [smem:[#allocation8 + $0x7e]]
        %v3026 = vstv %s3025
        %v3027 = vmul.f32 %v3026, %v1359
        %v3028 = vmul.f32 %v3026, %v1360
        %v3031 = vrot.slane %v3027, 1
        %v3032 = vrot.slane %v3028, 1
        %v3033 = vsel %vm501, %v3031, %v3032
        %v3036 = vadd.f32 %v3023, %v3033
        %v3037 = vadd.f32 %v3024, %v3032
        %s3038 = sld [smem:[#allocation8 + $0x7f]]
        %v3039 = vstv %s3038
        %v3040 = vmul.f32 %v3039, %v1359
        %v3041 = vmul.f32 %v3039, %v1360
        %v3044 = vrot.slane %v3040, 1
        %v3045 = vrot.slane %v3041, 1
        %v3046 = vsel %vm501, %v3044, %v3045
        %3047 = vrot.lane.b32.xlu0 %v3046, 127
        %v3048 = vpop.permute.xlu0 %3047
        %3049 = vrot.lane.b32.xlu0 %v3045, 127
        %v3050 = vpop.permute.xlu0 %3049
        %v3053 = vadd.f32 %v3036, %v3048
        %v3054 = vadd.f32 %v3037, %v3050
        %vm3055 = vcmp.gt.f32.partialorder %v3053, 0.0
        %vm3056 = vcmp.gt.f32.partialorder %v3054, 0.0
        %v3057 = vmul.f32 %v3053, 1.442695
        %v3058 = vpow.pop %v3057
        %v3059 = vmul.f32 %v3054, 1.442695
        %v3060 = vpow.pop %v3059
        %v3061 = vsub.f32 %v3058, 1.0
        %v3062 = vsub.f32 %v3060, 1.0
        %v3063 = vsel %vm3055, %v3053, %v3061
        %v3064 = vsel %vm3056, %v3054, %v3062
        %v3065 = vld [vmem:[%s10] sm:$0x1]
        %v3066 = vlaneseq
        %vm3067 = vcmp.ge.s32.totalorder %v3066, 0
        %vm3068 = vcmp.lt.s32.totalorder %v3066, 12
        %vm3069 = vmand %vm3067, %vm3068
        %3070 = vst.msk [vmem:[#allocation2] sm:$0x1] %vm3069, %v1572
        %3072 = vst [vmem:[#allocation1] sm:$0xff] %v1572
        %s3073 = scalar_lea.vmem [#allocation1], 1
        %v3074 = vld [vmem:[%s3073] ss:$9 sm:$0xff]
        %3075 = vrot.lane.b32.xlu0 %v3074, 12
        %v3076 = vpop.permute.xlu0 %3075
        %vm3078 = vcmp.ge.s32.totalorder %v3066, 12
        %vm3079 = vcmp.lt.s32.totalorder %v3066, 24
        %vm3080 = vmand %vm3078, %vm3079
        %3081 = vst.msk [vmem:[#allocation2] sm:$0x1] %vm3080, %v3076
        %3082 = vst [vmem:[#allocation1] sm:$0xff] %v1572
        %s3083 = scalar_lea.vmem [#allocation1], 2
        %v3084 = vld [vmem:[%s3083] ss:$9 sm:$0xff]
        %3085 = vrot.lane.b32.xlu0 %v3084, 24
        %v3086 = vpop.permute.xlu0 %3085
        %vm3088 = vcmp.ge.s32.totalorder %v3066, 24
        %vm3089 = vcmp.lt.s32.totalorder %v3066, 36
        %vm3090 = vmand %vm3088, %vm3089
        %3091 = vst.msk [vmem:[#allocation2] sm:$0x1] %vm3090, %v3086
        %3092 = vst [vmem:[#allocation1] sm:$0xff] %v1572
        %s3093 = scalar_lea.vmem [#allocation1], 3
        %v3094 = vld [vmem:[%s3093] ss:$9 sm:$0xff]
        %3095 = vrot.lane.b32.xlu0 %v3094, 36
        %v3096 = vpop.permute.xlu0 %3095
        %vm3098 = vcmp.ge.s32.totalorder %v3066, 36
        %vm3099 = vcmp.lt.s32.totalorder %v3066, 48
        %vm3100 = vmand %vm3098, %vm3099
        %3101 = vst.msk [vmem:[#allocation2] sm:$0x1] %vm3100, %v3096
        %3102 = vst [vmem:[#allocation1] sm:$0xff] %v1572
        %s3103 = scalar_lea.vmem [#allocation1], 4
        %v3104 = vld [vmem:[%s3103] ss:$9 sm:$0xff]
        %3105 = vrot.lane.b32.xlu0 %v3104, 48
        %v3106 = vpop.permute.xlu0 %3105
        %vm3108 = vcmp.ge.s32.totalorder %v3066, 48
        %vm3109 = vcmp.lt.s32.totalorder %v3066, 60
        %vm3110 = vmand %vm3108, %vm3109
        %3111 = vst.msk [vmem:[#allocation2] sm:$0x1] %vm3110, %v3106
        %3112 = vst [vmem:[#allocation1] sm:$0xff] %v1572
        %s3113 = scalar_lea.vmem [#allocation1], 5
        %v3114 = vld [vmem:[%s3113] ss:$9 sm:$0xff]
        %3115 = vrot.lane.b32.xlu0 %v3114, 60
        %v3116 = vpop.permute.xlu0 %3115
        %vm3118 = vcmp.ge.s32.totalorder %v3066, 60
        %vm3119 = vcmp.lt.s32.totalorder %v3066, 72
        %vm3120 = vmand %vm3118, %vm3119
        %3121 = vst.msk [vmem:[#allocation2] sm:$0x1] %vm3120, %v3116
        %3122 = vst [vmem:[#allocation1] sm:$0xff] %v1572
        %s3123 = scalar_lea.vmem [#allocation1], 6
        %v3124 = vld [vmem:[%s3123] ss:$9 sm:$0xff]
        %3125 = vrot.lane.b32.xlu0 %v3124, 72
        %v3126 = vpop.permute.xlu0 %3125
        %vm3128 = vcmp.ge.s32.totalorder %v3066, 72
        %vm3129 = vcmp.lt.s32.totalorder %v3066, 84
        %vm3130 = vmand %vm3128, %vm3129
        %3131 = vst.msk [vmem:[#allocation2] sm:$0x1] %vm3130, %v3126
        %3132 = vst [vmem:[#allocation1] sm:$0xff] %v1572
        %s3133 = scalar_lea.vmem [#allocation1], 7
        %v3134 = vld [vmem:[%s3133] ss:$9 sm:$0xff]
        %3135 = vrot.lane.b32.xlu0 %v3134, 84
        %v3136 = vpop.permute.xlu0 %3135
        %vm3138 = vcmp.ge.s32.totalorder %v3066, 84
        %vm3139 = vcmp.lt.s32.totalorder %v3066, 96
        %vm3140 = vmand %vm3138, %vm3139
        %3141 = vst.msk [vmem:[#allocation2] sm:$0x1] %vm3140, %v3136
        %3143 = vrot.lane.b32.xlu0 %v1573, 96
        %v3144 = vpop.permute.xlu0 %3143
        %vm3146 = vcmp.ge.s32.totalorder %v3066, 96
        %vm3147 = vcmp.lt.s32.totalorder %v3066, 108
        %vm3148 = vmand %vm3146, %vm3147
        %3149 = vst.msk [vmem:[#allocation2] sm:$0x1] %vm3148, %v3144
        %3150 = vst [vmem:[#allocation1] sm:$0xff] %v1573
        %s3151 = scalar_lea.vmem [#allocation1], 1
        %v3152 = vld [vmem:[%s3151] ss:$9 sm:$0xff]
        %3153 = vrot.lane.b32.xlu0 %v3152, 108
        %v3154 = vpop.permute.xlu0 %3153
        %vm3156 = vcmp.ge.s32.totalorder %v3066, 108
        %vm3157 = vcmp.lt.s32.totalorder %v3066, 120
        %vm3158 = vmand %vm3156, %vm3157
        %3159 = vst.msk [vmem:[#allocation2] sm:$0x1] %vm3158, %v3154
        %3160 = vst [vmem:[#allocation1] sm:$0xff] %v1573
        %s3161 = scalar_lea.vmem [#allocation1], 2
        %v3162 = vld [vmem:[%s3161] ss:$9 sm:$0xff]
        %3163 = vrot.lane.b32.xlu0 %v3162, 120
        %v3164 = vpop.permute.xlu0 %3163
        %v3165 = vrot.slane %v3164, 7
        %vm3166 = vcmask 982016
        %v3167 = vsel %vm3166, %v3165, %v3164
        %vm3169 = vcmp.ge.s32.totalorder %v3066, 120
        %vm3170 = vcmp.lt.s32.totalorder %v3066, 132
        %vm3171 = vmand %vm3169, %vm3170
        %3172 = vst.msk [vmem:[#allocation2] sm:$0x3] %vm3171, %v3167
        %3173 = vst [vmem:[#allocation1] sm:$0xff] %v1573
        %s3174 = scalar_lea.vmem [#allocation1], 3
        %v3175 = vld [vmem:[%s3174] ss:$9 sm:$0xff]
        %3176 = vrot.lane.b32.xlu0 %v3175, 4
        %v3177 = vpop.permute.xlu0 %3176
        %vm3179 = vcmp.ge.s32.totalorder %v3066, 4
        %vm3180 = vcmp.lt.s32.totalorder %v3066, 16
        %vm3181 = vmand %vm3179, %vm3180
        %3182 = vst.msk [vmem:[#allocation2 + $0x1] sm:$0x1] %vm3181, %v3177
        %v3183 = vld [vmem:[%s9] sm:$0xff]
        %v3184 = vld [vmem:[%s9 + $0x8] sm:$0xff]
        %v3185 = vld [vmem:[%s9 + $0x10] sm:$0xff]
        %v3186 = vld [vmem:[%s9 + $0x18] sm:$0xff]
        %v3187 = vld [vmem:[%s9 + $0x20] sm:$0xff]
        %v3188 = vld [vmem:[%s9 + $0x28] sm:$0xff]
        %v3189 = vld [vmem:[%s9 + $0x30] sm:$0xff]
        %v3190 = vld [vmem:[%s9 + $0x38] sm:$0xff]
        %v3191 = vld [vmem:[%s9 + $0x40] sm:$0xff]
        %v3192 = vld [vmem:[%s9 + $0x48] sm:$0xff]
        %v3193 = vld [vmem:[%s9 + $0x50] sm:$0xff]
        %v3194 = vld [vmem:[%s9 + $0x58] sm:$0xff]
        %v3195 = vld [vmem:[%s9 + $0x60] sm:$0xff]
        %v3196 = vld [vmem:[%s9 + $0x68] sm:$0xff]
        %v3197 = vld [vmem:[%s9 + $0x70] sm:$0xff]
        %v3198 = vld [vmem:[%s9 + $0x78] sm:$0xff]
        %v3199 = vld [vmem:[%s9 + $0x80] sm:$0xff]
        %v3200 = vld [vmem:[%s9 + $0x88] sm:$0xff]
        %v3201 = vld [vmem:[#allocation2] sm:$0x3]
        %v3203 = vperm.slane %v3201, 0
        %v3204 = vperm.slane %v3201, 1
        %vm3206 = vcmask 130048
        %v3207 = vsel %vm3206, %v3204, 0
        %3209 = vmatpush.msra.mxu0 %v3198
        %3210 = vmatpush.msra.mxu0 %v3197
        %3211 = vmatpush.msra.mxu0 %v3196
        %3212 = vmatpush.msra.mxu0 %v3195
        %3213 = vmatpush.msra.mxu0 %v3194
        %3214 = vmatpush.msra.mxu0 %v3193
        %3215 = vmatpush.msra.mxu0 %v3192
        %3216 = vmatpush.msra.mxu0 %v3191
        %3217 = vmatpush.msra.mxu0 %v3190
        %3218 = vmatpush.msra.mxu0 %v3189
        %3219 = vmatpush.msra.mxu0 %v3188
        %3220 = vmatpush.msra.mxu0 %v3187
        %3221 = vmatpush.msra.mxu0 %v3186
        %3222 = vmatpush.msra.mxu0 %v3185
        %3223 = vmatpush.msra.mxu0 %v3184
        %3224 = vmatpush.msra.mxu0 %v3183
        %3225 = vmatmul.f32.gmra.mxu0 %v3203
        %v3226 = vpop.f32.mrf.mxu0
        %v3227 = vadd.f32 0.0, %v3226
        %3228 = vdwg.mxu0
        %3229 = vmatpush.msra.mxu0 0.0
        %3230 = vmatpush.msra.mxu0 0.0
        %3231 = vmatpush.msra.mxu0 0.0
        %3232 = vmatpush.msra.mxu0 0.0
        %3233 = vmatpush.msra.mxu0 0.0
        %3234 = vmatpush.msra.mxu0 0.0
        %3235 = vmatpush.msra.mxu0 0.0
        %3236 = vmatpush.msra.mxu0 0.0
        %3237 = vmatpush.msra.mxu0 0.0
        %3238 = vmatpush.msra.mxu0 0.0
        %3239 = vmatpush.msra.mxu0 0.0
        %3240 = vmatpush.msra.mxu0 0.0
        %3241 = vmatpush.msra.mxu0 0.0
        %3242 = vmatpush.msra.mxu0 0.0
        %3243 = vmatpush.msra.mxu0 %v3200
        %3244 = vmatpush.msra.mxu0 %v3199
        %3245 = vmatmul.f32.gmra.mxu0 %v3207
        %v3246 = vpop.f32.mrf.mxu0
        %v3247 = vadd.f32 %v3227, %v3246
        %3248 = vdwg.mxu0
        %v3249 = vadd.f32 %v3065, %v3247
        %3250 = vst.msk [vmem:[#allocation2] sm:$0x1] %vm3069, %v1785
        %3252 = vst [vmem:[#allocation1] sm:$0xff] %v1785
        %s3253 = scalar_lea.vmem [#allocation1], 1
        %v3254 = vld [vmem:[%s3253] ss:$9 sm:$0xff]
        %3255 = vrot.lane.b32.xlu0 %v3254, 12
        %v3256 = vpop.permute.xlu0 %3255
        %3258 = vst.msk [vmem:[#allocation2] sm:$0x1] %vm3080, %v3256
        %3259 = vst [vmem:[#allocation1] sm:$0xff] %v1785
        %s3260 = scalar_lea.vmem [#allocation1], 2
        %v3261 = vld [vmem:[%s3260] ss:$9 sm:$0xff]
        %3262 = vrot.lane.b32.xlu0 %v3261, 24
        %v3263 = vpop.permute.xlu0 %3262
        %3265 = vst.msk [vmem:[#allocation2] sm:$0x1] %vm3090, %v3263
        %3266 = vst [vmem:[#allocation1] sm:$0xff] %v1785
        %s3267 = scalar_lea.vmem [#allocation1], 3
        %v3268 = vld [vmem:[%s3267] ss:$9 sm:$0xff]
        %3269 = vrot.lane.b32.xlu0 %v3268, 36
        %v3270 = vpop.permute.xlu0 %3269
        %3272 = vst.msk [vmem:[#allocation2] sm:$0x1] %vm3100, %v3270
        %3273 = vst [vmem:[#allocation1] sm:$0xff] %v1785
        %s3274 = scalar_lea.vmem [#allocation1], 4
        %v3275 = vld [vmem:[%s3274] ss:$9 sm:$0xff]
        %3276 = vrot.lane.b32.xlu0 %v3275, 48
        %v3277 = vpop.permute.xlu0 %3276
        %3279 = vst.msk [vmem:[#allocation2] sm:$0x1] %vm3110, %v3277
        %3280 = vst [vmem:[#allocation1] sm:$0xff] %v1785
        %s3281 = scalar_lea.vmem [#allocation1], 5
        %v3282 = vld [vmem:[%s3281] ss:$9 sm:$0xff]
        %3283 = vrot.lane.b32.xlu0 %v3282, 60
        %v3284 = vpop.permute.xlu0 %3283
        %3286 = vst.msk [vmem:[#allocation2] sm:$0x1] %vm3120, %v3284
        %3287 = vst [vmem:[#allocation1] sm:$0xff] %v1785
        %s3288 = scalar_lea.vmem [#allocation1], 6
        %v3289 = vld [vmem:[%s3288] ss:$9 sm:$0xff]
        %3290 = vrot.lane.b32.xlu0 %v3289, 72
        %v3291 = vpop.permute.xlu0 %3290
        %3293 = vst.msk [vmem:[#allocation2] sm:$0x1] %vm3130, %v3291
        %3294 = vst [vmem:[#allocation1] sm:$0xff] %v1785
        %s3295 = scalar_lea.vmem [#allocation1], 7
        %v3296 = vld [vmem:[%s3295] ss:$9 sm:$0xff]
        %3297 = vrot.lane.b32.xlu0 %v3296, 84
        %v3298 = vpop.permute.xlu0 %3297
        %3300 = vst.msk [vmem:[#allocation2] sm:$0x1] %vm3140, %v3298
        %3302 = vrot.lane.b32.xlu0 %v1786, 96
        %v3303 = vpop.permute.xlu0 %3302
        %3305 = vst.msk [vmem:[#allocation2] sm:$0x1] %vm3148, %v3303
        %3306 = vst [vmem:[#allocation1] sm:$0xff] %v1786
        %s3307 = scalar_lea.vmem [#allocation1], 1
        %v3308 = vld [vmem:[%s3307] ss:$9 sm:$0xff]
        %3309 = vrot.lane.b32.xlu0 %v3308, 108
        %v3310 = vpop.permute.xlu0 %3309
        %3312 = vst.msk [vmem:[#allocation2] sm:$0x1] %vm3158, %v3310
        %3313 = vst [vmem:[#allocation1] sm:$0xff] %v1786
        %s3314 = scalar_lea.vmem [#allocation1], 2
        %v3315 = vld [vmem:[%s3314] ss:$9 sm:$0xff]
        %3316 = vrot.lane.b32.xlu0 %v3315, 120
        %v3317 = vpop.permute.xlu0 %3316
        %v3318 = vrot.slane %v3317, 7
        %v3319 = vsel %vm3166, %v3318, %v3317
        %3321 = vst.msk [vmem:[#allocation2] sm:$0x3] %vm3171, %v3319
        %3322 = vst [vmem:[#allocation1] sm:$0xff] %v1786
        %s3323 = scalar_lea.vmem [#allocation1], 3
        %v3324 = vld [vmem:[%s3323] ss:$9 sm:$0xff]
        %3325 = vrot.lane.b32.xlu0 %v3324, 4
        %v3326 = vpop.permute.xlu0 %3325
        %3328 = vst.msk [vmem:[#allocation2 + $0x1] sm:$0x1] %vm3181, %v3326
        %v3329 = vld [vmem:[%s9 + $0x90] sm:$0xff]
        %v3330 = vld [vmem:[%s9 + $0x98] sm:$0xff]
        %v3331 = vld [vmem:[%s9 + $0xa0] sm:$0xff]
        %v3332 = vld [vmem:[%s9 + $0xa8] sm:$0xff]
        %v3333 = vld [vmem:[%s9 + $0xb0] sm:$0xff]
        %v3334 = vld [vmem:[%s9 + $0xb8] sm:$0xff]
        %v3335 = vld [vmem:[%s9 + $0xc0] sm:$0xff]
        %v3336 = vld [vmem:[%s9 + $0xc8] sm:$0xff]
        %v3337 = vld [vmem:[%s9 + $0xd0] sm:$0xff]
        %v3338 = vld [vmem:[%s9 + $0xd8] sm:$0xff]
        %v3339 = vld [vmem:[%s9 + $0xe0] sm:$0xff]
        %v3340 = vld [vmem:[%s9 + $0xe8] sm:$0xff]
        %v3341 = vld [vmem:[%s9 + $0xf0] sm:$0xff]
        %v3342 = vld [vmem:[%s9 + $0xf8] sm:$0xff]
        %v3343 = vld [vmem:[%s9 + $0x100] sm:$0xff]
        %v3344 = vld [vmem:[%s9 + $0x108] sm:$0xff]
        %v3345 = vld [vmem:[%s9 + $0x110] sm:$0xff]
        %v3346 = vld [vmem:[%s9 + $0x118] sm:$0xff]
        %v3347 = vld [vmem:[#allocation2] sm:$0x3]
        %v3349 = vperm.slane %v3347, 0
        %v3350 = vperm.slane %v3347, 1
        %v3352 = vsel %vm3206, %v3350, 0
        %3354 = vmatpush.msra.mxu0 %v3344
        %3355 = vmatpush.msra.mxu0 %v3343
        %3356 = vmatpush.msra.mxu0 %v3342
        %3357 = vmatpush.msra.mxu0 %v3341
        %3358 = vmatpush.msra.mxu0 %v3340
        %3359 = vmatpush.msra.mxu0 %v3339
        %3360 = vmatpush.msra.mxu0 %v3338
        %3361 = vmatpush.msra.mxu0 %v3337
        %3362 = vmatpush.msra.mxu0 %v3336
        %3363 = vmatpush.msra.mxu0 %v3335
        %3364 = vmatpush.msra.mxu0 %v3334
        %3365 = vmatpush.msra.mxu0 %v3333
        %3366 = vmatpush.msra.mxu0 %v3332
        %3367 = vmatpush.msra.mxu0 %v3331
        %3368 = vmatpush.msra.mxu0 %v3330
        %3369 = vmatpush.msra.mxu0 %v3329
        %3370 = vmatmul.f32.gmra.mxu0 %v3349
        %v3371 = vpop.f32.mrf.mxu0
        %v3372 = vadd.f32 0.0, %v3371
        %3373 = vdwg.mxu0
        %3374 = vmatpush.msra.mxu0 0.0
        %3375 = vmatpush.msra.mxu0 0.0
        %3376 = vmatpush.msra.mxu0 0.0
        %3377 = vmatpush.msra.mxu0 0.0
        %3378 = vmatpush.msra.mxu0 0.0
        %3379 = vmatpush.msra.mxu0 0.0
        %3380 = vmatpush.msra.mxu0 0.0
        %3381 = vmatpush.msra.mxu0 0.0
        %3382 = vmatpush.msra.mxu0 0.0
        %3383 = vmatpush.msra.mxu0 0.0
        %3384 = vmatpush.msra.mxu0 0.0
        %3385 = vmatpush.msra.mxu0 0.0
        %3386 = vmatpush.msra.mxu0 0.0
        %3387 = vmatpush.msra.mxu0 0.0
        %3388 = vmatpush.msra.mxu0 %v3346
        %3389 = vmatpush.msra.mxu0 %v3345
        %3390 = vmatmul.f32.gmra.mxu0 %v3352
        %v3391 = vpop.f32.mrf.mxu0
        %v3392 = vadd.f32 %v3372, %v3391
        %3393 = vdwg.mxu0
        %v3394 = vadd.f32 %v3249, %v3392
        %3395 = vst.msk [vmem:[#allocation2] sm:$0x1] %vm3069, %v1998
        %3397 = vst [vmem:[#allocation1] sm:$0xff] %v1998
        %s3398 = scalar_lea.vmem [#allocation1], 1
        %v3399 = vld [vmem:[%s3398] ss:$9 sm:$0xff]
        %3400 = vrot.lane.b32.xlu0 %v3399, 12
        %v3401 = vpop.permute.xlu0 %3400
        %3403 = vst.msk [vmem:[#allocation2] sm:$0x1] %vm3080, %v3401
        %3404 = vst [vmem:[#allocation1] sm:$0xff] %v1998
        %s3405 = scalar_lea.vmem [#allocation1], 2
        %v3406 = vld [vmem:[%s3405] ss:$9 sm:$0xff]
        %3407 = vrot.lane.b32.xlu0 %v3406, 24
        %v3408 = vpop.permute.xlu0 %3407
        %3410 = vst.msk [vmem:[#allocation2] sm:$0x1] %vm3090, %v3408
        %3411 = vst [vmem:[#allocation1] sm:$0xff] %v1998
        %s3412 = scalar_lea.vmem [#allocation1], 3
        %v3413 = vld [vmem:[%s3412] ss:$9 sm:$0xff]
        %3414 = vrot.lane.b32.xlu0 %v3413, 36
        %v3415 = vpop.permute.xlu0 %3414
        %3417 = vst.msk [vmem:[#allocation2] sm:$0x1] %vm3100, %v3415
        %3418 = vst [vmem:[#allocation1] sm:$0xff] %v1998
        %s3419 = scalar_lea.vmem [#allocation1], 4
        %v3420 = vld [vmem:[%s3419] ss:$9 sm:$0xff]
        %3421 = vrot.lane.b32.xlu0 %v3420, 48
        %v3422 = vpop.permute.xlu0 %3421
        %3424 = vst.msk [vmem:[#allocation2] sm:$0x1] %vm3110, %v3422
        %3425 = vst [vmem:[#allocation1] sm:$0xff] %v1998
        %s3426 = scalar_lea.vmem [#allocation1], 5
        %v3427 = vld [vmem:[%s3426] ss:$9 sm:$0xff]
        %3428 = vrot.lane.b32.xlu0 %v3427, 60
        %v3429 = vpop.permute.xlu0 %3428
        %3431 = vst.msk [vmem:[#allocation2] sm:$0x1] %vm3120, %v3429
        %3432 = vst [vmem:[#allocation1] sm:$0xff] %v1998
        %s3433 = scalar_lea.vmem [#allocation1], 6
        %v3434 = vld [vmem:[%s3433] ss:$9 sm:$0xff]
        %3435 = vrot.lane.b32.xlu0 %v3434, 72
        %v3436 = vpop.permute.xlu0 %3435
        %3438 = vst.msk [vmem:[#allocation2] sm:$0x1] %vm3130, %v3436
        %3439 = vst [vmem:[#allocation1] sm:$0xff] %v1998
        %s3440 = scalar_lea.vmem [#allocation1], 7
        %v3441 = vld [vmem:[%s3440] ss:$9 sm:$0xff]
        %3442 = vrot.lane.b32.xlu0 %v3441, 84
        %v3443 = vpop.permute.xlu0 %3442
        %3445 = vst.msk [vmem:[#allocation2] sm:$0x1] %vm3140, %v3443
        %3447 = vrot.lane.b32.xlu0 %v1999, 96
        %v3448 = vpop.permute.xlu0 %3447
        %3450 = vst.msk [vmem:[#allocation2] sm:$0x1] %vm3148, %v3448
        %3451 = vst [vmem:[#allocation1] sm:$0xff] %v1999
        %s3452 = scalar_lea.vmem [#allocation1], 1
        %v3453 = vld [vmem:[%s3452] ss:$9 sm:$0xff]
        %3454 = vrot.lane.b32.xlu0 %v3453, 108
        %v3455 = vpop.permute.xlu0 %3454
        %3457 = vst.msk [vmem:[#allocation2] sm:$0x1] %vm3158, %v3455
        %3458 = vst [vmem:[#allocation1] sm:$0xff] %v1999
        %s3459 = scalar_lea.vmem [#allocation1], 2
        %v3460 = vld [vmem:[%s3459] ss:$9 sm:$0xff]
        %3461 = vrot.lane.b32.xlu0 %v3460, 120
        %v3462 = vpop.permute.xlu0 %3461
        %v3463 = vrot.slane %v3462, 7
        %v3464 = vsel %vm3166, %v3463, %v3462
        %3466 = vst.msk [vmem:[#allocation2] sm:$0x3] %vm3171, %v3464
        %3467 = vst [vmem:[#allocation1] sm:$0xff] %v1999
        %s3468 = scalar_lea.vmem [#allocation1], 3
        %v3469 = vld [vmem:[%s3468] ss:$9 sm:$0xff]
        %3470 = vrot.lane.b32.xlu0 %v3469, 4
        %v3471 = vpop.permute.xlu0 %3470
        %3473 = vst.msk [vmem:[#allocation2 + $0x1] sm:$0x1] %vm3181, %v3471
        %v3474 = vld [vmem:[%s9 + $0x120] sm:$0xff]
        %v3475 = vld [vmem:[%s9 + $0x128] sm:$0xff]
        %v3476 = vld [vmem:[%s9 + $0x130] sm:$0xff]
        %v3477 = vld [vmem:[%s9 + $0x138] sm:$0xff]
        %v3478 = vld [vmem:[%s9 + $0x140] sm:$0xff]
        %v3479 = vld [vmem:[%s9 + $0x148] sm:$0xff]
        %v3480 = vld [vmem:[%s9 + $0x150] sm:$0xff]
        %v3481 = vld [vmem:[%s9 + $0x158] sm:$0xff]
        %v3482 = vld [vmem:[%s9 + $0x160] sm:$0xff]
        %v3483 = vld [vmem:[%s9 + $0x168] sm:$0xff]
        %v3484 = vld [vmem:[%s9 + $0x170] sm:$0xff]
        %v3485 = vld [vmem:[%s9 + $0x178] sm:$0xff]
        %v3486 = vld [vmem:[%s9 + $0x180] sm:$0xff]
        %v3487 = vld [vmem:[%s9 + $0x188] sm:$0xff]
        %v3488 = vld [vmem:[%s9 + $0x190] sm:$0xff]
        %v3489 = vld [vmem:[%s9 + $0x198] sm:$0xff]
        %v3490 = vld [vmem:[%s9 + $0x1a0] sm:$0xff]
        %v3491 = vld [vmem:[%s9 + $0x1a8] sm:$0xff]
        %v3492 = vld [vmem:[#allocation2] sm:$0x3]
        %v3494 = vperm.slane %v3492, 0
        %v3495 = vperm.slane %v3492, 1
        %v3497 = vsel %vm3206, %v3495, 0
        %3499 = vmatpush.msra.mxu0 %v3489
        %3500 = vmatpush.msra.mxu0 %v3488
        %3501 = vmatpush.msra.mxu0 %v3487
        %3502 = vmatpush.msra.mxu0 %v3486
        %3503 = vmatpush.msra.mxu0 %v3485
        %3504 = vmatpush.msra.mxu0 %v3484
        %3505 = vmatpush.msra.mxu0 %v3483
        %3506 = vmatpush.msra.mxu0 %v3482
        %3507 = vmatpush.msra.mxu0 %v3481
        %3508 = vmatpush.msra.mxu0 %v3480
        %3509 = vmatpush.msra.mxu0 %v3479
        %3510 = vmatpush.msra.mxu0 %v3478
        %3511 = vmatpush.msra.mxu0 %v3477
        %3512 = vmatpush.msra.mxu0 %v3476
        %3513 = vmatpush.msra.mxu0 %v3475
        %3514 = vmatpush.msra.mxu0 %v3474
        %3515 = vmatmul.f32.gmra.mxu0 %v3494
        %v3516 = vpop.f32.mrf.mxu0
        %v3517 = vadd.f32 0.0, %v3516
        %3518 = vdwg.mxu0
        %3519 = vmatpush.msra.mxu0 0.0
        %3520 = vmatpush.msra.mxu0 0.0
        %3521 = vmatpush.msra.mxu0 0.0
        %3522 = vmatpush.msra.mxu0 0.0
        %3523 = vmatpush.msra.mxu0 0.0
        %3524 = vmatpush.msra.mxu0 0.0
        %3525 = vmatpush.msra.mxu0 0.0
        %3526 = vmatpush.msra.mxu0 0.0
        %3527 = vmatpush.msra.mxu0 0.0
        %3528 = vmatpush.msra.mxu0 0.0
        %3529 = vmatpush.msra.mxu0 0.0
        %3530 = vmatpush.msra.mxu0 0.0
        %3531 = vmatpush.msra.mxu0 0.0
        %3532 = vmatpush.msra.mxu0 0.0
        %3533 = vmatpush.msra.mxu0 %v3491
        %3534 = vmatpush.msra.mxu0 %v3490
        %3535 = vmatmul.f32.gmra.mxu0 %v3497
        %v3536 = vpop.f32.mrf.mxu0
        %v3537 = vadd.f32 %v3517, %v3536
        %3538 = vdwg.mxu0
        %v3539 = vadd.f32 %v3394, %v3537
        %3540 = vst.msk [vmem:[#allocation2] sm:$0x1] %vm3069, %v2211
        %3542 = vst [vmem:[#allocation1] sm:$0xff] %v2211
        %s3543 = scalar_lea.vmem [#allocation1], 1
        %v3544 = vld [vmem:[%s3543] ss:$9 sm:$0xff]
        %3545 = vrot.lane.b32.xlu0 %v3544, 12
        %v3546 = vpop.permute.xlu0 %3545
        %3548 = vst.msk [vmem:[#allocation2] sm:$0x1] %vm3080, %v3546
        %3549 = vst [vmem:[#allocation1] sm:$0xff] %v2211
        %s3550 = scalar_lea.vmem [#allocation1], 2
        %v3551 = vld [vmem:[%s3550] ss:$9 sm:$0xff]
        %3552 = vrot.lane.b32.xlu0 %v3551, 24
        %v3553 = vpop.permute.xlu0 %3552
        %3555 = vst.msk [vmem:[#allocation2] sm:$0x1] %vm3090, %v3553
        %3556 = vst [vmem:[#allocation1] sm:$0xff] %v2211
        %s3557 = scalar_lea.vmem [#allocation1], 3
        %v3558 = vld [vmem:[%s3557] ss:$9 sm:$0xff]
        %3559 = vrot.lane.b32.xlu0 %v3558, 36
        %v3560 = vpop.permute.xlu0 %3559
        %3562 = vst.msk [vmem:[#allocation2] sm:$0x1] %vm3100, %v3560
        %3563 = vst [vmem:[#allocation1] sm:$0xff] %v2211
        %s3564 = scalar_lea.vmem [#allocation1], 4
        %v3565 = vld [vmem:[%s3564] ss:$9 sm:$0xff]
        %3566 = vrot.lane.b32.xlu0 %v3565, 48
        %v3567 = vpop.permute.xlu0 %3566
        %3569 = vst.msk [vmem:[#allocation2] sm:$0x1] %vm3110, %v3567
        %3570 = vst [vmem:[#allocation1] sm:$0xff] %v2211
        %s3571 = scalar_lea.vmem [#allocation1], 5
        %v3572 = vld [vmem:[%s3571] ss:$9 sm:$0xff]
        %3573 = vrot.lane.b32.xlu0 %v3572, 60
        %v3574 = vpop.permute.xlu0 %3573
        %3576 = vst.msk [vmem:[#allocation2] sm:$0x1] %vm3120, %v3574
        %3577 = vst [vmem:[#allocation1] sm:$0xff] %v2211
        %s3578 = scalar_lea.vmem [#allocation1], 6
        %v3579 = vld [vmem:[%s3578] ss:$9 sm:$0xff]
        %3580 = vrot.lane.b32.xlu0 %v3579, 72
        %v3581 = vpop.permute.xlu0 %3580
        %3583 = vst.msk [vmem:[#allocation2] sm:$0x1] %vm3130, %v3581
        %3584 = vst [vmem:[#allocation1] sm:$0xff] %v2211
        %s3585 = scalar_lea.vmem [#allocation1], 7
        %v3586 = vld [vmem:[%s3585] ss:$9 sm:$0xff]
        %3587 = vrot.lane.b32.xlu0 %v3586, 84
        %v3588 = vpop.permute.xlu0 %3587
        %3590 = vst.msk [vmem:[#allocation2] sm:$0x1] %vm3140, %v3588
        %3592 = vrot.lane.b32.xlu0 %v2212, 96
        %v3593 = vpop.permute.xlu0 %3592
        %3595 = vst.msk [vmem:[#allocation2] sm:$0x1] %vm3148, %v3593
        %3596 = vst [vmem:[#allocation1] sm:$0xff] %v2212
        %s3597 = scalar_lea.vmem [#allocation1], 1
        %v3598 = vld [vmem:[%s3597] ss:$9 sm:$0xff]
        %3599 = vrot.lane.b32.xlu0 %v3598, 108
        %v3600 = vpop.permute.xlu0 %3599
        %3602 = vst.msk [vmem:[#allocation2] sm:$0x1] %vm3158, %v3600
        %3603 = vst [vmem:[#allocation1] sm:$0xff] %v2212
        %s3604 = scalar_lea.vmem [#allocation1], 2
        %v3605 = vld [vmem:[%s3604] ss:$9 sm:$0xff]
        %3606 = vrot.lane.b32.xlu0 %v3605, 120
        %v3607 = vpop.permute.xlu0 %3606
        %v3608 = vrot.slane %v3607, 7
        %v3609 = vsel %vm3166, %v3608, %v3607
        %3611 = vst.msk [vmem:[#allocation2] sm:$0x3] %vm3171, %v3609
        %3612 = vst [vmem:[#allocation1] sm:$0xff] %v2212
        %s3613 = scalar_lea.vmem [#allocation1], 3
        %v3614 = vld [vmem:[%s3613] ss:$9 sm:$0xff]
        %3615 = vrot.lane.b32.xlu0 %v3614, 4
        %v3616 = vpop.permute.xlu0 %3615
        %3618 = vst.msk [vmem:[#allocation2 + $0x1] sm:$0x1] %vm3181, %v3616
        %v3619 = vld [vmem:[%s9 + $0x1b0] sm:$0xff]
        %v3620 = vld [vmem:[%s9 + $0x1b8] sm:$0xff]
        %v3621 = vld [vmem:[%s9 + $0x1c0] sm:$0xff]
        %v3622 = vld [vmem:[%s9 + $0x1c8] sm:$0xff]
        %v3623 = vld [vmem:[%s9 + $0x1d0] sm:$0xff]
        %v3624 = vld [vmem:[%s9 + $0x1d8] sm:$0xff]
        %v3625 = vld [vmem:[%s9 + $0x1e0] sm:$0xff]
        %v3626 = vld [vmem:[%s9 + $0x1e8] sm:$0xff]
        %v3627 = vld [vmem:[%s9 + $0x1f0] sm:$0xff]
        %v3628 = vld [vmem:[%s9 + $0x1f8] sm:$0xff]
        %v3629 = vld [vmem:[%s9 + $0x200] sm:$0xff]
        %v3630 = vld [vmem:[%s9 + $0x208] sm:$0xff]
        %v3631 = vld [vmem:[%s9 + $0x210] sm:$0xff]
        %v3632 = vld [vmem:[%s9 + $0x218] sm:$0xff]
        %v3633 = vld [vmem:[%s9 + $0x220] sm:$0xff]
        %v3634 = vld [vmem:[%s9 + $0x228] sm:$0xff]
        %v3635 = vld [vmem:[%s9 + $0x230] sm:$0xff]
        %v3636 = vld [vmem:[%s9 + $0x238] sm:$0xff]
        %v3637 = vld [vmem:[#allocation2] sm:$0x3]
        %v3639 = vperm.slane %v3637, 0
        %v3640 = vperm.slane %v3637, 1
        %v3642 = vsel %vm3206, %v3640, 0
        %3644 = vmatpush.msra.mxu0 %v3634
        %3645 = vmatpush.msra.mxu0 %v3633
        %3646 = vmatpush.msra.mxu0 %v3632
        %3647 = vmatpush.msra.mxu0 %v3631
        %3648 = vmatpush.msra.mxu0 %v3630
        %3649 = vmatpush.msra.mxu0 %v3629
        %3650 = vmatpush.msra.mxu0 %v3628
        %3651 = vmatpush.msra.mxu0 %v3627
        %3652 = vmatpush.msra.mxu0 %v3626
        %3653 = vmatpush.msra.mxu0 %v3625
        %3654 = vmatpush.msra.mxu0 %v3624
        %3655 = vmatpush.msra.mxu0 %v3623
        %3656 = vmatpush.msra.mxu0 %v3622
        %3657 = vmatpush.msra.mxu0 %v3621
        %3658 = vmatpush.msra.mxu0 %v3620
        %3659 = vmatpush.msra.mxu0 %v3619
        %3660 = vmatmul.f32.gmra.mxu0 %v3639
        %v3661 = vpop.f32.mrf.mxu0
        %v3662 = vadd.f32 0.0, %v3661
        %3663 = vdwg.mxu0
        %3664 = vmatpush.msra.mxu0 0.0
        %3665 = vmatpush.msra.mxu0 0.0
        %3666 = vmatpush.msra.mxu0 0.0
        %3667 = vmatpush.msra.mxu0 0.0
        %3668 = vmatpush.msra.mxu0 0.0
        %3669 = vmatpush.msra.mxu0 0.0
        %3670 = vmatpush.msra.mxu0 0.0
        %3671 = vmatpush.msra.mxu0 0.0
        %3672 = vmatpush.msra.mxu0 0.0
        %3673 = vmatpush.msra.mxu0 0.0
        %3674 = vmatpush.msra.mxu0 0.0
        %3675 = vmatpush.msra.mxu0 0.0
        %3676 = vmatpush.msra.mxu0 0.0
        %3677 = vmatpush.msra.mxu0 0.0
        %3678 = vmatpush.msra.mxu0 %v3636
        %3679 = vmatpush.msra.mxu0 %v3635
        %3680 = vmatmul.f32.gmra.mxu0 %v3642
        %v3681 = vpop.f32.mrf.mxu0
        %v3682 = vadd.f32 %v3662, %v3681
        %3683 = vdwg.mxu0
        %v3684 = vadd.f32 %v3539, %v3682
        %3685 = vst.msk [vmem:[#allocation2] sm:$0x1] %vm3069, %v2424
        %3687 = vst [vmem:[#allocation1] sm:$0xff] %v2424
        %s3688 = scalar_lea.vmem [#allocation1], 1
        %v3689 = vld [vmem:[%s3688] ss:$9 sm:$0xff]
        %3690 = vrot.lane.b32.xlu0 %v3689, 12
        %v3691 = vpop.permute.xlu0 %3690
        %3693 = vst.msk [vmem:[#allocation2] sm:$0x1] %vm3080, %v3691
        %3694 = vst [vmem:[#allocation1] sm:$0xff] %v2424
        %s3695 = scalar_lea.vmem [#allocation1], 2
        %v3696 = vld [vmem:[%s3695] ss:$9 sm:$0xff]
        %3697 = vrot.lane.b32.xlu0 %v3696, 24
        %v3698 = vpop.permute.xlu0 %3697
        %3700 = vst.msk [vmem:[#allocation2] sm:$0x1] %vm3090, %v3698
        %3701 = vst [vmem:[#allocation1] sm:$0xff] %v2424
        %s3702 = scalar_lea.vmem [#allocation1], 3
        %v3703 = vld [vmem:[%s3702] ss:$9 sm:$0xff]
        %3704 = vrot.lane.b32.xlu0 %v3703, 36
        %v3705 = vpop.permute.xlu0 %3704
        %3707 = vst.msk [vmem:[#allocation2] sm:$0x1] %vm3100, %v3705
        %3708 = vst [vmem:[#allocation1] sm:$0xff] %v2424
        %s3709 = scalar_lea.vmem [#allocation1], 4
        %v3710 = vld [vmem:[%s3709] ss:$9 sm:$0xff]
        %3711 = vrot.lane.b32.xlu0 %v3710, 48
        %v3712 = vpop.permute.xlu0 %3711
        %3714 = vst.msk [vmem:[#allocation2] sm:$0x1] %vm3110, %v3712
        %3715 = vst [vmem:[#allocation1] sm:$0xff] %v2424
        %s3716 = scalar_lea.vmem [#allocation1], 5
        %v3717 = vld [vmem:[%s3716] ss:$9 sm:$0xff]
        %3718 = vrot.lane.b32.xlu0 %v3717, 60
        %v3719 = vpop.permute.xlu0 %3718
        %3721 = vst.msk [vmem:[#allocation2] sm:$0x1] %vm3120, %v3719
        %3722 = vst [vmem:[#allocation1] sm:$0xff] %v2424
        %s3723 = scalar_lea.vmem [#allocation1], 6
        %v3724 = vld [vmem:[%s3723] ss:$9 sm:$0xff]
        %3725 = vrot.lane.b32.xlu0 %v3724, 72
        %v3726 = vpop.permute.xlu0 %3725
        %3728 = vst.msk [vmem:[#allocation2] sm:$0x1] %vm3130, %v3726
        %3729 = vst [vmem:[#allocation1] sm:$0xff] %v2424
        %s3730 = scalar_lea.vmem [#allocation1], 7
        %v3731 = vld [vmem:[%s3730] ss:$9 sm:$0xff]
        %3732 = vrot.lane.b32.xlu0 %v3731, 84
        %v3733 = vpop.permute.xlu0 %3732
        %3735 = vst.msk [vmem:[#allocation2] sm:$0x1] %vm3140, %v3733
        %3737 = vrot.lane.b32.xlu0 %v2425, 96
        %v3738 = vpop.permute.xlu0 %3737
        %3740 = vst.msk [vmem:[#allocation2] sm:$0x1] %vm3148, %v3738
        %3741 = vst [vmem:[#allocation1] sm:$0xff] %v2425
        %s3742 = scalar_lea.vmem [#allocation1], 1
        %v3743 = vld [vmem:[%s3742] ss:$9 sm:$0xff]
        %3744 = vrot.lane.b32.xlu0 %v3743, 108
        %v3745 = vpop.permute.xlu0 %3744
        %3747 = vst.msk [vmem:[#allocation2] sm:$0x1] %vm3158, %v3745
        %3748 = vst [vmem:[#allocation1] sm:$0xff] %v2425
        %s3749 = scalar_lea.vmem [#allocation1], 2
        %v3750 = vld [vmem:[%s3749] ss:$9 sm:$0xff]
        %3751 = vrot.lane.b32.xlu0 %v3750, 120
        %v3752 = vpop.permute.xlu0 %3751
        %v3753 = vrot.slane %v3752, 7
        %v3754 = vsel %vm3166, %v3753, %v3752
        %3756 = vst.msk [vmem:[#allocation2] sm:$0x3] %vm3171, %v3754
        %3757 = vst [vmem:[#allocation1] sm:$0xff] %v2425
        %s3758 = scalar_lea.vmem [#allocation1], 3
        %v3759 = vld [vmem:[%s3758] ss:$9 sm:$0xff]
        %3760 = vrot.lane.b32.xlu0 %v3759, 4
        %v3761 = vpop.permute.xlu0 %3760
        %3763 = vst.msk [vmem:[#allocation2 + $0x1] sm:$0x1] %vm3181, %v3761
        %v3764 = vld [vmem:[%s9 + $0x240] sm:$0xff]
        %v3765 = vld [vmem:[%s9 + $0x248] sm:$0xff]
        %v3766 = vld [vmem:[%s9 + $0x250] sm:$0xff]
        %v3767 = vld [vmem:[%s9 + $0x258] sm:$0xff]
        %v3768 = vld [vmem:[%s9 + $0x260] sm:$0xff]
        %v3769 = vld [vmem:[%s9 + $0x268] sm:$0xff]
        %v3770 = vld [vmem:[%s9 + $0x270] sm:$0xff]
        %v3771 = vld [vmem:[%s9 + $0x278] sm:$0xff]
        %v3772 = vld [vmem:[%s9 + $0x280] sm:$0xff]
        %v3773 = vld [vmem:[%s9 + $0x288] sm:$0xff]
        %v3774 = vld [vmem:[%s9 + $0x290] sm:$0xff]
        %v3775 = vld [vmem:[%s9 + $0x298] sm:$0xff]
        %v3776 = vld [vmem:[%s9 + $0x2a0] sm:$0xff]
        %v3777 = vld [vmem:[%s9 + $0x2a8] sm:$0xff]
        %v3778 = vld [vmem:[%s9 + $0x2b0] sm:$0xff]
        %v3779 = vld [vmem:[%s9 + $0x2b8] sm:$0xff]
        %v3780 = vld [vmem:[%s9 + $0x2c0] sm:$0xff]
        %v3781 = vld [vmem:[%s9 + $0x2c8] sm:$0xff]
        %v3782 = vld [vmem:[#allocation2] sm:$0x3]
        %v3784 = vperm.slane %v3782, 0
        %v3785 = vperm.slane %v3782, 1
        %v3787 = vsel %vm3206, %v3785, 0
        %3789 = vmatpush.msra.mxu0 %v3779
        %3790 = vmatpush.msra.mxu0 %v3778
        %3791 = vmatpush.msra.mxu0 %v3777
        %3792 = vmatpush.msra.mxu0 %v3776
        %3793 = vmatpush.msra.mxu0 %v3775
        %3794 = vmatpush.msra.mxu0 %v3774
        %3795 = vmatpush.msra.mxu0 %v3773
        %3796 = vmatpush.msra.mxu0 %v3772
        %3797 = vmatpush.msra.mxu0 %v3771
        %3798 = vmatpush.msra.mxu0 %v3770
        %3799 = vmatpush.msra.mxu0 %v3769
        %3800 = vmatpush.msra.mxu0 %v3768
        %3801 = vmatpush.msra.mxu0 %v3767
        %3802 = vmatpush.msra.mxu0 %v3766
        %3803 = vmatpush.msra.mxu0 %v3765
        %3804 = vmatpush.msra.mxu0 %v3764
        %3805 = vmatmul.f32.gmra.mxu0 %v3784
        %v3806 = vpop.f32.mrf.mxu0
        %v3807 = vadd.f32 0.0, %v3806
        %3808 = vdwg.mxu0
        %3809 = vmatpush.msra.mxu0 0.0
        %3810 = vmatpush.msra.mxu0 0.0
        %3811 = vmatpush.msra.mxu0 0.0
        %3812 = vmatpush.msra.mxu0 0.0
        %3813 = vmatpush.msra.mxu0 0.0
        %3814 = vmatpush.msra.mxu0 0.0
        %3815 = vmatpush.msra.mxu0 0.0
        %3816 = vmatpush.msra.mxu0 0.0
        %3817 = vmatpush.msra.mxu0 0.0
        %3818 = vmatpush.msra.mxu0 0.0
        %3819 = vmatpush.msra.mxu0 0.0
        %3820 = vmatpush.msra.mxu0 0.0
        %3821 = vmatpush.msra.mxu0 0.0
        %3822 = vmatpush.msra.mxu0 0.0
        %3823 = vmatpush.msra.mxu0 %v3781
        %3824 = vmatpush.msra.mxu0 %v3780
        %3825 = vmatmul.f32.gmra.mxu0 %v3787
        %v3826 = vpop.f32.mrf.mxu0
        %v3827 = vadd.f32 %v3807, %v3826
        %3828 = vdwg.mxu0
        %v3829 = vadd.f32 %v3684, %v3827
        %3830 = vst.msk [vmem:[#allocation2] sm:$0x1] %vm3069, %v2637
        %3832 = vst [vmem:[#allocation1] sm:$0xff] %v2637
        %s3833 = scalar_lea.vmem [#allocation1], 1
        %v3834 = vld [vmem:[%s3833] ss:$9 sm:$0xff]
        %3835 = vrot.lane.b32.xlu0 %v3834, 12
        %v3836 = vpop.permute.xlu0 %3835
        %3838 = vst.msk [vmem:[#allocation2] sm:$0x1] %vm3080, %v3836
        %3839 = vst [vmem:[#allocation1] sm:$0xff] %v2637
        %s3840 = scalar_lea.vmem [#allocation1], 2
        %v3841 = vld [vmem:[%s3840] ss:$9 sm:$0xff]
        %3842 = vrot.lane.b32.xlu0 %v3841, 24
        %v3843 = vpop.permute.xlu0 %3842
        %3845 = vst.msk [vmem:[#allocation2] sm:$0x1] %vm3090, %v3843
        %3846 = vst [vmem:[#allocation1] sm:$0xff] %v2637
        %s3847 = scalar_lea.vmem [#allocation1], 3
        %v3848 = vld [vmem:[%s3847] ss:$9 sm:$0xff]
        %3849 = vrot.lane.b32.xlu0 %v3848, 36
        %v3850 = vpop.permute.xlu0 %3849
        %3852 = vst.msk [vmem:[#allocation2] sm:$0x1] %vm3100, %v3850
        %3853 = vst [vmem:[#allocation1] sm:$0xff] %v2637
        %s3854 = scalar_lea.vmem [#allocation1], 4
        %v3855 = vld [vmem:[%s3854] ss:$9 sm:$0xff]
        %3856 = vrot.lane.b32.xlu0 %v3855, 48
        %v3857 = vpop.permute.xlu0 %3856
        %3859 = vst.msk [vmem:[#allocation2] sm:$0x1] %vm3110, %v3857
        %3860 = vst [vmem:[#allocation1] sm:$0xff] %v2637
        %s3861 = scalar_lea.vmem [#allocation1], 5
        %v3862 = vld [vmem:[%s3861] ss:$9 sm:$0xff]
        %3863 = vrot.lane.b32.xlu0 %v3862, 60
        %v3864 = vpop.permute.xlu0 %3863
        %3866 = vst.msk [vmem:[#allocation2] sm:$0x1] %vm3120, %v3864
        %3867 = vst [vmem:[#allocation1] sm:$0xff] %v2637
        %s3868 = scalar_lea.vmem [#allocation1], 6
        %v3869 = vld [vmem:[%s3868] ss:$9 sm:$0xff]
        %3870 = vrot.lane.b32.xlu0 %v3869, 72
        %v3871 = vpop.permute.xlu0 %3870
        %3873 = vst.msk [vmem:[#allocation2] sm:$0x1] %vm3130, %v3871
        %3874 = vst [vmem:[#allocation1] sm:$0xff] %v2637
        %s3875 = scalar_lea.vmem [#allocation1], 7
        %v3876 = vld [vmem:[%s3875] ss:$9 sm:$0xff]
        %3877 = vrot.lane.b32.xlu0 %v3876, 84
        %v3878 = vpop.permute.xlu0 %3877
        %3880 = vst.msk [vmem:[#allocation2] sm:$0x1] %vm3140, %v3878
        %3882 = vrot.lane.b32.xlu0 %v2638, 96
        %v3883 = vpop.permute.xlu0 %3882
        %3885 = vst.msk [vmem:[#allocation2] sm:$0x1] %vm3148, %v3883
        %3886 = vst [vmem:[#allocation1] sm:$0xff] %v2638
        %s3887 = scalar_lea.vmem [#allocation1], 1
        %v3888 = vld [vmem:[%s3887] ss:$9 sm:$0xff]
        %3889 = vrot.lane.b32.xlu0 %v3888, 108
        %v3890 = vpop.permute.xlu0 %3889
        %3892 = vst.msk [vmem:[#allocation2] sm:$0x1] %vm3158, %v3890
        %3893 = vst [vmem:[#allocation1] sm:$0xff] %v2638
        %s3894 = scalar_lea.vmem [#allocation1], 2
        %v3895 = vld [vmem:[%s3894] ss:$9 sm:$0xff]
        %3896 = vrot.lane.b32.xlu0 %v3895, 120
        %v3897 = vpop.permute.xlu0 %3896
        %v3898 = vrot.slane %v3897, 7
        %v3899 = vsel %vm3166, %v3898, %v3897
        %3901 = vst.msk [vmem:[#allocation2] sm:$0x3] %vm3171, %v3899
        %3902 = vst [vmem:[#allocation1] sm:$0xff] %v2638
        %s3903 = scalar_lea.vmem [#allocation1], 3
        %v3904 = vld [vmem:[%s3903] ss:$9 sm:$0xff]
        %3905 = vrot.lane.b32.xlu0 %v3904, 4
        %v3906 = vpop.permute.xlu0 %3905
        %3908 = vst.msk [vmem:[#allocation2 + $0x1] sm:$0x1] %vm3181, %v3906
        %v3909 = vld [vmem:[%s9 + $0x2d0] sm:$0xff]
        %v3910 = vld [vmem:[%s9 + $0x2d8] sm:$0xff]
        %v3911 = vld [vmem:[%s9 + $0x2e0] sm:$0xff]
        %v3912 = vld [vmem:[%s9 + $0x2e8] sm:$0xff]
        %v3913 = vld [vmem:[%s9 + $0x2f0] sm:$0xff]
        %v3914 = vld [vmem:[%s9 + $0x2f8] sm:$0xff]
        %v3915 = vld [vmem:[%s9 + $0x300] sm:$0xff]
        %v3916 = vld [vmem:[%s9 + $0x308] sm:$0xff]
        %v3917 = vld [vmem:[%s9 + $0x310] sm:$0xff]
        %v3918 = vld [vmem:[%s9 + $0x318] sm:$0xff]
        %v3919 = vld [vmem:[%s9 + $0x320] sm:$0xff]
        %v3920 = vld [vmem:[%s9 + $0x328] sm:$0xff]
        %v3921 = vld [vmem:[%s9 + $0x330] sm:$0xff]
        %v3922 = vld [vmem:[%s9 + $0x338] sm:$0xff]
        %v3923 = vld [vmem:[%s9 + $0x340] sm:$0xff]
        %v3924 = vld [vmem:[%s9 + $0x348] sm:$0xff]
        %v3925 = vld [vmem:[%s9 + $0x350] sm:$0xff]
        %v3926 = vld [vmem:[%s9 + $0x358] sm:$0xff]
        %v3927 = vld [vmem:[#allocation2] sm:$0x3]
        %v3929 = vperm.slane %v3927, 0
        %v3930 = vperm.slane %v3927, 1
        %v3932 = vsel %vm3206, %v3930, 0
        %3934 = vmatpush.msra.mxu0 %v3924
        %3935 = vmatpush.msra.mxu0 %v3923
        %3936 = vmatpush.msra.mxu0 %v3922
        %3937 = vmatpush.msra.mxu0 %v3921
        %3938 = vmatpush.msra.mxu0 %v3920
        %3939 = vmatpush.msra.mxu0 %v3919
        %3940 = vmatpush.msra.mxu0 %v3918
        %3941 = vmatpush.msra.mxu0 %v3917
        %3942 = vmatpush.msra.mxu0 %v3916
        %3943 = vmatpush.msra.mxu0 %v3915
        %3944 = vmatpush.msra.mxu0 %v3914
        %3945 = vmatpush.msra.mxu0 %v3913
        %3946 = vmatpush.msra.mxu0 %v3912
        %3947 = vmatpush.msra.mxu0 %v3911
        %3948 = vmatpush.msra.mxu0 %v3910
        %3949 = vmatpush.msra.mxu0 %v3909
        %3950 = vmatmul.f32.gmra.mxu0 %v3929
        %v3951 = vpop.f32.mrf.mxu0
        %v3952 = vadd.f32 0.0, %v3951
        %3953 = vdwg.mxu0
        %3954 = vmatpush.msra.mxu0 0.0
        %3955 = vmatpush.msra.mxu0 0.0
        %3956 = vmatpush.msra.mxu0 0.0
        %3957 = vmatpush.msra.mxu0 0.0
        %3958 = vmatpush.msra.mxu0 0.0
        %3959 = vmatpush.msra.mxu0 0.0
        %3960 = vmatpush.msra.mxu0 0.0
        %3961 = vmatpush.msra.mxu0 0.0
        %3962 = vmatpush.msra.mxu0 0.0
        %3963 = vmatpush.msra.mxu0 0.0
        %3964 = vmatpush.msra.mxu0 0.0
        %3965 = vmatpush.msra.mxu0 0.0
        %3966 = vmatpush.msra.mxu0 0.0
        %3967 = vmatpush.msra.mxu0 0.0
        %3968 = vmatpush.msra.mxu0 %v3926
        %3969 = vmatpush.msra.mxu0 %v3925
        %3970 = vmatmul.f32.gmra.mxu0 %v3932
        %v3971 = vpop.f32.mrf.mxu0
        %v3972 = vadd.f32 %v3952, %v3971
        %3973 = vdwg.mxu0
        %v3974 = vadd.f32 %v3829, %v3972
        %3975 = vst.msk [vmem:[#allocation2] sm:$0x1] %vm3069, %v2850
        %3977 = vst [vmem:[#allocation1] sm:$0xff] %v2850
        %s3978 = scalar_lea.vmem [#allocation1], 1
        %v3979 = vld [vmem:[%s3978] ss:$9 sm:$0xff]
        %3980 = vrot.lane.b32.xlu0 %v3979, 12
        %v3981 = vpop.permute.xlu0 %3980
        %3983 = vst.msk [vmem:[#allocation2] sm:$0x1] %vm3080, %v3981
        %3984 = vst [vmem:[#allocation1] sm:$0xff] %v2850
        %s3985 = scalar_lea.vmem [#allocation1], 2
        %v3986 = vld [vmem:[%s3985] ss:$9 sm:$0xff]
        %3987 = vrot.lane.b32.xlu0 %v3986, 24
        %v3988 = vpop.permute.xlu0 %3987
        %3990 = vst.msk [vmem:[#allocation2] sm:$0x1] %vm3090, %v3988
        %3991 = vst [vmem:[#allocation1] sm:$0xff] %v2850
        %s3992 = scalar_lea.vmem [#allocation1], 3
        %v3993 = vld [vmem:[%s3992] ss:$9 sm:$0xff]
        %3994 = vrot.lane.b32.xlu0 %v3993, 36
        %v3995 = vpop.permute.xlu0 %3994
        %3997 = vst.msk [vmem:[#allocation2] sm:$0x1] %vm3100, %v3995
        %3998 = vst [vmem:[#allocation1] sm:$0xff] %v2850
        %s3999 = scalar_lea.vmem [#allocation1], 4
        %v4000 = vld [vmem:[%s3999] ss:$9 sm:$0xff]
        %4001 = vrot.lane.b32.xlu0 %v4000, 48
        %v4002 = vpop.permute.xlu0 %4001
        %4004 = vst.msk [vmem:[#allocation2] sm:$0x1] %vm3110, %v4002
        %4005 = vst [vmem:[#allocation1] sm:$0xff] %v2850
        %s4006 = scalar_lea.vmem [#allocation1], 5
        %v4007 = vld [vmem:[%s4006] ss:$9 sm:$0xff]
        %4008 = vrot.lane.b32.xlu0 %v4007, 60
        %v4009 = vpop.permute.xlu0 %4008
        %4011 = vst.msk [vmem:[#allocation2] sm:$0x1] %vm3120, %v4009
        %4012 = vst [vmem:[#allocation1] sm:$0xff] %v2850
        %s4013 = scalar_lea.vmem [#allocation1], 6
        %v4014 = vld [vmem:[%s4013] ss:$9 sm:$0xff]
        %4015 = vrot.lane.b32.xlu0 %v4014, 72
        %v4016 = vpop.permute.xlu0 %4015
        %4018 = vst.msk [vmem:[#allocation2] sm:$0x1] %vm3130, %v4016
        %4019 = vst [vmem:[#allocation1] sm:$0xff] %v2850
        %s4020 = scalar_lea.vmem [#allocation1], 7
        %v4021 = vld [vmem:[%s4020] ss:$9 sm:$0xff]
        %4022 = vrot.lane.b32.xlu0 %v4021, 84
        %v4023 = vpop.permute.xlu0 %4022
        %4025 = vst.msk [vmem:[#allocation2] sm:$0x1] %vm3140, %v4023
        %4027 = vrot.lane.b32.xlu0 %v2851, 96
        %v4028 = vpop.permute.xlu0 %4027
        %4030 = vst.msk [vmem:[#allocation2] sm:$0x1] %vm3148, %v4028
        %4031 = vst [vmem:[#allocation1] sm:$0xff] %v2851
        %s4032 = scalar_lea.vmem [#allocation1], 1
        %v4033 = vld [vmem:[%s4032] ss:$9 sm:$0xff]
        %4034 = vrot.lane.b32.xlu0 %v4033, 108
        %v4035 = vpop.permute.xlu0 %4034
        %4037 = vst.msk [vmem:[#allocation2] sm:$0x1] %vm3158, %v4035
        %4038 = vst [vmem:[#allocation1] sm:$0xff] %v2851
        %s4039 = scalar_lea.vmem [#allocation1], 2
        %v4040 = vld [vmem:[%s4039] ss:$9 sm:$0xff]
        %4041 = vrot.lane.b32.xlu0 %v4040, 120
        %v4042 = vpop.permute.xlu0 %4041
        %v4043 = vrot.slane %v4042, 7
        %v4044 = vsel %vm3166, %v4043, %v4042
        %4046 = vst.msk [vmem:[#allocation2] sm:$0x3] %vm3171, %v4044
        %4047 = vst [vmem:[#allocation1] sm:$0xff] %v2851
        %s4048 = scalar_lea.vmem [#allocation1], 3
        %v4049 = vld [vmem:[%s4048] ss:$9 sm:$0xff]
        %4050 = vrot.lane.b32.xlu0 %v4049, 4
        %v4051 = vpop.permute.xlu0 %4050
        %4053 = vst.msk [vmem:[#allocation2 + $0x1] sm:$0x1] %vm3181, %v4051
        %v4054 = vld [vmem:[%s9 + $0x360] sm:$0xff]
        %v4055 = vld [vmem:[%s9 + $0x368] sm:$0xff]
        %v4056 = vld [vmem:[%s9 + $0x370] sm:$0xff]
        %v4057 = vld [vmem:[%s9 + $0x378] sm:$0xff]
        %v4058 = vld [vmem:[%s9 + $0x380] sm:$0xff]
        %v4059 = vld [vmem:[%s9 + $0x388] sm:$0xff]
        %v4060 = vld [vmem:[%s9 + $0x390] sm:$0xff]
        %v4061 = vld [vmem:[%s9 + $0x398] sm:$0xff]
        %v4062 = vld [vmem:[%s9 + $0x3a0] sm:$0xff]
        %v4063 = vld [vmem:[%s9 + $0x3a8] sm:$0xff]
        %v4064 = vld [vmem:[%s9 + $0x3b0] sm:$0xff]
        %v4065 = vld [vmem:[%s9 + $0x3b8] sm:$0xff]
        %v4066 = vld [vmem:[%s9 + $0x3c0] sm:$0xff]
        %v4067 = vld [vmem:[%s9 + $0x3c8] sm:$0xff]
        %v4068 = vld [vmem:[%s9 + $0x3d0] sm:$0xff]
        %v4069 = vld [vmem:[%s9 + $0x3d8] sm:$0xff]
        %v4070 = vld [vmem:[%s9 + $0x3e0] sm:$0xff]
        %v4071 = vld [vmem:[%s9 + $0x3e8] sm:$0xff]
        %v4072 = vld [vmem:[#allocation2] sm:$0x3]
        %v4074 = vperm.slane %v4072, 0
        %v4075 = vperm.slane %v4072, 1
        %v4077 = vsel %vm3206, %v4075, 0
        %4079 = vmatpush.msra.mxu0 %v4069
        %4080 = vmatpush.msra.mxu0 %v4068
        %4081 = vmatpush.msra.mxu0 %v4067
        %4082 = vmatpush.msra.mxu0 %v4066
        %4083 = vmatpush.msra.mxu0 %v4065
        %4084 = vmatpush.msra.mxu0 %v4064
        %4085 = vmatpush.msra.mxu0 %v4063
        %4086 = vmatpush.msra.mxu0 %v4062
        %4087 = vmatpush.msra.mxu0 %v4061
        %4088 = vmatpush.msra.mxu0 %v4060
        %4089 = vmatpush.msra.mxu0 %v4059
        %4090 = vmatpush.msra.mxu0 %v4058
        %4091 = vmatpush.msra.mxu0 %v4057
        %4092 = vmatpush.msra.mxu0 %v4056
        %4093 = vmatpush.msra.mxu0 %v4055
        %4094 = vmatpush.msra.mxu0 %v4054
        %4095 = vmatmul.f32.gmra.mxu0 %v4074
        %v4096 = vpop.f32.mrf.mxu0
        %v4097 = vadd.f32 0.0, %v4096
        %4098 = vdwg.mxu0
        %4099 = vmatpush.msra.mxu0 0.0
        %4100 = vmatpush.msra.mxu0 0.0
        %4101 = vmatpush.msra.mxu0 0.0
        %4102 = vmatpush.msra.mxu0 0.0
        %4103 = vmatpush.msra.mxu0 0.0
        %4104 = vmatpush.msra.mxu0 0.0
        %4105 = vmatpush.msra.mxu0 0.0
        %4106 = vmatpush.msra.mxu0 0.0
        %4107 = vmatpush.msra.mxu0 0.0
        %4108 = vmatpush.msra.mxu0 0.0
        %4109 = vmatpush.msra.mxu0 0.0
        %4110 = vmatpush.msra.mxu0 0.0
        %4111 = vmatpush.msra.mxu0 0.0
        %4112 = vmatpush.msra.mxu0 0.0
        %4113 = vmatpush.msra.mxu0 %v4071
        %4114 = vmatpush.msra.mxu0 %v4070
        %4115 = vmatmul.f32.gmra.mxu0 %v4077
        %v4116 = vpop.f32.mrf.mxu0
        %v4117 = vadd.f32 %v4097, %v4116
        %4118 = vdwg.mxu0
        %v4119 = vadd.f32 %v3974, %v4117
        %4120 = vst.msk [vmem:[#allocation2] sm:$0x1] %vm3069, %v3063
        %4122 = vst [vmem:[#allocation1] sm:$0xff] %v3063
        %s4123 = scalar_lea.vmem [#allocation1], 1
        %v4124 = vld [vmem:[%s4123] ss:$9 sm:$0xff]
        %4125 = vrot.lane.b32.xlu0 %v4124, 12
        %v4126 = vpop.permute.xlu0 %4125
        %4128 = vst.msk [vmem:[#allocation2] sm:$0x1] %vm3080, %v4126
        %4129 = vst [vmem:[#allocation1] sm:$0xff] %v3063
        %s4130 = scalar_lea.vmem [#allocation1], 2
        %v4131 = vld [vmem:[%s4130] ss:$9 sm:$0xff]
        %4132 = vrot.lane.b32.xlu0 %v4131, 24
        %v4133 = vpop.permute.xlu0 %4132
        %4135 = vst.msk [vmem:[#allocation2] sm:$0x1] %vm3090, %v4133
        %4136 = vst [vmem:[#allocation1] sm:$0xff] %v3063
        %s4137 = scalar_lea.vmem [#allocation1], 3
        %v4138 = vld [vmem:[%s4137] ss:$9 sm:$0xff]
        %4139 = vrot.lane.b32.xlu0 %v4138, 36
        %v4140 = vpop.permute.xlu0 %4139
        %4142 = vst.msk [vmem:[#allocation2] sm:$0x1] %vm3100, %v4140
        %4143 = vst [vmem:[#allocation1] sm:$0xff] %v3063
        %s4144 = scalar_lea.vmem [#allocation1], 4
        %v4145 = vld [vmem:[%s4144] ss:$9 sm:$0xff]
        %4146 = vrot.lane.b32.xlu0 %v4145, 48
        %v4147 = vpop.permute.xlu0 %4146
        %4149 = vst.msk [vmem:[#allocation2] sm:$0x1] %vm3110, %v4147
        %4150 = vst [vmem:[#allocation1] sm:$0xff] %v3063
        %s4151 = scalar_lea.vmem [#allocation1], 5
        %v4152 = vld [vmem:[%s4151] ss:$9 sm:$0xff]
        %4153 = vrot.lane.b32.xlu0 %v4152, 60
        %v4154 = vpop.permute.xlu0 %4153
        %4156 = vst.msk [vmem:[#allocation2] sm:$0x1] %vm3120, %v4154
        %4157 = vst [vmem:[#allocation1] sm:$0xff] %v3063
        %s4158 = scalar_lea.vmem [#allocation1], 6
        %v4159 = vld [vmem:[%s4158] ss:$9 sm:$0xff]
        %4160 = vrot.lane.b32.xlu0 %v4159, 72
        %v4161 = vpop.permute.xlu0 %4160
        %4163 = vst.msk [vmem:[#allocation2] sm:$0x1] %vm3130, %v4161
        %4164 = vst [vmem:[#allocation1] sm:$0xff] %v3063
        %s4165 = scalar_lea.vmem [#allocation1], 7
        %v4166 = vld [vmem:[%s4165] ss:$9 sm:$0xff]
        %4167 = vrot.lane.b32.xlu0 %v4166, 84
        %v4168 = vpop.permute.xlu0 %4167
        %4170 = vst.msk [vmem:[#allocation2] sm:$0x1] %vm3140, %v4168
        %4172 = vrot.lane.b32.xlu0 %v3064, 96
        %v4173 = vpop.permute.xlu0 %4172
        %4175 = vst.msk [vmem:[#allocation2] sm:$0x1] %vm3148, %v4173
        %4176 = vst [vmem:[#allocation1] sm:$0xff] %v3064
        %s4177 = scalar_lea.vmem [#allocation1], 1
        %v4178 = vld [vmem:[%s4177] ss:$9 sm:$0xff]
        %4179 = vrot.lane.b32.xlu0 %v4178, 108
        %v4180 = vpop.permute.xlu0 %4179
        %4182 = vst.msk [vmem:[#allocation2] sm:$0x1] %vm3158, %v4180
        %4183 = vst [vmem:[#allocation1] sm:$0xff] %v3064
        %s4184 = scalar_lea.vmem [#allocation1], 2
        %v4185 = vld [vmem:[%s4184] ss:$9 sm:$0xff]
        %4186 = vrot.lane.b32.xlu0 %v4185, 120
        %v4187 = vpop.permute.xlu0 %4186
        %v4188 = vrot.slane %v4187, 7
        %v4189 = vsel %vm3166, %v4188, %v4187
        %4191 = vst.msk [vmem:[#allocation2] sm:$0x3] %vm3171, %v4189
        %4192 = vst [vmem:[#allocation1] sm:$0xff] %v3064
        %s4193 = scalar_lea.vmem [#allocation1], 3
        %v4194 = vld [vmem:[%s4193] ss:$9 sm:$0xff]
        %4195 = vrot.lane.b32.xlu0 %v4194, 4
        %v4196 = vpop.permute.xlu0 %4195
        %4198 = vst.msk [vmem:[#allocation2 + $0x1] sm:$0x1] %vm3181, %v4196
        %v4199 = vld [vmem:[%s9 + $0x3f0] sm:$0xff]
        %v4200 = vld [vmem:[%s9 + $0x3f8] sm:$0xff]
        %v4201 = vld [vmem:[%s9 + $0x400] sm:$0xff]
        %v4202 = vld [vmem:[%s9 + $0x408] sm:$0xff]
        %v4203 = vld [vmem:[%s9 + $0x410] sm:$0xff]
        %v4204 = vld [vmem:[%s9 + $0x418] sm:$0xff]
        %v4205 = vld [vmem:[%s9 + $0x420] sm:$0xff]
        %v4206 = vld [vmem:[%s9 + $0x428] sm:$0xff]
        %v4207 = vld [vmem:[%s9 + $0x430] sm:$0xff]
        %v4208 = vld [vmem:[%s9 + $0x438] sm:$0xff]
        %v4209 = vld [vmem:[%s9 + $0x440] sm:$0xff]
        %v4210 = vld [vmem:[%s9 + $0x448] sm:$0xff]
        %v4211 = vld [vmem:[%s9 + $0x450] sm:$0xff]
        %v4212 = vld [vmem:[%s9 + $0x458] sm:$0xff]
        %v4213 = vld [vmem:[%s9 + $0x460] sm:$0xff]
        %v4214 = vld [vmem:[%s9 + $0x468] sm:$0xff]
        %v4215 = vld [vmem:[%s9 + $0x470] sm:$0xff]
        %v4216 = vld [vmem:[%s9 + $0x478] sm:$0xff]
        %v4217 = vld [vmem:[#allocation2] sm:$0x3]
        %v4219 = vperm.slane %v4217, 0
        %v4220 = vperm.slane %v4217, 1
        %v4222 = vsel %vm3206, %v4220, 0
        %4224 = vmatpush.msra.mxu0 %v4214
        %4225 = vmatpush.msra.mxu0 %v4213
        %4226 = vmatpush.msra.mxu0 %v4212
        %4227 = vmatpush.msra.mxu0 %v4211
        %4228 = vmatpush.msra.mxu0 %v4210
        %4229 = vmatpush.msra.mxu0 %v4209
        %4230 = vmatpush.msra.mxu0 %v4208
        %4231 = vmatpush.msra.mxu0 %v4207
        %4232 = vmatpush.msra.mxu0 %v4206
        %4233 = vmatpush.msra.mxu0 %v4205
        %4234 = vmatpush.msra.mxu0 %v4204
        %4235 = vmatpush.msra.mxu0 %v4203
        %4236 = vmatpush.msra.mxu0 %v4202
        %4237 = vmatpush.msra.mxu0 %v4201
        %4238 = vmatpush.msra.mxu0 %v4200
        %4239 = vmatpush.msra.mxu0 %v4199
        %4240 = vmatmul.f32.gmra.mxu0 %v4219
        %v4241 = vpop.f32.mrf.mxu0
        %v4242 = vadd.f32 0.0, %v4241
        %4243 = vdwg.mxu0
        %4244 = vmatpush.msra.mxu0 0.0
        %4245 = vmatpush.msra.mxu0 0.0
        %4246 = vmatpush.msra.mxu0 0.0
        %4247 = vmatpush.msra.mxu0 0.0
        %4248 = vmatpush.msra.mxu0 0.0
        %4249 = vmatpush.msra.mxu0 0.0
        %4250 = vmatpush.msra.mxu0 0.0
        %4251 = vmatpush.msra.mxu0 0.0
        %4252 = vmatpush.msra.mxu0 0.0
        %4253 = vmatpush.msra.mxu0 0.0
        %4254 = vmatpush.msra.mxu0 0.0
        %4255 = vmatpush.msra.mxu0 0.0
        %4256 = vmatpush.msra.mxu0 0.0
        %4257 = vmatpush.msra.mxu0 0.0
        %4258 = vmatpush.msra.mxu0 %v4216
        %4259 = vmatpush.msra.mxu0 %v4215
        %4260 = vmatmul.f32.gmra.mxu0 %v4222
        %v4261 = vpop.f32.mrf.mxu0
        %v4262 = vadd.f32 %v4242, %v4261
        %4263 = vdwg.mxu0
        %v4264 = vadd.f32 %v4119, %v4262
        %vm4265 = vcmask 73728
        %4266 = vst.msk [vmem:[%s430] sm:$0x1] %vm4265, %v4264
        %s4267 = sand.u32 %s272, 1
        %s4268 = scalar_lea.sflag [#allocation4], %s4267
        %s4269 = sand.u32 %s272, 1
        %s4270 = scalar_lea.vmem [#allocation11], %s4269
        // Predicated region
        $region81: #{_forward_impl.1} parent=63 // pred_check
          %p4271 = pneg %p282
        $region82: #{_forward_impl.1} parent=63 // pred_check_branch
          %4273 = sbr.rel (%p4271) target = $region84
        $region83: #{_forward_impl.1} parent=63 // pred_region
          %4275 = vsyncadd %s4268, 0
          %s4276 = scalar_lea.hbm %s11, %s28
          %s4278 = sshll.u32 %s4270, 4
          %s4279 = int_to_ptr.vmem [resolvable:$true] %s4278
          %s4280 = sshll.u32 %s4276, 4
          %s4281 = int_to_ptr.hbm [resolvable:$true] %s4280
          %4283 = dma.vmem_to_hbm [thread:$0]  %s4279, 16, %s4281, %s4268
        $region84: #{_forward_impl.1} parent=63 // pred_fallthru
          _
      $region64: #{_forward_impl.1} parent=5 // pred_fallthru
        _
      %p4284 = scmp.le.s32.totalorder 2, %s23
      // Predicated region
      $region85: #{_forward_impl.1} parent=5 // pred_check
        %p4285 = pneg %p4284
      $region86: #{_forward_impl.1} parent=5 // pred_check_branch
        %4287 = sbr.rel (%p4285) target = $region88
      $region87: #{_forward_impl.1} parent=5 // pred_region
        %s4288 = ssub.s32 %s23, 2
        // Predicated region
        $region89: #{_forward_impl.1} parent=87 // pred_check
          %p4289 = pneg %p288
        $region90: #{_forward_impl.1} parent=87 // pred_check_branch
          %4291 = sbr.rel (%p4289) target = $region92
        $region91: #{_forward_impl.1} parent=87 // pred_region
          %s4292 = sand.u32 %s273, 1
          %s4293 = scalar_lea.sflag [#allocation4], %s4292
          %s4294 = sand.u32 %s273, 1
          %s4295 = scalar_lea.vmem [#allocation11], %s4294
          %4297 = dma.done %s4293, 16
        $region92: #{_forward_impl.1} parent=87 // pred_fallthru
          _
      $region88: #{_forward_impl.1} parent=5 // pred_fallthru
        _
    $region6: #{_forward_impl.1} parent=1 // loop_footer
      %s27 = sadd.s32 1, %s23
    $region7: #{_forward_impl.1} parent=1 // loop_footer_branch
      %22 = sbr.rel target = $region3
    $region8: #{_forward_impl.1} parent=1 // loop_exit
      _
    %4298 = vsyncpa [#allocation4], 1
    %s4299 = scalar_lea.sflag [#allocation4], 1
    %4300 = vsyncpa %s4299, 1
    %4301 = vsyncpa [#allocation5], 1
    %s4302 = scalar_lea.sflag [#allocation5], 1
    %4303 = vsyncpa %s4302, 1
    %4304 = vsyncpa [#allocation7], 1
    %4305 = vsyncpa [#allocation10], 1

</llo_original>
